<compile_context>
chip_gen: v6e
topology: v6e:2x2x1
jax: 0.10.0
libtpu: 0.0.40
codegen_flags: <defaults>
</compile_context>

<pallas_src>
import functools

import jax
import jax.numpy as jnp
from jax.experimental import pallas as pl
from jax.experimental.pallas import tpu as pltpu


# --------------------------------------------------------------------------
# JAX glue: coordinate normalization + bilinear grid_sample (border, align_corners=True)
# --------------------------------------------------------------------------
def normalize_coordinate(p, padding=0.0, plane='xz'):
    if plane == 'xz':
        xy = p[..., jnp.array([0, 2])]
    elif plane == 'xy':
        xy = p[..., jnp.array([0, 1])]
    else:  # 'yz'
        xy = p[..., jnp.array([1, 2])]
    xy_new = xy / (1 + padding + 10e-6) + 0.5
    xy_new = jnp.where(xy_new >= 1, 1 - 10e-6, xy_new)
    xy_new = jnp.where(xy_new < 0, 0.0, xy_new)
    return xy_new


def grid_sample_plane(c, xy):
    """Equivalent of F.grid_sample(c, 2*xy-1, mode='bilinear', padding_mode='border',
    align_corners=True).squeeze(-1), but returned directly in (B, T, C) layout.

    c : (B, C, H, W) feature plane (NCHW, as in PyTorch).
    xy: (B, T, 2) normalized coords in [0,1); xy[...,0] -> W axis, xy[...,1] -> H axis.
    returns (B, T, C).
    """
    B, C, H, W = c.shape
    c_hwc = jnp.transpose(c, (0, 2, 3, 1))              # (B, H, W, C) once per plane
    ix = jnp.clip(xy[..., 0] * (W - 1), 0.0, W - 1)
    iy = jnp.clip(xy[..., 1] * (H - 1), 0.0, H - 1)
    x0 = jnp.floor(ix).astype(jnp.int32)
    y0 = jnp.floor(iy).astype(jnp.int32)
    x1 = jnp.minimum(x0 + 1, W - 1)
    y1 = jnp.minimum(y0 + 1, H - 1)
    wx = (ix - x0.astype(ix.dtype))[..., None]           # (B, T, 1)
    wy = (iy - y0.astype(iy.dtype))[..., None]

    def gather_one(cb, y_idx, x_idx):                    # cb: (H, W, C)
        return cb[y_idx, x_idx]                          # (T, C)

    g = jax.vmap(gather_one)
    c00 = g(c_hwc, y0, x0)
    c01 = g(c_hwc, y0, x1)
    c10 = g(c_hwc, y1, x0)
    c11 = g(c_hwc, y1, x1)
    top = c00 * (1.0 - wx) + c01 * wx
    bot = c10 * (1.0 - wx) + c11 * wx
    return top * (1.0 - wy) + bot * wy                   # (B, T, C)


# TODO(synk): 'grid' (3-D volume, trilinear sample_grid_feature) is not implemented;
#             this script exercises the plane-feature path ('xz', 'xy', 'yz') only.
# TODO(synk): the bilinear gather itself stays in XLA glue; fusing it into the kernel
#             (DMA plane slab to VMEM + in-kernel gather) is a further optimization.


# --------------------------------------------------------------------------
# Pallas kernel: fc_p -> n_blocks x ( + fc_c[i], ResnetBlockFC ) -> fc_out
# --------------------------------------------------------------------------
def decoder_mlp_kernel(p_ref, c_ref,
                       fcp_w_ref, fcp_b_ref,
                       fcc_w_ref, fcc_b_ref,
                       fc0_w_ref, fc0_b_ref,
                       fc1_w_ref, fc1_b_ref,
                       fco_w_ref, fco_b_ref,
                       out_ref, *, n_blocks, dim, hidden_pad, compute_dtype):
    p = p_ref[...]                                        # (tile_n, dim) f32

    # ---- fc_p: K == dim (3) is far too small for the MXU; do it as `dim`
    #      lane-broadcast multiply-adds on the VPU (f32).
    net = fcp_b_ref[...] + p[:, 0:1] * fcp_w_ref[0:1, :]  # (tile_n, hidden_pad)
    for k in range(1, dim):
        net = net + p[:, k:k + 1] * fcp_w_ref[k:k + 1, :]

    # ---- all n_blocks fc_c projections fused into one wide matmul
    c = c_ref[...].astype(compute_dtype)                  # (tile_n, c_dim_pad)
    cc = jnp.dot(c, fcc_w_ref[...],
                 preferred_element_type=jnp.float32) + fcc_b_ref[...]
    # cc: (tile_n, n_blocks * hidden_pad) f32

    for i in range(n_blocks):
        # net = net + fc_c[i](c)
        net = net + cc[:, i * hidden_pad:(i + 1) * hidden_pad]
        # ResnetBlockFC (size_in == size_out -> identity shortcut), ReLU actvn
        h = jnp.dot(jnp.maximum(net, 0.0).astype(compute_dtype), fc0_w_ref[i],
                    preferred_element_type=jnp.float32) + fc0_b_ref[i]
        dx = jnp.dot(jnp.maximum(h, 0.0).astype(compute_dtype), fc1_w_ref[i],
                     preferred_element_type=jnp.float32) + fc1_b_ref[i]
        net = net + dx

    # ---- fc_out (out_size == 1): contract hidden-vs-hidden so the result is produced
    #      directly as a lane-dense (1, tile_n) row -> unmasked vector stores.
    out_row = jax.lax.dot_general(
        fco_w_ref[...], net.astype(compute_dtype),
        dimension_numbers=(((1,), (1,)), ((), ())),
        preferred_element_type=jnp.float32)               # (1, tile_n)
    out_ref[...] = out_row + fco_b_ref[...]


# --------------------------------------------------------------------------
# Parameter preparation: pad feature dims to lane multiples, fuse fc_c, optional bf16.
# --------------------------------------------------------------------------
def _round_up(x, m):
    return ((x + m - 1) // m) * m


def prepare_params(params, n_blocks, *, use_bf16=True, lane=128):
    dim, hidden = params['fc_p_w'].shape
    c_dim = params['fc_c_w'].shape[1]
    out_size = params['fc_out_w'].shape[1]
    assert out_size == 1  # TODO(synk): lane-dense output layout assumes out_size == 1
    H = _round_up(hidden, lane)
    C = _round_up(c_dim, lane)
    wdt = jnp.bfloat16 if use_bf16 else jnp.float32

    def padw(w, rows, cols):
        return jnp.pad(w, ((0, rows - w.shape[0]), (0, cols - w.shape[1])))

    prep = {
        # fc_p runs on the VPU -> keep f32
        'fc_p_w': padw(params['fc_p_w'], dim, H).astype(jnp.float32),
        'fc_p_b': padw(params['fc_p_b'], 1, H).astype(jnp.float32),
        # fused fc_c: (C, n_blocks*H) weight + (1, n_blocks*H) bias
        'fc_c_w': jnp.concatenate(
            [padw(params['fc_c_w'][i], C, H) for i in range(n_blocks)], axis=1).astype(wdt),
        'fc_c_b': jnp.concatenate(
            [padw(params['fc_c_b'][i], 1, H) for i in range(n_blocks)], axis=1).astype(jnp.float32),
        'fc0_w': jnp.stack(
            [padw(params['fc0_w'][i], H, H) for i in range(n_blocks)]).astype(wdt),
        'fc0_b': jnp.stack(
            [padw(params['fc0_b'][i], 1, H) for i in range(n_blocks)]).astype(jnp.float32),
        'fc1_w': jnp.stack(
            [padw(params['fc1_w'][i], H, H) for i in range(n_blocks)]).astype(wdt),
        'fc1_b': jnp.stack(
            [padw(params['fc1_b'][i], 1, H) for i in range(n_blocks)]).astype(jnp.float32),
        # fc_out stored as a (1, H) row for the hidden-vs-hidden contraction
        'fc_out_w': padw(params['fc_out_w'], H, out_size).T.astype(wdt),
        'fc_out_b': params['fc_out_b'].reshape(1, 1).astype(jnp.float32),
    }
    return prep, H, C, dim, c_dim


# --------------------------------------------------------------------------
# Wrapper
# --------------------------------------------------------------------------
def local_decoder_forward(p, c_planes, params, *, n_blocks, padding=0.0,
                          tile_n=256, use_bf16=True):
    """p: (B, T, dim) query points. c_planes: dict of (B, c_dim, H, W) planes.

    tile_n: token tile (multiple of 128). Sweep 256-1024; keep ~3 live (tile_n, hidden_pad)
    f32 tensors in mind for vreg/VMEM pressure when hidden is large.
    """
    B, T, dim = p.shape
    prep, H_pad, C_pad, dim_w, c_dim = prepare_params(params, n_blocks, use_bf16=use_bf16)
    assert dim == dim_w
    compute_dtype = jnp.bfloat16 if use_bf16 else jnp.float32

    # --- feature sampling (sum over available planes), emitted directly as (B, T, c_dim) ---
    c = jnp.zeros((B, T, c_dim), jnp.float32)
    for plane in ('xz', 'xy', 'yz'):
        if plane in c_planes:
            xy = normalize_coordinate(p, padding=padding, plane=plane)
            c = c + grid_sample_plane(c_planes[plane], xy)

    # --- flatten tokens, pad tokens to tile multiple and features to lane multiple ---
    N = B * T
    n_pad = pl.cdiv(N, tile_n) * tile_n
    p_flat = p.reshape(N, dim).astype(jnp.float32)
    c_flat = c.reshape(N, c_dim)
    if C_pad != c_dim:
        c_flat = jnp.pad(c_flat, ((0, 0), (0, C_pad - c_dim)))
    if n_pad != N:
        p_flat = jnp.pad(p_flat, ((0, n_pad - N), (0, 0)))
        c_flat = jnp.pad(c_flat, ((0, n_pad - N), (0, 0)))
    c_flat = c_flat.astype(compute_dtype)   # halves feature DMA when bf16

    kernel = functools.partial(decoder_mlp_kernel, n_blocks=n_blocks, dim=dim,
                               hidden_pad=H_pad, compute_dtype=compute_dtype)

    def full(arr):
        nd = arr.ndim
        return pl.BlockSpec(arr.shape, lambda i, _nd=nd: (0,) * _nd)

    out = pl.pallas_call(
        kernel,
        out_shape=jax.ShapeDtypeStruct((1, n_pad), jnp.float32),
        grid_spec=pltpu.PrefetchScalarGridSpec(
            num_scalar_prefetch=0,
            grid=(n_pad // tile_n,),
            in_specs=[
                pl.BlockSpec((tile_n, dim), lambda i: (i, 0)),
                pl.BlockSpec((tile_n, C_pad), lambda i: (i, 0)),
                full(prep['fc_p_w']),
                full(prep['fc_p_b']),
                full(prep['fc_c_w']),
                full(prep['fc_c_b']),
                full(prep['fc0_w']),
                full(prep['fc0_b']),
                full(prep['fc1_w']),
                full(prep['fc1_b']),
                full(prep['fc_out_w']),
                full(prep['fc_out_b']),
            ],
            out_specs=pl.BlockSpec((1, tile_n), lambda i: (0, i)),
        ),
        compiler_params=pltpu.CompilerParams(dimension_semantics=("parallel",)),
    )(p_flat, c_flat,
      prep['fc_p_w'], prep['fc_p_b'],
      prep['fc_c_w'], prep['fc_c_b'],
      prep['fc0_w'], prep['fc0_b'],
      prep['fc1_w'], prep['fc1_b'],
      prep['fc_out_w'], prep['fc_out_b'])

    return out[0, :N].reshape(B, T)          # .squeeze(-1)


# --------------------------------------------------------------------------
# Pure-JAX reference of the MLP stack (for correctness check, f32, unfused)
# --------------------------------------------------------------------------
def _ref_mlp(p_flat, c_flat, params, n_blocks):
    net = p_flat @ params['fc_p_w'] + params['fc_p_b'][0]
    for i in range(n_blocks):
        net = net + c_flat @ params['fc_c_w'][i] + params['fc_c_b'][i, 0]
        h = jnp.maximum(net, 0.0) @ params['fc0_w'][i] + params['fc0_b'][i, 0]
        dx = jnp.maximum(h, 0.0) @ params['fc1_w'][i] + params['fc1_b'][i, 0]
        net = net + dx
    return net @ params['fc_out_w'] + params['fc_out_b'][0]


def init_params(key, dim, c_dim, hidden, n_blocks, out_size):
    ks = jax.random.split(key, 12)
    s = 0.1
    return {
        'fc_p_w':   s * jax.random.normal(ks[0], (dim, hidden), jnp.float32),
        'fc_p_b':   s * jax.random.normal(ks[1], (1, hidden), jnp.float32),
        'fc_c_w':   s * jax.random.normal(ks[2], (n_blocks, c_dim, hidden), jnp.float32),
        'fc_c_b':   s * jax.random.normal(ks[3], (n_blocks, 1, hidden), jnp.float32),
        'fc0_w':    s * jax.random.normal(ks[4], (n_blocks, hidden, hidden), jnp.float32),
        'fc0_b':    s * jax.random.normal(ks[5], (n_blocks, 1, hidden), jnp.float32),
        'fc1_w':    s * jax.random.normal(ks[6], (n_blocks, hidden, hidden), jnp.float32),
        'fc1_b':    s * jax.random.normal(ks[7], (n_blocks, 1, hidden), jnp.float32),
        'fc_out_w': s * jax.random.normal(ks[8], (hidden, out_size), jnp.float32),
        'fc_out_b': s * jax.random.normal(ks[9], (1, out_size), jnp.float32),
    }


if __name__ == "__main__":
    B, T, dim = 2, 200, 3                 # N=400 -> exercises padding + a 2-step grid
    c_dim, hidden, n_blocks, out_size = 16, 32, 3, 1
    res = 16  # plane resolution

    key = jax.random.PRNGKey(0)
    kp, kxz, kxy, kyz, kw = jax.random.split(key, 5)

    p = jax.random.uniform(kp, (B, T, dim), jnp.float32, minval=-0.5, maxval=0.5)
    c_planes = {
        'xz': jax.random.normal(kxz, (B, c_dim, res, res), jnp.float32),
        'xy': jax.random.normal(kxy, (B, c_dim, res, res), jnp.float32),
        'yz': jax.random.normal(kyz, (B, c_dim, res, res), jnp.float32),
    }
    params = init_params(kw, dim, c_dim, hidden, n_blocks, out_size)

    # f32 path (tight numerics check of the kernel plumbing)
    out_f32 = local_decoder_forward(p, c_planes, params, n_blocks=n_blocks,
                                    padding=0.0, tile_n=256, use_bf16=False)
    out_f32 = jax.block_until_ready(out_f32)

    # bf16-MXU fast path (the performance configuration for v6e/v7x)
    out_bf16 = local_decoder_forward(p, c_planes, params, n_blocks=n_blocks,
                                     padding=0.0, tile_n=256, use_bf16=True)
    out_bf16 = jax.block_until_ready(out_bf16)

    # pure-JAX reference (same sampling glue, unfused f32 MLP)
    c_ref = jnp.zeros((B, T, c_dim), jnp.float32)
    for plane in ('xz', 'xy', 'yz'):
        c_ref = c_ref + grid_sample_plane(
            c_planes[plane], normalize_coordinate(p, padding=0.0, plane=plane))
    ref = _ref_mlp(p.reshape(B * T, dim), c_ref.reshape(B * T, c_dim),
                   params, n_blocks)[:, 0].reshape(B, T)

    assert out_f32.shape == (B, T)
    assert jnp.allclose(out_f32, ref, atol=1e-3, rtol=1e-3), (
        float(jnp.max(jnp.abs(out_f32 - ref))))
    assert jnp.allclose(out_bf16, ref, atol=5e-2, rtol=5e-2), (
        float(jnp.max(jnp.abs(out_bf16 - ref))))
    print("KERNEL_OK")
</pallas_src>

<mosaic_0001>
module attributes {stable_mosaic.version = 11 : i64} {
  func.func @decoder_mlp_kernel(%arg0: i32, %arg1: memref<256x3xf32, #tpu.memory_space<vmem>>, %arg2: memref<256x128xf32, #tpu.memory_space<vmem>>, %arg3: memref<3x128xf32, #tpu.memory_space<vmem>>, %arg4: memref<1x128xf32, #tpu.memory_space<vmem>>, %arg5: memref<128x384xf32, #tpu.memory_space<vmem>>, %arg6: memref<1x384xf32, #tpu.memory_space<vmem>>, %arg7: memref<3x128x128xf32, #tpu.memory_space<vmem>>, %arg8: memref<3x1x128xf32, #tpu.memory_space<vmem>>, %arg9: memref<3x128x128xf32, #tpu.memory_space<vmem>>, %arg10: memref<3x1x128xf32, #tpu.memory_space<vmem>>, %arg11: memref<1x128xf32, #tpu.memory_space<vmem>>, %arg12: memref<1x1xf32, #tpu.memory_space<vmem>>, %arg13: memref<1x256xf32, #tpu.memory_space<vmem>>) attributes {dimension_semantics = [#tpu.dimension_semantics<parallel>], iteration_bounds = array<i64: 2>, scalar_prefetch = 0 : i64, scratch_operands = 0 : i64, tpu.core_type = #tpu.core_type<tc>, window_params = [{transform_indices = @transform_0, window_bounds = array<i64: 256, 3>}, {transform_indices = @transform_1, window_bounds = array<i64: 256, 128>}, {pipeline_mode = #tpu.pipeline_mode<synchronous>, transform_indices = @transform_2, window_bounds = array<i64: 3, 128>}, {pipeline_mode = #tpu.pipeline_mode<synchronous>, transform_indices = @transform_3, window_bounds = array<i64: 1, 128>}, {pipeline_mode = #tpu.pipeline_mode<synchronous>, transform_indices = @transform_4, window_bounds = array<i64: 128, 384>}, {pipeline_mode = #tpu.pipeline_mode<synchronous>, transform_indices = @transform_5, window_bounds = array<i64: 1, 384>}, {pipeline_mode = #tpu.pipeline_mode<synchronous>, transform_indices = @transform_6, window_bounds = array<i64: 3, 128, 128>}, {pipeline_mode = #tpu.pipeline_mode<synchronous>, transform_indices = @transform_7, window_bounds = array<i64: 3, 1, 128>}, {pipeline_mode = #tpu.pipeline_mode<synchronous>, transform_indices = @transform_8, window_bounds = array<i64: 3, 128, 128>}, {pipeline_mode = #tpu.pipeline_mode<synchronous>, transform_indices = @transform_9, window_bounds = array<i64: 3, 1, 128>}, {pipeline_mode = #tpu.pipeline_mode<synchronous>, transform_indices = @transform_10, window_bounds = array<i64: 1, 128>}, {pipeline_mode = #tpu.pipeline_mode<synchronous>, transform_indices = @transform_11, window_bounds = array<i64: 1, 1>}, {transform_indices = @transform_12, window_bounds = array<i64: 1, 256>}]} {
    %c0 = arith.constant 0 : index
    %c0_0 = arith.constant 0 : index
    %0 = vector.load %arg1[%c0, %c0_0] : memref<256x3xf32, #tpu.memory_space<vmem>>, vector<256x3xf32>
    %c0_1 = arith.constant 0 : index
    %c0_2 = arith.constant 0 : index
    %1 = vector.load %arg4[%c0_1, %c0_2] : memref<1x128xf32, #tpu.memory_space<vmem>>, vector<1x128xf32>
    %2 = vector.extract_strided_slice %0 {offsets = [0, 0], sizes = [256, 1], strides = [1, 1]} : vector<256x3xf32> to vector<256x1xf32>
    %c0_3 = arith.constant 0 : index
    %c0_4 = arith.constant 0 : index
    %3 = vector.load %arg3[%c0_3, %c0_4] : memref<3x128xf32, #tpu.memory_space<vmem>>, vector<1x128xf32>
    %4 = vector.broadcast %2 : vector<256x1xf32> to vector<256x128xf32>
    %5 = vector.broadcast %3 : vector<1x128xf32> to vector<256x128xf32>
    %6 = arith.mulf %4, %5 : vector<256x128xf32>
    %7 = vector.broadcast %1 : vector<1x128xf32> to vector<256x128xf32>
    %8 = arith.addf %7, %6 : vector<256x128xf32>
    %9 = vector.extract_strided_slice %0 {offsets = [0, 1], sizes = [256, 1], strides = [1, 1]} : vector<256x3xf32> to vector<256x1xf32>
    %c1 = arith.constant 1 : index
    %c0_5 = arith.constant 0 : index
    %10 = vector.load %arg3[%c1, %c0_5] : memref<3x128xf32, #tpu.memory_space<vmem>>, vector<1x128xf32>
    %11 = vector.broadcast %9 : vector<256x1xf32> to vector<256x128xf32>
    %12 = vector.broadcast %10 : vector<1x128xf32> to vector<256x128xf32>
    %13 = arith.mulf %11, %12 : vector<256x128xf32>
    %14 = arith.addf %8, %13 : vector<256x128xf32>
    %15 = vector.extract_strided_slice %0 {offsets = [0, 2], sizes = [256, 1], strides = [1, 1]} : vector<256x3xf32> to vector<256x1xf32>
    %c2 = arith.constant 2 : index
    %c0_6 = arith.constant 0 : index
    %16 = vector.load %arg3[%c2, %c0_6] : memref<3x128xf32, #tpu.memory_space<vmem>>, vector<1x128xf32>
    %17 = vector.broadcast %15 : vector<256x1xf32> to vector<256x128xf32>
    %18 = vector.broadcast %16 : vector<1x128xf32> to vector<256x128xf32>
    %19 = arith.mulf %17, %18 : vector<256x128xf32>
    %20 = arith.addf %14, %19 : vector<256x128xf32>
    %c0_7 = arith.constant 0 : index
    %c0_8 = arith.constant 0 : index
    %21 = vector.load %arg2[%c0_7, %c0_8] : memref<256x128xf32, #tpu.memory_space<vmem>>, vector<256x128xf32>
    %c0_9 = arith.constant 0 : index
    %c0_10 = arith.constant 0 : index
    %22 = vector.load %arg5[%c0_9, %c0_10] : memref<128x384xf32, #tpu.memory_space<vmem>>, vector<128x384xf32>
    %cst = arith.constant dense<0.000000e+00> : vector<256x384xf32>
    %23 = tpu.matmul %21, %22, %cst {dimension_numbers = #tpu.dot_dimension_numbers<[1], [0], [0], [1], [0, 0, 1, 1], [], []>} : vector<256x128xf32>, vector<128x384xf32>, vector<256x384xf32> -> vector<256x384xf32>
    %c0_11 = arith.constant 0 : index
    %c0_12 = arith.constant 0 : index
    %24 = vector.load %arg6[%c0_11, %c0_12] : memref<1x384xf32, #tpu.memory_space<vmem>>, vector<1x384xf32>
    %25 = vector.broadcast %24 : vector<1x384xf32> to vector<256x384xf32>
    %26 = arith.addf %23, %25 : vector<256x384xf32>
    %27 = vector.extract_strided_slice %26 {offsets = [0, 0], sizes = [256, 128], strides = [1, 1]} : vector<256x384xf32> to vector<256x128xf32>
    %28 = arith.addf %20, %27 : vector<256x128xf32>
    %cst_13 = arith.constant 0.000000e+00 : f32
    %29 = vector.broadcast %cst_13 : f32 to vector<256x128xf32>
    %30 = arith.maximumf %28, %29 : vector<256x128xf32>
    %c0_14 = arith.constant 0 : index
    %c0_15 = arith.constant 0 : index
    %c0_16 = arith.constant 0 : index
    %31 = vector.load %arg7[%c0_14, %c0_15, %c0_16] : memref<3x128x128xf32, #tpu.memory_space<vmem>>, vector<1x128x128xf32>
    %32 = vector.shape_cast %31 : vector<1x128x128xf32> to vector<128x128xf32>
    %cst_17 = arith.constant dense<0.000000e+00> : vector<256x128xf32>
    %33 = tpu.matmul %30, %32, %cst_17 {dimension_numbers = #tpu.dot_dimension_numbers<[1], [0], [0], [1], [0, 0, 1, 1], [], []>} : vector<256x128xf32>, vector<128x128xf32>, vector<256x128xf32> -> vector<256x128xf32>
    %c0_18 = arith.constant 0 : index
    %c0_19 = arith.constant 0 : index
    %c0_20 = arith.constant 0 : index
    %34 = vector.load %arg8[%c0_18, %c0_19, %c0_20] : memref<3x1x128xf32, #tpu.memory_space<vmem>>, vector<1x1x128xf32>
    %35 = vector.shape_cast %34 : vector<1x1x128xf32> to vector<1x128xf32>
    %36 = vector.broadcast %35 : vector<1x128xf32> to vector<256x128xf32>
    %37 = arith.addf %33, %36 : vector<256x128xf32>
    %cst_21 = arith.constant 0.000000e+00 : f32
    %38 = vector.broadcast %cst_21 : f32 to vector<256x128xf32>
    %39 = arith.maximumf %37, %38 : vector<256x128xf32>
    %c0_22 = arith.constant 0 : index
    %c0_23 = arith.constant 0 : index
    %c0_24 = arith.constant 0 : index
    %40 = vector.load %arg9[%c0_22, %c0_23, %c0_24] : memref<3x128x128xf32, #tpu.memory_space<vmem>>, vector<1x128x128xf32>
    %41 = vector.shape_cast %40 : vector<1x128x128xf32> to vector<128x128xf32>
    %cst_25 = arith.constant dense<0.000000e+00> : vector<256x128xf32>
    %42 = tpu.matmul %39, %41, %cst_25 {dimension_numbers = #tpu.dot_dimension_numbers<[1], [0], [0], [1], [0, 0, 1, 1], [], []>} : vector<256x128xf32>, vector<128x128xf32>, vector<256x128xf32> -> vector<256x128xf32>
    %c0_26 = arith.constant 0 : index
    %c0_27 = arith.constant 0 : index
    %c0_28 = arith.constant 0 : index
    %43 = vector.load %arg10[%c0_26, %c0_27, %c0_28] : memref<3x1x128xf32, #tpu.memory_space<vmem>>, vector<1x1x128xf32>
    %44 = vector.shape_cast %43 : vector<1x1x128xf32> to vector<1x128xf32>
    %45 = vector.broadcast %44 : vector<1x128xf32> to vector<256x128xf32>
    %46 = arith.addf %42, %45 : vector<256x128xf32>
    %47 = arith.addf %28, %46 : vector<256x128xf32>
    %48 = vector.extract_strided_slice %26 {offsets = [0, 128], sizes = [256, 128], strides = [1, 1]} : vector<256x384xf32> to vector<256x128xf32>
    %49 = arith.addf %47, %48 : vector<256x128xf32>
    %cst_29 = arith.constant 0.000000e+00 : f32
    %50 = vector.broadcast %cst_29 : f32 to vector<256x128xf32>
    %51 = arith.maximumf %49, %50 : vector<256x128xf32>
    %c1_30 = arith.constant 1 : index
    %c0_31 = arith.constant 0 : index
    %c0_32 = arith.constant 0 : index
    %52 = vector.load %arg7[%c1_30, %c0_31, %c0_32] : memref<3x128x128xf32, #tpu.memory_space<vmem>>, vector<1x128x128xf32>
    %53 = vector.shape_cast %52 : vector<1x128x128xf32> to vector<128x128xf32>
    %cst_33 = arith.constant dense<0.000000e+00> : vector<256x128xf32>
    %54 = tpu.matmul %51, %53, %cst_33 {dimension_numbers = #tpu.dot_dimension_numbers<[1], [0], [0], [1], [0, 0, 1, 1], [], []>} : vector<256x128xf32>, vector<128x128xf32>, vector<256x128xf32> -> vector<256x128xf32>
    %c1_34 = arith.constant 1 : index
    %c0_35 = arith.constant 0 : index
    %c0_36 = arith.constant 0 : index
    %55 = vector.load %arg8[%c1_34, %c0_35, %c0_36] : memref<3x1x128xf32, #tpu.memory_space<vmem>>, vector<1x1x128xf32>
    %56 = vector.shape_cast %55 : vector<1x1x128xf32> to vector<1x128xf32>
    %57 = vector.broadcast %56 : vector<1x128xf32> to vector<256x128xf32>
    %58 = arith.addf %54, %57 : vector<256x128xf32>
    %cst_37 = arith.constant 0.000000e+00 : f32
    %59 = vector.broadcast %cst_37 : f32 to vector<256x128xf32>
    %60 = arith.maximumf %58, %59 : vector<256x128xf32>
    %c1_38 = arith.constant 1 : index
    %c0_39 = arith.constant 0 : index
    %c0_40 = arith.constant 0 : index
    %61 = vector.load %arg9[%c1_38, %c0_39, %c0_40] : memref<3x128x128xf32, #tpu.memory_space<vmem>>, vector<1x128x128xf32>
    %62 = vector.shape_cast %61 : vector<1x128x128xf32> to vector<128x128xf32>
    %cst_41 = arith.constant dense<0.000000e+00> : vector<256x128xf32>
    %63 = tpu.matmul %60, %62, %cst_41 {dimension_numbers = #tpu.dot_dimension_numbers<[1], [0], [0], [1], [0, 0, 1, 1], [], []>} : vector<256x128xf32>, vector<128x128xf32>, vector<256x128xf32> -> vector<256x128xf32>
    %c1_42 = arith.constant 1 : index
    %c0_43 = arith.constant 0 : index
    %c0_44 = arith.constant 0 : index
    %64 = vector.load %arg10[%c1_42, %c0_43, %c0_44] : memref<3x1x128xf32, #tpu.memory_space<vmem>>, vector<1x1x128xf32>
    %65 = vector.shape_cast %64 : vector<1x1x128xf32> to vector<1x128xf32>
    %66 = vector.broadcast %65 : vector<1x128xf32> to vector<256x128xf32>
    %67 = arith.addf %63, %66 : vector<256x128xf32>
    %68 = arith.addf %49, %67 : vector<256x128xf32>
    %69 = vector.extract_strided_slice %26 {offsets = [0, 256], sizes = [256, 128], strides = [1, 1]} : vector<256x384xf32> to vector<256x128xf32>
    %70 = arith.addf %68, %69 : vector<256x128xf32>
    %cst_45 = arith.constant 0.000000e+00 : f32
    %71 = vector.broadcast %cst_45 : f32 to vector<256x128xf32>
    %72 = arith.maximumf %70, %71 : vector<256x128xf32>
    %c2_46 = arith.constant 2 : index
    %c0_47 = arith.constant 0 : index
    %c0_48 = arith.constant 0 : index
    %73 = vector.load %arg7[%c2_46, %c0_47, %c0_48] : memref<3x128x128xf32, #tpu.memory_space<vmem>>, vector<1x128x128xf32>
    %74 = vector.shape_cast %73 : vector<1x128x128xf32> to vector<128x128xf32>
    %cst_49 = arith.constant dense<0.000000e+00> : vector<256x128xf32>
    %75 = tpu.matmul %72, %74, %cst_49 {dimension_numbers = #tpu.dot_dimension_numbers<[1], [0], [0], [1], [0, 0, 1, 1], [], []>} : vector<256x128xf32>, vector<128x128xf32>, vector<256x128xf32> -> vector<256x128xf32>
    %c2_50 = arith.constant 2 : index
    %c0_51 = arith.constant 0 : index
    %c0_52 = arith.constant 0 : index
    %76 = vector.load %arg8[%c2_50, %c0_51, %c0_52] : memref<3x1x128xf32, #tpu.memory_space<vmem>>, vector<1x1x128xf32>
    %77 = vector.shape_cast %76 : vector<1x1x128xf32> to vector<1x128xf32>
    %78 = vector.broadcast %77 : vector<1x128xf32> to vector<256x128xf32>
    %79 = arith.addf %75, %78 : vector<256x128xf32>
    %cst_53 = arith.constant 0.000000e+00 : f32
    %80 = vector.broadcast %cst_53 : f32 to vector<256x128xf32>
    %81 = arith.maximumf %79, %80 : vector<256x128xf32>
    %c2_54 = arith.constant 2 : index
    %c0_55 = arith.constant 0 : index
    %c0_56 = arith.constant 0 : index
    %82 = vector.load %arg9[%c2_54, %c0_55, %c0_56] : memref<3x128x128xf32, #tpu.memory_space<vmem>>, vector<1x128x128xf32>
    %83 = vector.shape_cast %82 : vector<1x128x128xf32> to vector<128x128xf32>
    %cst_57 = arith.constant dense<0.000000e+00> : vector<256x128xf32>
    %84 = tpu.matmul %81, %83, %cst_57 {dimension_numbers = #tpu.dot_dimension_numbers<[1], [0], [0], [1], [0, 0, 1, 1], [], []>} : vector<256x128xf32>, vector<128x128xf32>, vector<256x128xf32> -> vector<256x128xf32>
    %c2_58 = arith.constant 2 : index
    %c0_59 = arith.constant 0 : index
    %c0_60 = arith.constant 0 : index
    %85 = vector.load %arg10[%c2_58, %c0_59, %c0_60] : memref<3x1x128xf32, #tpu.memory_space<vmem>>, vector<1x1x128xf32>
    %86 = vector.shape_cast %85 : vector<1x1x128xf32> to vector<1x128xf32>
    %87 = vector.broadcast %86 : vector<1x128xf32> to vector<256x128xf32>
    %88 = arith.addf %84, %87 : vector<256x128xf32>
    %89 = arith.addf %70, %88 : vector<256x128xf32>
    %c0_61 = arith.constant 0 : index
    %c0_62 = arith.constant 0 : index
    %90 = vector.load %arg11[%c0_61, %c0_62] : memref<1x128xf32, #tpu.memory_space<vmem>>, vector<1x128xf32>
    %cst_63 = arith.constant dense<0.000000e+00> : vector<1x256xf32>
    %91 = tpu.matmul %90, %89, %cst_63 {dimension_numbers = #tpu.dot_dimension_numbers<[1], [1], [0], [0], [0, 0, 1, 0], [], []>} : vector<1x128xf32>, vector<256x128xf32>, vector<1x256xf32> -> vector<1x256xf32>
    %c0_64 = arith.constant 0 : index
    %c0_65 = arith.constant 0 : index
    %92 = vector.load %arg12[%c0_64, %c0_65] : memref<1x1xf32, #tpu.memory_space<vmem>>, vector<1x1xf32>
    %93 = vector.broadcast %92 : vector<1x1xf32> to vector<1x256xf32>
    %94 = arith.addf %91, %93 : vector<1x256xf32>
    %c0_66 = arith.constant 0 : index
    %c0_67 = arith.constant 0 : index
    %95 = vector.load %arg13[%c0_66, %c0_67] : memref<1x256xf32, #tpu.memory_space<vmem>>, vector<1x256xf32>
    tpu.vector_store %arg13[%c0_66, %c0_67], %94 {strides = array<i32>} : memref<1x256xf32, #tpu.memory_space<vmem>>, vector<1x256xf32>,
    return
  }
  func.func @transform_0(%arg0: i32) -> (i32, i32) {
    %c0_i32 = arith.constant 0 : i32
    %c0_i32_0 = arith.constant 0 : i32
    return %arg0, %c0_i32 : i32, i32
  }
  func.func @transform_1(%arg0: i32) -> (i32, i32) {
    %c0_i32 = arith.constant 0 : i32
    %c0_i32_0 = arith.constant 0 : i32
    return %arg0, %c0_i32 : i32, i32
  }
  func.func @transform_2(%arg0: i32) -> (i32, i32) {
    %c0_i32 = arith.constant 0 : i32
    %c0_i32_0 = arith.constant 0 : i32
    %c0_i32_1 = arith.constant 0 : i32
    return %c0_i32, %c0_i32_0 : i32, i32
  }
  func.func @transform_3(%arg0: i32) -> (i32, i32) {
    %c0_i32 = arith.constant 0 : i32
    %c0_i32_0 = arith.constant 0 : i32
    %c0_i32_1 = arith.constant 0 : i32
    return %c0_i32, %c0_i32_0 : i32, i32
  }
  func.func @transform_4(%arg0: i32) -> (i32, i32) {
    %c0_i32 = arith.constant 0 : i32
    %c0_i32_0 = arith.constant 0 : i32
    %c0_i32_1 = arith.constant 0 : i32
    return %c0_i32, %c0_i32_0 : i32, i32
  }
  func.func @transform_5(%arg0: i32) -> (i32, i32) {
    %c0_i32 = arith.constant 0 : i32
    %c0_i32_0 = arith.constant 0 : i32
    %c0_i32_1 = arith.constant 0 : i32
    return %c0_i32, %c0_i32_0 : i32, i32
  }
  func.func @transform_6(%arg0: i32) -> (i32, i32, i32) {
    %c0_i32 = arith.constant 0 : i32
    %c0_i32_0 = arith.constant 0 : i32
    %c0_i32_1 = arith.constant 0 : i32
    %c0_i32_2 = arith.constant 0 : i32
    return %c0_i32, %c0_i32_0, %c0_i32_1 : i32, i32, i32
  }
  func.func @transform_7(%arg0: i32) -> (i32, i32, i32) {
    %c0_i32 = arith.constant 0 : i32
    %c0_i32_0 = arith.constant 0 : i32
    %c0_i32_1 = arith.constant 0 : i32
    %c0_i32_2 = arith.constant 0 : i32
    return %c0_i32, %c0_i32_0, %c0_i32_1 : i32, i32, i32
  }
  func.func @transform_8(%arg0: i32) -> (i32, i32, i32) {
    %c0_i32 = arith.constant 0 : i32
    %c0_i32_0 = arith.constant 0 : i32
    %c0_i32_1 = arith.constant 0 : i32
    %c0_i32_2 = arith.constant 0 : i32
    return %c0_i32, %c0_i32_0, %c0_i32_1 : i32, i32, i32
  }
  func.func @transform_9(%arg0: i32) -> (i32, i32, i32) {
    %c0_i32 = arith.constant 0 : i32
    %c0_i32_0 = arith.constant 0 : i32
    %c0_i32_1 = arith.constant 0 : i32
    %c0_i32_2 = arith.constant 0 : i32
    return %c0_i32, %c0_i32_0, %c0_i32_1 : i32, i32, i32
  }
  func.func @transform_10(%arg0: i32) -> (i32, i32) {
    %c0_i32 = arith.constant 0 : i32
    %c0_i32_0 = arith.constant 0 : i32
    %c0_i32_1 = arith.constant 0 : i32
    return %c0_i32, %c0_i32_0 : i32, i32
  }
  func.func @transform_11(%arg0: i32) -> (i32, i32) {
    %c0_i32 = arith.constant 0 : i32
    %c0_i32_0 = arith.constant 0 : i32
    %c0_i32_1 = arith.constant 0 : i32
    return %c0_i32, %c0_i32_0 : i32, i32
  }
  func.func @transform_12(%arg0: i32) -> (i32, i32) {
    %c0_i32 = arith.constant 0 : i32
    %c0_i32_0 = arith.constant 0 : i32
    return %c0_i32, %arg0 : i32, i32
  }
}

</mosaic_0001>

<llo_original>
// kernel: tpu_custom_call.1
$region0: #{tpu_custom_call.1}
  #allocation0 [shape = 'u32[]', space=smem, size = 0x4, offset = 0x4, fixed_abs, tag = 'smem constant byte address 0x4 - core index']
  #allocation1 [shape = 'u32[144,128]{1,0:T(1,128)}', space=vmem, size = 0x12000, scoped, tag = 'internal scratch']
  #allocation2 [shape = 'f32[1,1]{1,0:T(1,128)S(1)}', space=vmem, size = 0x200, scoped, tag = 'scoped memory for tpu_custom_call.1']
  %s0 = inlined_call_operand.vmem [shape: f32[512,3], index: 0, kind: input, shape index: {}]
  %s1 = inlined_call_operand.vmem [shape: f32[512,128], index: 1, kind: input, shape index: {}]
  %s2 = inlined_call_operand.vmem [shape: f32[3,128], index: 2, kind: input, shape index: {}]
  %s3 = inlined_call_operand.vmem [shape: f32[1,128], index: 3, kind: input, shape index: {}]
  %s4 = inlined_call_operand.hbm [shape: f32[128,384], index: 4, kind: input, shape index: {}]
  %s5 = inlined_call_operand.vmem [shape: f32[1,384], index: 5, kind: input, shape index: {}]
  %s6 = inlined_call_operand.hbm [shape: f32[3,128,128], index: 6, kind: input, shape index: {}]
  %s7 = inlined_call_operand.vmem [shape: f32[3,1,128], index: 7, kind: input, shape index: {}]
  %s8 = inlined_call_operand.hbm [shape: f32[3,128,128], index: 8, kind: input, shape index: {}]
  %s9 = inlined_call_operand.vmem [shape: f32[3,1,128], index: 9, kind: input, shape index: {}]
  %s10 = inlined_call_operand.vmem [shape: f32[1,128], index: 10, kind: input, shape index: {}]
  %s11 = inlined_call_operand.<no memory space> [shape: f32[1,1], index: 11, kind: input, shape index: {}]
  %s12 = inlined_call_operand.hbm [shape: f32[1,512], index: 12, kind: output, shape index: {}]
  %s13 = sld [smem:[#allocation0]]
  $region93: #{tpu_custom_call.1} parent=0
    _
  %s15 = ssub.s32 1, %s13
  %s16 = scalar_select 0, %s15, %s13
  %v17 = vstv %s11
  %18 = vst [vmem:[#allocation2] sm:$0x1] %v17
  $region1: #{tpu_custom_call.1} parent=0
    #allocation3 [shape = 'u8[196608]{0}', space=vmem, size = 0x30000, scoped, tag = 'input window, operand 4, single buffered']
    #allocation4 [shape = 's32[2]{0}', space=sflag, size = 0x8, scoped, tag = 'scoped memory for tpu_custom_call.1']
    #allocation5 [shape = 's32[2]{0}', space=sflag, size = 0x8, scoped, tag = 'scoped memory for tpu_custom_call.1']
    #allocation6 [shape = 'u8[196608]{0}', space=vmem, size = 0x30000, scoped, tag = 'input window, operand 6, single buffered']
    #allocation7 [shape = 's32[1]{0}', space=sflag, size = 0x4, scoped, tag = 'scoped memory for tpu_custom_call.1']
    #allocation8 [shape = 'u8[196608]{0}', space=vmem, size = 0x30000, scoped, tag = 'input window, operand 8, single buffered']
    #allocation9 [shape = 'u8[2048]{0}', space=vmem, size = 0x800, scoped, tag = 'output window, operand 0']
    %19 = vsyncpa [#allocation4], 0
    %20 = vsyncpa [#allocation7], 0
    %21 = vsyncpa [#allocation5], 0
    %s22 = scalar_lea.sflag [#allocation5], 1
    %23 = vsyncpa %s22, 0
    loop: start=0, step=1, limit=4
    $region2: #{tpu_custom_call.1} parent=1 // loop_pre_header
      _
    $region3: #{tpu_custom_call.1} parent=1 // loop_header
      %s25 = sphi 0, %s29
      %p26 = scmp.ge.s32.totalorder %s25, 4
      %s35 = sphi 0, %s37
      %s38 = sphi 0, %s35
      %s39 = sphi 0, %s38
      %s55 = sphi 0, %s39
      %s61 = sphi 0, %s63
      %s64 = sphi 0, %s61
      %s65 = sphi 0, %s64
      %s81 = sphi 0, %s65
      %s85 = sphi 0, %s85
      %s87 = sphi 0, %s85
      %s88 = sphi 0, %s87
      %s102 = sphi 0, %s88
      %s106 = sphi 0, %s106
      %s108 = sphi 0, %s106
      %s109 = sphi 0, %s108
      %s123 = sphi 0, %s109
      %s127 = sphi 0, %s127
      %s129 = sphi 0, %s127
      %s130 = sphi 0, %s129
      %s144 = sphi 0, %s130
      %s148 = sphi 0, %s148
      %s150 = sphi 0, %s148
      %s151 = sphi 0, %s150
      %s165 = sphi 0, %s151
      %s169 = sphi 0, %s169
      %s171 = sphi 0, %s169
      %s172 = sphi 0, %s171
      %s186 = sphi 0, %s172
      %s190 = sphi 0, %s190
      %s192 = sphi 0, %s190
      %s193 = sphi 0, %s192
      %s207 = sphi 0, %s193
      %s211 = sphi 0, %s211
      %s213 = sphi 0, %s211
      %s214 = sphi 0, %s213
      %s228 = sphi 0, %s214
      %s232 = sphi 0, %s232
      %s234 = sphi 0, %s232
      %s235 = sphi 0, %s234
      %s249 = sphi 0, %s235
      %s253 = sphi 0, %s253
      %s255 = sphi 0, %s253
      %s256 = sphi 0, %s255
      %s270 = sphi 0, %s256
      %s274 = sphi 0, %s274
      %s276 = sphi 0, %s274
      %s277 = sphi 0, %s276
      %s291 = sphi 0, %s277
      %s297 = sphi 0, %s299
      %s300 = sphi 0, %s297
      %s301 = sphi 0, %s300
      %s317 = sphi 0, %s301
    $region4: #{tpu_custom_call.1} parent=1 // loop_header_branch
      %28 = sbr.rel (%p26) target = $region8
    $region5: #{tpu_custom_call.1} parent=1 // loop_body
      %s30 = ssub.s32 %s25, 1
      %s31 = ssub.s32 %s25, 2
      %s32 = sadd.s32 %s25, 1
      %s33 = ssub.s32 %s25, %s32
      %p34 = scmp.eq.s32.totalorder %s33, 0
      %s36 = sadd.s32 %s35, 1
      %s37 = scalar_select %p34, %s35, %s36
      %p40 = pneg %p34
      %p41 = scmp.eq.s32.totalorder %s25, 1
      %p42 = por %p40, %p41
      %p43 = scmp.ne.s32.totalorder %s35, %s38
      %p44 = scmp.eq.s32.totalorder %s25, 0
      %p45 = por %p43, %p44
      %p46 = scmp.ne.s32.totalorder %s35, %s38
      %p47 = scmp.eq.s32.totalorder %s30, 1
      %p48 = por %p46, %p47
      %p49 = scmp.ne.s32.totalorder %s38, %s39
      %p50 = scmp.eq.s32.totalorder %s30, 0
      %p51 = por %p49, %p50
      %p52 = scmp.ne.s32.totalorder %s38, %s39
      %p53 = scmp.eq.s32.totalorder %s31, 1
      %p54 = por %p52, %p53
      %p56 = scmp.ne.s32.totalorder %s39, %s55
      %p57 = scmp.eq.s32.totalorder %s31, 0
      %p58 = por %p56, %p57
      %s59 = ssub.s32 %s25, %s32
      %p60 = scmp.eq.s32.totalorder %s59, 0
      %s62 = sadd.s32 %s61, 1
      %s63 = scalar_select %p60, %s61, %s62
      %p66 = pneg %p60
      %p67 = scmp.eq.s32.totalorder %s25, 1
      %p68 = por %p66, %p67
      %p69 = scmp.ne.s32.totalorder %s61, %s64
      %p70 = scmp.eq.s32.totalorder %s25, 0
      %p71 = por %p69, %p70
      %p72 = scmp.ne.s32.totalorder %s61, %s64
      %p73 = scmp.eq.s32.totalorder %s30, 1
      %p74 = por %p72, %p73
      %p75 = scmp.ne.s32.totalorder %s64, %s65
      %p76 = scmp.eq.s32.totalorder %s30, 0
      %p77 = por %p75, %p76
      %p78 = scmp.ne.s32.totalorder %s64, %s65
      %p79 = scmp.eq.s32.totalorder %s31, 1
      %p80 = por %p78, %p79
      %p82 = scmp.ne.s32.totalorder %s65, %s81
      %p83 = scmp.eq.s32.totalorder %s31, 0
      %p84 = por %p82, %p83
      %s86 = sadd.s32 %s85, 1
      %p89 = scmp.eq.s32.totalorder %s25, 1
      %p90 = scmp.ne.s32.totalorder %s85, %s87
      %p91 = scmp.eq.s32.totalorder %s25, 0
      %p92 = por %p90, %p91
      %p93 = scmp.ne.s32.totalorder %s85, %s87
      %p94 = scmp.eq.s32.totalorder %s30, 1
      %p95 = por %p93, %p94
      %p96 = scmp.ne.s32.totalorder %s87, %s88
      %p97 = scmp.eq.s32.totalorder %s30, 0
      %p98 = por %p96, %p97
      %p99 = scmp.ne.s32.totalorder %s87, %s88
      %p100 = scmp.eq.s32.totalorder %s31, 1
      %p101 = por %p99, %p100
      %p103 = scmp.ne.s32.totalorder %s88, %s102
      %p104 = scmp.eq.s32.totalorder %s31, 0
      %p105 = por %p103, %p104
      %s107 = sadd.s32 %s106, 1
      %p110 = scmp.eq.s32.totalorder %s25, 1
      %p111 = scmp.ne.s32.totalorder %s106, %s108
      %p112 = scmp.eq.s32.totalorder %s25, 0
      %p113 = por %p111, %p112
      %p114 = scmp.ne.s32.totalorder %s106, %s108
      %p115 = scmp.eq.s32.totalorder %s30, 1
      %p116 = por %p114, %p115
      %p117 = scmp.ne.s32.totalorder %s108, %s109
      %p118 = scmp.eq.s32.totalorder %s30, 0
      %p119 = por %p117, %p118
      %p120 = scmp.ne.s32.totalorder %s108, %s109
      %p121 = scmp.eq.s32.totalorder %s31, 1
      %p122 = por %p120, %p121
      %p124 = scmp.ne.s32.totalorder %s109, %s123
      %p125 = scmp.eq.s32.totalorder %s31, 0
      %p126 = por %p124, %p125
      %s128 = sadd.s32 %s127, 1
      %p131 = scmp.eq.s32.totalorder %s25, 1
      %p132 = scmp.ne.s32.totalorder %s127, %s129
      %p133 = scmp.eq.s32.totalorder %s25, 0
      %p134 = por %p132, %p133
      %p135 = scmp.ne.s32.totalorder %s127, %s129
      %p136 = scmp.eq.s32.totalorder %s30, 1
      %p137 = por %p135, %p136
      %p138 = scmp.ne.s32.totalorder %s129, %s130
      %p139 = scmp.eq.s32.totalorder %s30, 0
      %p140 = por %p138, %p139
      %p141 = scmp.ne.s32.totalorder %s129, %s130
      %p142 = scmp.eq.s32.totalorder %s31, 1
      %p143 = por %p141, %p142
      %p145 = scmp.ne.s32.totalorder %s130, %s144
      %p146 = scmp.eq.s32.totalorder %s31, 0
      %p147 = por %p145, %p146
      %s149 = sadd.s32 %s148, 1
      %p152 = scmp.eq.s32.totalorder %s25, 1
      %p153 = scmp.ne.s32.totalorder %s148, %s150
      %p154 = scmp.eq.s32.totalorder %s25, 0
      %p155 = por %p153, %p154
      %p156 = scmp.ne.s32.totalorder %s148, %s150
      %p157 = scmp.eq.s32.totalorder %s30, 1
      %p158 = por %p156, %p157
      %p159 = scmp.ne.s32.totalorder %s150, %s151
      %p160 = scmp.eq.s32.totalorder %s30, 0
      %p161 = por %p159, %p160
      %p162 = scmp.ne.s32.totalorder %s150, %s151
      %p163 = scmp.eq.s32.totalorder %s31, 1
      %p164 = por %p162, %p163
      %p166 = scmp.ne.s32.totalorder %s151, %s165
      %p167 = scmp.eq.s32.totalorder %s31, 0
      %p168 = por %p166, %p167
      %s170 = sadd.s32 %s169, 1
      %p173 = scmp.eq.s32.totalorder %s25, 1
      %p174 = scmp.ne.s32.totalorder %s169, %s171
      %p175 = scmp.eq.s32.totalorder %s25, 0
      %p176 = por %p174, %p175
      %p177 = scmp.ne.s32.totalorder %s169, %s171
      %p178 = scmp.eq.s32.totalorder %s30, 1
      %p179 = por %p177, %p178
      %p180 = scmp.ne.s32.totalorder %s171, %s172
      %p181 = scmp.eq.s32.totalorder %s30, 0
      %p182 = por %p180, %p181
      %p183 = scmp.ne.s32.totalorder %s171, %s172
      %p184 = scmp.eq.s32.totalorder %s31, 1
      %p185 = por %p183, %p184
      %p187 = scmp.ne.s32.totalorder %s172, %s186
      %p188 = scmp.eq.s32.totalorder %s31, 0
      %p189 = por %p187, %p188
      %s191 = sadd.s32 %s190, 1
      %p194 = scmp.eq.s32.totalorder %s25, 1
      %p195 = scmp.ne.s32.totalorder %s190, %s192
      %p196 = scmp.eq.s32.totalorder %s25, 0
      %p197 = por %p195, %p196
      %p198 = scmp.ne.s32.totalorder %s190, %s192
      %p199 = scmp.eq.s32.totalorder %s30, 1
      %p200 = por %p198, %p199
      %p201 = scmp.ne.s32.totalorder %s192, %s193
      %p202 = scmp.eq.s32.totalorder %s30, 0
      %p203 = por %p201, %p202
      %p204 = scmp.ne.s32.totalorder %s192, %s193
      %p205 = scmp.eq.s32.totalorder %s31, 1
      %p206 = por %p204, %p205
      %p208 = scmp.ne.s32.totalorder %s193, %s207
      %p209 = scmp.eq.s32.totalorder %s31, 0
      %p210 = por %p208, %p209
      %s212 = sadd.s32 %s211, 1
      %p215 = scmp.eq.s32.totalorder %s25, 1
      %p216 = scmp.ne.s32.totalorder %s211, %s213
      %p217 = scmp.eq.s32.totalorder %s25, 0
      %p218 = por %p216, %p217
      %p219 = scmp.ne.s32.totalorder %s211, %s213
      %p220 = scmp.eq.s32.totalorder %s30, 1
      %p221 = por %p219, %p220
      %p222 = scmp.ne.s32.totalorder %s213, %s214
      %p223 = scmp.eq.s32.totalorder %s30, 0
      %p224 = por %p222, %p223
      %p225 = scmp.ne.s32.totalorder %s213, %s214
      %p226 = scmp.eq.s32.totalorder %s31, 1
      %p227 = por %p225, %p226
      %p229 = scmp.ne.s32.totalorder %s214, %s228
      %p230 = scmp.eq.s32.totalorder %s31, 0
      %p231 = por %p229, %p230
      %s233 = sadd.s32 %s232, 1
      %p236 = scmp.eq.s32.totalorder %s25, 1
      %p237 = scmp.ne.s32.totalorder %s232, %s234
      %p238 = scmp.eq.s32.totalorder %s25, 0
      %p239 = por %p237, %p238
      %p240 = scmp.ne.s32.totalorder %s232, %s234
      %p241 = scmp.eq.s32.totalorder %s30, 1
      %p242 = por %p240, %p241
      %p243 = scmp.ne.s32.totalorder %s234, %s235
      %p244 = scmp.eq.s32.totalorder %s30, 0
      %p245 = por %p243, %p244
      %p246 = scmp.ne.s32.totalorder %s234, %s235
      %p247 = scmp.eq.s32.totalorder %s31, 1
      %p248 = por %p246, %p247
      %p250 = scmp.ne.s32.totalorder %s235, %s249
      %p251 = scmp.eq.s32.totalorder %s31, 0
      %p252 = por %p250, %p251
      %s254 = sadd.s32 %s253, 1
      %p257 = scmp.eq.s32.totalorder %s25, 1
      %p258 = scmp.ne.s32.totalorder %s253, %s255
      %p259 = scmp.eq.s32.totalorder %s25, 0
      %p260 = por %p258, %p259
      %p261 = scmp.ne.s32.totalorder %s253, %s255
      %p262 = scmp.eq.s32.totalorder %s30, 1
      %p263 = por %p261, %p262
      %p264 = scmp.ne.s32.totalorder %s255, %s256
      %p265 = scmp.eq.s32.totalorder %s30, 0
      %p266 = por %p264, %p265
      %p267 = scmp.ne.s32.totalorder %s255, %s256
      %p268 = scmp.eq.s32.totalorder %s31, 1
      %p269 = por %p267, %p268
      %p271 = scmp.ne.s32.totalorder %s256, %s270
      %p272 = scmp.eq.s32.totalorder %s31, 0
      %p273 = por %p271, %p272
      %s275 = sadd.s32 %s274, 1
      %p278 = scmp.eq.s32.totalorder %s25, 1
      %p279 = scmp.ne.s32.totalorder %s274, %s276
      %p280 = scmp.eq.s32.totalorder %s25, 0
      %p281 = por %p279, %p280
      %p282 = scmp.ne.s32.totalorder %s274, %s276
      %p283 = scmp.eq.s32.totalorder %s30, 1
      %p284 = por %p282, %p283
      %p285 = scmp.ne.s32.totalorder %s276, %s277
      %p286 = scmp.eq.s32.totalorder %s30, 0
      %p287 = por %p285, %p286
      %p288 = scmp.ne.s32.totalorder %s276, %s277
      %p289 = scmp.eq.s32.totalorder %s31, 1
      %p290 = por %p288, %p289
      %p292 = scmp.ne.s32.totalorder %s277, %s291
      %p293 = scmp.eq.s32.totalorder %s31, 0
      %p294 = por %p292, %p293
      %s295 = ssub.s32 %s25, %s32
      %p296 = scmp.eq.s32.totalorder %s295, 0
      %s298 = sadd.s32 %s297, 1
      %s299 = scalar_select %p296, %s297, %s298
      %p302 = pneg %p296
      %p303 = scmp.eq.s32.totalorder %s25, 1
      %p304 = por %p302, %p303
      %p305 = scmp.ne.s32.totalorder %s297, %s300
      %p306 = scmp.eq.s32.totalorder %s25, 0
      %p307 = por %p305, %p306
      %p308 = scmp.ne.s32.totalorder %s297, %s300
      %p309 = scmp.eq.s32.totalorder %s30, 1
      %p310 = por %p308, %p309
      %p311 = scmp.ne.s32.totalorder %s300, %s301
      %p312 = scmp.eq.s32.totalorder %s30, 0
      %p313 = por %p311, %p312
      %p314 = scmp.ne.s32.totalorder %s300, %s301
      %p315 = scmp.eq.s32.totalorder %s31, 1
      %p316 = por %p314, %p315
      %p318 = scmp.ne.s32.totalorder %s301, %s317
      %p319 = scmp.eq.s32.totalorder %s31, 0
      %p320 = por %p318, %p319
      %p321 = scmp.le.s32.totalorder 1, %s25
      %p322 = scmp.lt.s32.totalorder %s25, 3
      %p323 = pnand %p321, %p322
      %p324 = pneg %p323
      // Predicated region
      $region9: #{tpu_custom_call.1} parent=5 // pred_check
        _
      $region10: #{tpu_custom_call.1} parent=5 // pred_check_branch
        %326 = sbr.rel (%p323) target = $region12
      $region11: #{tpu_custom_call.1} parent=5 // pred_region
        %s327 = ssub.s32 %s25, 1
        // Predicated region
        $region13: #{tpu_custom_call.1} parent=11 // pred_check
          %p328 = pneg %p98
        $region14: #{tpu_custom_call.1} parent=11 // pred_check_branch
          %330 = sbr.rel (%p328) target = $region16
        $region15: #{tpu_custom_call.1} parent=11 // pred_region
          _
        $region16: #{tpu_custom_call.1} parent=11 // pred_fallthru
          _
        // Predicated region
        $region17: #{tpu_custom_call.1} parent=11 // pred_check
          %p331 = pneg %p119
        $region18: #{tpu_custom_call.1} parent=11 // pred_check_branch
          %333 = sbr.rel (%p331) target = $region20
        $region19: #{tpu_custom_call.1} parent=11 // pred_region
          _
        $region20: #{tpu_custom_call.1} parent=11 // pred_fallthru
          _
        // Predicated region
        $region21: #{tpu_custom_call.1} parent=11 // pred_check
          %p334 = pneg %p140
        $region22: #{tpu_custom_call.1} parent=11 // pred_check_branch
          %336 = sbr.rel (%p334) target = $region24
        $region23: #{tpu_custom_call.1} parent=11 // pred_region
          %s338 = ssub.s32 6144, 6144
          %339 = vsyncadd [#allocation4], %s338
          %s340 = sshll.u32 [#allocation3], 4
          %s341 = int_to_ptr.vmem [resolvable:$true] %s340
          %346 = dma.hbm_to_vmem [thread:$0]  %s4, 6144, %s341, [#allocation4], 384, 384, 24
        $region24: #{tpu_custom_call.1} parent=11 // pred_fallthru
          _
        // Predicated region
        $region25: #{tpu_custom_call.1} parent=11 // pred_check
          %p347 = pneg %p161
        $region26: #{tpu_custom_call.1} parent=11 // pred_check_branch
          %349 = sbr.rel (%p347) target = $region28
        $region27: #{tpu_custom_call.1} parent=11 // pred_region
          _
        $region28: #{tpu_custom_call.1} parent=11 // pred_fallthru
          _
        // Predicated region
        $region29: #{tpu_custom_call.1} parent=11 // pred_check
          %p350 = pneg %p182
        $region30: #{tpu_custom_call.1} parent=11 // pred_check_branch
          %352 = sbr.rel (%p350) target = $region32
        $region31: #{tpu_custom_call.1} parent=11 // pred_region
          %s354 = ssub.s32 6144, 6144
          %355 = vsyncadd [#allocation7], %s354
          %s356 = sshll.u32 [#allocation6], 4
          %s357 = int_to_ptr.vmem [resolvable:$true] %s356
          %362 = dma.hbm_to_vmem [thread:$0]  %s6, 6144, %s357, [#allocation7], 128, 128, 8
        $region32: #{tpu_custom_call.1} parent=11 // pred_fallthru
          _
        // Predicated region
        $region33: #{tpu_custom_call.1} parent=11 // pred_check
          %p363 = pneg %p203
        $region34: #{tpu_custom_call.1} parent=11 // pred_check_branch
          %365 = sbr.rel (%p363) target = $region36
        $region35: #{tpu_custom_call.1} parent=11 // pred_region
          _
        $region36: #{tpu_custom_call.1} parent=11 // pred_fallthru
          _
        // Predicated region
        $region37: #{tpu_custom_call.1} parent=11 // pred_check
          %p366 = pneg %p224
        $region38: #{tpu_custom_call.1} parent=11 // pred_check_branch
          %368 = sbr.rel (%p366) target = $region40
        $region39: #{tpu_custom_call.1} parent=11 // pred_region
          %s370 = ssub.s32 6144, 6144
          %371 = vsyncadd [#allocation7], %s370
          %s372 = sshll.u32 [#allocation8], 4
          %s373 = int_to_ptr.vmem [resolvable:$true] %s372
          %378 = dma.hbm_to_vmem [thread:$0]  %s8, 6144, %s373, [#allocation7], 128, 128, 8
        $region40: #{tpu_custom_call.1} parent=11 // pred_fallthru
          _
        // Predicated region
        $region41: #{tpu_custom_call.1} parent=11 // pred_check
          %p379 = pneg %p245
        $region42: #{tpu_custom_call.1} parent=11 // pred_check_branch
          %381 = sbr.rel (%p379) target = $region44
        $region43: #{tpu_custom_call.1} parent=11 // pred_region
          _
        $region44: #{tpu_custom_call.1} parent=11 // pred_fallthru
          _
        // Predicated region
        $region45: #{tpu_custom_call.1} parent=11 // pred_check
          %p382 = pneg %p266
        $region46: #{tpu_custom_call.1} parent=11 // pred_check_branch
          %384 = sbr.rel (%p382) target = $region48
        $region47: #{tpu_custom_call.1} parent=11 // pred_region
          _
        $region48: #{tpu_custom_call.1} parent=11 // pred_fallthru
          _
        // Predicated region
        $region49: #{tpu_custom_call.1} parent=11 // pred_check
          %p385 = pneg %p287
        $region50: #{tpu_custom_call.1} parent=11 // pred_check_branch
          %387 = sbr.rel (%p385) target = $region52
        $region51: #{tpu_custom_call.1} parent=11 // pred_region
          _
        $region52: #{tpu_custom_call.1} parent=11 // pred_fallthru
          _
      $region12: #{tpu_custom_call.1} parent=5 // pred_fallthru
        _
      %p388 = scmp.lt.s32.totalorder %s25, 2
      // Predicated region
      $region53: #{tpu_custom_call.1} parent=5 // pred_check
        %p389 = pneg %p388
      $region54: #{tpu_custom_call.1} parent=5 // pred_check_branch
        %391 = sbr.rel (%p389) target = $region56
      $region55: #{tpu_custom_call.1} parent=5 // pred_region
        // Predicated region
        $region57: #{tpu_custom_call.1} parent=55 // pred_check
          %p392 = pneg %p45
        $region58: #{tpu_custom_call.1} parent=55 // pred_check_branch
          %394 = sbr.rel (%p392) target = $region60
        $region59: #{tpu_custom_call.1} parent=55 // pred_region
          %s395 = smul.u32 32, %s25
          %p396 = scmp.lt.s32.totalorder %s395, 63
          %s397 = scalar_select %p396, %s395, 63
          %s398 = smul.addr %s397, 8
          %s399 = scalar_lea.vmem %s0, %s398
          %s400 = smul.u32 32, %s25
        $region60: #{tpu_custom_call.1} parent=55 // pred_fallthru
          _
        // Predicated region
        $region61: #{tpu_custom_call.1} parent=55 // pred_check
          %p401 = pneg %p71
        $region62: #{tpu_custom_call.1} parent=55 // pred_check_branch
          %403 = sbr.rel (%p401) target = $region64
        $region63: #{tpu_custom_call.1} parent=55 // pred_region
          %s404 = smul.u32 32, %s25
          %p405 = scmp.lt.s32.totalorder %s404, 63
          %s406 = scalar_select %p405, %s404, 63
          %s407 = smul.addr %s406, 8
          %s408 = scalar_lea.vmem %s1, %s407
          %s409 = smul.u32 32, %s25
        $region64: #{tpu_custom_call.1} parent=55 // pred_fallthru
          _
      $region56: #{tpu_custom_call.1} parent=5 // pred_fallthru
        _
      %p410 = scmp.le.s32.totalorder 1, %s25
      %p411 = scmp.lt.s32.totalorder %s25, 3
      %p412 = pnand %p410, %p411
      %p413 = pneg %p412
      // Predicated region
      $region65: #{tpu_custom_call.1} parent=5 // pred_check
        _
      $region66: #{tpu_custom_call.1} parent=5 // pred_check_branch
        %415 = sbr.rel (%p412) target = $region68
      $region67: #{tpu_custom_call.1} parent=5 // pred_region
        %s416 = ssub.s32 %s25, 1
        // Predicated region
        $region69: #{tpu_custom_call.1} parent=67 // pred_check
          %p417 = pneg %p140
        $region70: #{tpu_custom_call.1} parent=67 // pred_check_branch
          %419 = sbr.rel (%p417) target = $region72
        $region71: #{tpu_custom_call.1} parent=67 // pred_region
          %420 = dma.done [#allocation4], 6144
        $region72: #{tpu_custom_call.1} parent=67 // pred_fallthru
          _
        // Predicated region
        $region73: #{tpu_custom_call.1} parent=67 // pred_check
          %p421 = pneg %p182
        $region74: #{tpu_custom_call.1} parent=67 // pred_check_branch
          %423 = sbr.rel (%p421) target = $region76
        $region75: #{tpu_custom_call.1} parent=67 // pred_region
          %424 = dma.done [#allocation7], 6144
        $region76: #{tpu_custom_call.1} parent=67 // pred_fallthru
          _
        // Predicated region
        $region77: #{tpu_custom_call.1} parent=67 // pred_check
          %p425 = pneg %p224
        $region78: #{tpu_custom_call.1} parent=67 // pred_check_branch
          %427 = sbr.rel (%p425) target = $region80
        $region79: #{tpu_custom_call.1} parent=67 // pred_region
          %428 = dma.done [#allocation7], 6144
        $region80: #{tpu_custom_call.1} parent=67 // pred_fallthru
          _
        %s429 = smul.u32 32, %s30
        %p430 = scmp.lt.s32.totalorder %s429, 63
        %s431 = scalar_select %p430, %s429, 63
        %s432 = smul.addr %s431, 8
        %s433 = scalar_lea.vmem %s0, %s432
        %p434 = pneg %p51
        %p435 = pneg %p48
        %s436 = smul.u32 32, %s30
        %p437 = scmp.lt.s32.totalorder %s436, 63
        %s438 = scalar_select %p437, %s436, 63
        %s439 = smul.addr %s438, 8
        %s440 = scalar_lea.vmem %s1, %s439
        %p441 = pneg %p77
        %p442 = pneg %p74
        %p443 = pneg %p98
        %p444 = pneg %p95
        %p445 = pneg %p119
        %p446 = pneg %p116
        %p447 = pneg %p140
        %p448 = pneg %p137
        %p449 = pneg %p161
        %p450 = pneg %p158
        %p451 = pneg %p182
        %p452 = pneg %p179
        %p453 = pneg %p203
        %p454 = pneg %p200
        %p455 = pneg %p224
        %p456 = pneg %p221
        %p457 = pneg %p245
        %p458 = pneg %p242
        %p459 = pneg %p266
        %p460 = pneg %p263
        %p461 = pneg %p287
        %p462 = pneg %p284
        %p463 = pneg %p313
        %p464 = pneg %p310
        %s465 = sand.u32 %s300, 1
        %s466 = scalar_lea.sflag [#allocation5], %s465
        %s467 = sand.u32 %s300, 1
        %s468 = smul.addr %s467, 2
        %s469 = scalar_lea.vmem [#allocation9], %s468
        %s470 = smul.u32 32, %s30
        %p471 = scmp.lt.s32.totalorder %s470, 63
        %s472 = scalar_select %p471, %s470, 63
        %s473 = smul.addr %s472, 8
        %s474 = scalar_lea.vmem %s0, %s473
        %s475 = smul.u32 32, %s30
        %s476 = smul.u32 32, %s30
        %p477 = scmp.lt.s32.totalorder %s476, 63
        %s478 = scalar_select %p477, %s476, 63
        %s479 = smul.addr %s478, 8
        %s480 = scalar_lea.vmem %s1, %s479
        %s481 = smul.u32 32, %s30
        %s482 = smul.u32 2, %s30
        %v483 = vld [vmem:[%s474] sm:$0xff]
        %v484 = vld [vmem:[%s474 + $0x8] sm:$0xff]
        %v485 = vld [vmem:[%s474 + $0x10] sm:$0xff]
        %v486 = vld [vmem:[%s474 + $0x18] sm:$0xff]
        %v487 = vld [vmem:[%s474 + $0x20] sm:$0xff]
        %v488 = vld [vmem:[%s474 + $0x28] sm:$0xff]
        %v489 = vld [vmem:[%s474 + $0x30] sm:$0xff]
        %v490 = vld [vmem:[%s474 + $0x38] sm:$0xff]
        %v491 = vld [vmem:[%s474 + $0x40] sm:$0xff]
        %v492 = vld [vmem:[%s474 + $0x48] sm:$0xff]
        %v493 = vld [vmem:[%s474 + $0x50] sm:$0xff]
        %v494 = vld [vmem:[%s474 + $0x58] sm:$0xff]
        %v495 = vld [vmem:[%s474 + $0x60] sm:$0xff]
        %v496 = vld [vmem:[%s474 + $0x68] sm:$0xff]
        %v497 = vld [vmem:[%s474 + $0x70] sm:$0xff]
        %v498 = vld [vmem:[%s474 + $0x78] sm:$0xff]
        %v499 = vld [vmem:[%s474 + $0x80] sm:$0xff]
        %v500 = vld [vmem:[%s474 + $0x88] sm:$0xff]
        %v501 = vld [vmem:[%s474 + $0x90] sm:$0xff]
        %v502 = vld [vmem:[%s474 + $0x98] sm:$0xff]
        %v503 = vld [vmem:[%s474 + $0xa0] sm:$0xff]
        %v504 = vld [vmem:[%s474 + $0xa8] sm:$0xff]
        %v505 = vld [vmem:[%s474 + $0xb0] sm:$0xff]
        %v506 = vld [vmem:[%s474 + $0xb8] sm:$0xff]
        %v507 = vld [vmem:[%s474 + $0xc0] sm:$0xff]
        %v508 = vld [vmem:[%s474 + $0xc8] sm:$0xff]
        %v509 = vld [vmem:[%s474 + $0xd0] sm:$0xff]
        %v510 = vld [vmem:[%s474 + $0xd8] sm:$0xff]
        %v511 = vld [vmem:[%s474 + $0xe0] sm:$0xff]
        %v512 = vld [vmem:[%s474 + $0xe8] sm:$0xff]
        %v513 = vld [vmem:[%s474 + $0xf0] sm:$0xff]
        %v514 = vld [vmem:[%s474 + $0xf8] sm:$0xff]
        %v515 = vld [vmem:[%s3] sm:$0x1]
        %v516 = vld [vmem:[%s2] sm:$0x1]
        %518 = vset.pattern.permute.xlu0 0
        %519 = vperm.xlu0 %518, %v483
        %v520 = vpop.permute.xlu0 %519
        %523 = vset.pattern.permute.xlu0 0
        %524 = vperm.xlu0 %523, %v484
        %v525 = vpop.permute.xlu0 %524
        %528 = vset.pattern.permute.xlu0 0
        %529 = vperm.xlu0 %528, %v485
        %v530 = vpop.permute.xlu0 %529
        %533 = vset.pattern.permute.xlu0 0
        %534 = vperm.xlu0 %533, %v486
        %v535 = vpop.permute.xlu0 %534
        %538 = vset.pattern.permute.xlu0 0
        %539 = vperm.xlu0 %538, %v487
        %v540 = vpop.permute.xlu0 %539
        %543 = vset.pattern.permute.xlu0 0
        %544 = vperm.xlu0 %543, %v488
        %v545 = vpop.permute.xlu0 %544
        %548 = vset.pattern.permute.xlu0 0
        %549 = vperm.xlu0 %548, %v489
        %v550 = vpop.permute.xlu0 %549
        %553 = vset.pattern.permute.xlu0 0
        %554 = vperm.xlu0 %553, %v490
        %v555 = vpop.permute.xlu0 %554
        %558 = vset.pattern.permute.xlu0 0
        %559 = vperm.xlu0 %558, %v491
        %v560 = vpop.permute.xlu0 %559
        %563 = vset.pattern.permute.xlu0 0
        %564 = vperm.xlu0 %563, %v492
        %v565 = vpop.permute.xlu0 %564
        %568 = vset.pattern.permute.xlu0 0
        %569 = vperm.xlu0 %568, %v493
        %v570 = vpop.permute.xlu0 %569
        %573 = vset.pattern.permute.xlu0 0
        %574 = vperm.xlu0 %573, %v494
        %v575 = vpop.permute.xlu0 %574
        %578 = vset.pattern.permute.xlu0 0
        %579 = vperm.xlu0 %578, %v495
        %v580 = vpop.permute.xlu0 %579
        %583 = vset.pattern.permute.xlu0 0
        %584 = vperm.xlu0 %583, %v496
        %v585 = vpop.permute.xlu0 %584
        %588 = vset.pattern.permute.xlu0 0
        %589 = vperm.xlu0 %588, %v497
        %v590 = vpop.permute.xlu0 %589
        %593 = vset.pattern.permute.xlu0 0
        %594 = vperm.xlu0 %593, %v498
        %v595 = vpop.permute.xlu0 %594
        %598 = vset.pattern.permute.xlu0 0
        %599 = vperm.xlu0 %598, %v499
        %v600 = vpop.permute.xlu0 %599
        %603 = vset.pattern.permute.xlu0 0
        %604 = vperm.xlu0 %603, %v500
        %v605 = vpop.permute.xlu0 %604
        %608 = vset.pattern.permute.xlu0 0
        %609 = vperm.xlu0 %608, %v501
        %v610 = vpop.permute.xlu0 %609
        %613 = vset.pattern.permute.xlu0 0
        %614 = vperm.xlu0 %613, %v502
        %v615 = vpop.permute.xlu0 %614
        %618 = vset.pattern.permute.xlu0 0
        %619 = vperm.xlu0 %618, %v503
        %v620 = vpop.permute.xlu0 %619
        %623 = vset.pattern.permute.xlu0 0
        %624 = vperm.xlu0 %623, %v504
        %v625 = vpop.permute.xlu0 %624
        %628 = vset.pattern.permute.xlu0 0
        %629 = vperm.xlu0 %628, %v505
        %v630 = vpop.permute.xlu0 %629
        %633 = vset.pattern.permute.xlu0 0
        %634 = vperm.xlu0 %633, %v506
        %v635 = vpop.permute.xlu0 %634
        %638 = vset.pattern.permute.xlu0 0
        %639 = vperm.xlu0 %638, %v507
        %v640 = vpop.permute.xlu0 %639
        %643 = vset.pattern.permute.xlu0 0
        %644 = vperm.xlu0 %643, %v508
        %v645 = vpop.permute.xlu0 %644
        %648 = vset.pattern.permute.xlu0 0
        %649 = vperm.xlu0 %648, %v509
        %v650 = vpop.permute.xlu0 %649
        %653 = vset.pattern.permute.xlu0 0
        %654 = vperm.xlu0 %653, %v510
        %v655 = vpop.permute.xlu0 %654
        %658 = vset.pattern.permute.xlu0 0
        %659 = vperm.xlu0 %658, %v511
        %v660 = vpop.permute.xlu0 %659
        %663 = vset.pattern.permute.xlu0 0
        %664 = vperm.xlu0 %663, %v512
        %v665 = vpop.permute.xlu0 %664
        %668 = vset.pattern.permute.xlu0 0
        %669 = vperm.xlu0 %668, %v513
        %v670 = vpop.permute.xlu0 %669
        %673 = vset.pattern.permute.xlu0 0
        %674 = vperm.xlu0 %673, %v514
        %v675 = vpop.permute.xlu0 %674
        %v677 = vlaneseq
        %v678 = vshrl.u32 %v677, 7
        %v679 = vsub.s32 0, %v678
        %v680 = vrot.slane %v516, %v679
        %v681 = vmul.f32 %v520, %v680
        %v682 = vmul.f32 %v525, %v680
        %v683 = vmul.f32 %v530, %v680
        %v684 = vmul.f32 %v535, %v680
        %v685 = vmul.f32 %v540, %v680
        %v686 = vmul.f32 %v545, %v680
        %v687 = vmul.f32 %v550, %v680
        %v688 = vmul.f32 %v555, %v680
        %v689 = vmul.f32 %v560, %v680
        %v690 = vmul.f32 %v565, %v680
        %v691 = vmul.f32 %v570, %v680
        %v692 = vmul.f32 %v575, %v680
        %v693 = vmul.f32 %v580, %v680
        %v694 = vmul.f32 %v585, %v680
        %v695 = vmul.f32 %v590, %v680
        %v696 = vmul.f32 %v595, %v680
        %v697 = vmul.f32 %v600, %v680
        %v698 = vmul.f32 %v605, %v680
        %v699 = vmul.f32 %v610, %v680
        %v700 = vmul.f32 %v615, %v680
        %v701 = vmul.f32 %v620, %v680
        %v702 = vmul.f32 %v625, %v680
        %v703 = vmul.f32 %v630, %v680
        %v704 = vmul.f32 %v635, %v680
        %v705 = vmul.f32 %v640, %v680
        %v706 = vmul.f32 %v645, %v680
        %v707 = vmul.f32 %v650, %v680
        %v708 = vmul.f32 %v655, %v680
        %v709 = vmul.f32 %v660, %v680
        %v710 = vmul.f32 %v665, %v680
        %v711 = vmul.f32 %v670, %v680
        %v712 = vmul.f32 %v675, %v680
        %v714 = vlaneseq
        %v715 = vshrl.u32 %v714, 7
        %v716 = vsub.s32 0, %v715
        %v717 = vrot.slane %v515, %v716
        %v719 = vadd.f32 %v717, %v681
        %v720 = vadd.f32 %v717, %v682
        %v721 = vadd.f32 %v717, %v683
        %v722 = vadd.f32 %v717, %v684
        %v723 = vadd.f32 %v717, %v685
        %v724 = vadd.f32 %v717, %v686
        %v725 = vadd.f32 %v717, %v687
        %v726 = vadd.f32 %v717, %v688
        %v727 = vadd.f32 %v717, %v689
        %v728 = vadd.f32 %v717, %v690
        %v729 = vadd.f32 %v717, %v691
        %v730 = vadd.f32 %v717, %v692
        %v731 = vadd.f32 %v717, %v693
        %v732 = vadd.f32 %v717, %v694
        %v733 = vadd.f32 %v717, %v695
        %v734 = vadd.f32 %v717, %v696
        %v735 = vadd.f32 %v717, %v697
        %v736 = vadd.f32 %v717, %v698
        %v737 = vadd.f32 %v717, %v699
        %v738 = vadd.f32 %v717, %v700
        %v739 = vadd.f32 %v717, %v701
        %v740 = vadd.f32 %v717, %v702
        %v741 = vadd.f32 %v717, %v703
        %v742 = vadd.f32 %v717, %v704
        %v743 = vadd.f32 %v717, %v705
        %v744 = vadd.f32 %v717, %v706
        %v745 = vadd.f32 %v717, %v707
        %v746 = vadd.f32 %v717, %v708
        %v747 = vadd.f32 %v717, %v709
        %v748 = vadd.f32 %v717, %v710
        %v749 = vadd.f32 %v717, %v711
        %v750 = vadd.f32 %v717, %v712
        %v751 = vld [vmem:[%s2 + $0x1] sm:$0x1]
        %752 = vset.pattern.permute.xlu0 1
        %753 = vperm.xlu0 %752, %v483
        %v754 = vpop.permute.xlu0 %753
        %756 = vset.pattern.permute.xlu0 1
        %757 = vperm.xlu0 %756, %v484
        %v758 = vpop.permute.xlu0 %757
        %760 = vset.pattern.permute.xlu0 1
        %761 = vperm.xlu0 %760, %v485
        %v762 = vpop.permute.xlu0 %761
        %764 = vset.pattern.permute.xlu0 1
        %765 = vperm.xlu0 %764, %v486
        %v766 = vpop.permute.xlu0 %765
        %768 = vset.pattern.permute.xlu0 1
        %769 = vperm.xlu0 %768, %v487
        %v770 = vpop.permute.xlu0 %769
        %772 = vset.pattern.permute.xlu0 1
        %773 = vperm.xlu0 %772, %v488
        %v774 = vpop.permute.xlu0 %773
        %776 = vset.pattern.permute.xlu0 1
        %777 = vperm.xlu0 %776, %v489
        %v778 = vpop.permute.xlu0 %777
        %780 = vset.pattern.permute.xlu0 1
        %781 = vperm.xlu0 %780, %v490
        %v782 = vpop.permute.xlu0 %781
        %784 = vset.pattern.permute.xlu0 1
        %785 = vperm.xlu0 %784, %v491
        %v786 = vpop.permute.xlu0 %785
        %788 = vset.pattern.permute.xlu0 1
        %789 = vperm.xlu0 %788, %v492
        %v790 = vpop.permute.xlu0 %789
        %792 = vset.pattern.permute.xlu0 1
        %793 = vperm.xlu0 %792, %v493
        %v794 = vpop.permute.xlu0 %793
        %796 = vset.pattern.permute.xlu0 1
        %797 = vperm.xlu0 %796, %v494
        %v798 = vpop.permute.xlu0 %797
        %800 = vset.pattern.permute.xlu0 1
        %801 = vperm.xlu0 %800, %v495
        %v802 = vpop.permute.xlu0 %801
        %804 = vset.pattern.permute.xlu0 1
        %805 = vperm.xlu0 %804, %v496
        %v806 = vpop.permute.xlu0 %805
        %808 = vset.pattern.permute.xlu0 1
        %809 = vperm.xlu0 %808, %v497
        %v810 = vpop.permute.xlu0 %809
        %812 = vset.pattern.permute.xlu0 1
        %813 = vperm.xlu0 %812, %v498
        %v814 = vpop.permute.xlu0 %813
        %816 = vset.pattern.permute.xlu0 1
        %817 = vperm.xlu0 %816, %v499
        %v818 = vpop.permute.xlu0 %817
        %820 = vset.pattern.permute.xlu0 1
        %821 = vperm.xlu0 %820, %v500
        %v822 = vpop.permute.xlu0 %821
        %824 = vset.pattern.permute.xlu0 1
        %825 = vperm.xlu0 %824, %v501
        %v826 = vpop.permute.xlu0 %825
        %828 = vset.pattern.permute.xlu0 1
        %829 = vperm.xlu0 %828, %v502
        %v830 = vpop.permute.xlu0 %829
        %832 = vset.pattern.permute.xlu0 1
        %833 = vperm.xlu0 %832, %v503
        %v834 = vpop.permute.xlu0 %833
        %836 = vset.pattern.permute.xlu0 1
        %837 = vperm.xlu0 %836, %v504
        %v838 = vpop.permute.xlu0 %837
        %840 = vset.pattern.permute.xlu0 1
        %841 = vperm.xlu0 %840, %v505
        %v842 = vpop.permute.xlu0 %841
        %844 = vset.pattern.permute.xlu0 1
        %845 = vperm.xlu0 %844, %v506
        %v846 = vpop.permute.xlu0 %845
        %848 = vset.pattern.permute.xlu0 1
        %849 = vperm.xlu0 %848, %v507
        %v850 = vpop.permute.xlu0 %849
        %852 = vset.pattern.permute.xlu0 1
        %853 = vperm.xlu0 %852, %v508
        %v854 = vpop.permute.xlu0 %853
        %856 = vset.pattern.permute.xlu0 1
        %857 = vperm.xlu0 %856, %v509
        %v858 = vpop.permute.xlu0 %857
        %860 = vset.pattern.permute.xlu0 1
        %861 = vperm.xlu0 %860, %v510
        %v862 = vpop.permute.xlu0 %861
        %864 = vset.pattern.permute.xlu0 1
        %865 = vperm.xlu0 %864, %v511
        %v866 = vpop.permute.xlu0 %865
        %868 = vset.pattern.permute.xlu0 1
        %869 = vperm.xlu0 %868, %v512
        %v870 = vpop.permute.xlu0 %869
        %872 = vset.pattern.permute.xlu0 1
        %873 = vperm.xlu0 %872, %v513
        %v874 = vpop.permute.xlu0 %873
        %876 = vset.pattern.permute.xlu0 1
        %877 = vperm.xlu0 %876, %v514
        %v878 = vpop.permute.xlu0 %877
        %v880 = vlaneseq
        %v881 = vshrl.u32 %v880, 7
        %v882 = vsub.s32 0, %v881
        %v883 = vrot.slane %v751, %v882
        %v884 = vmul.f32 %v754, %v883
        %v885 = vmul.f32 %v758, %v883
        %v886 = vmul.f32 %v762, %v883
        %v887 = vmul.f32 %v766, %v883
        %v888 = vmul.f32 %v770, %v883
        %v889 = vmul.f32 %v774, %v883
        %v890 = vmul.f32 %v778, %v883
        %v891 = vmul.f32 %v782, %v883
        %v892 = vmul.f32 %v786, %v883
        %v893 = vmul.f32 %v790, %v883
        %v894 = vmul.f32 %v794, %v883
        %v895 = vmul.f32 %v798, %v883
        %v896 = vmul.f32 %v802, %v883
        %v897 = vmul.f32 %v806, %v883
        %v898 = vmul.f32 %v810, %v883
        %v899 = vmul.f32 %v814, %v883
        %v900 = vmul.f32 %v818, %v883
        %v901 = vmul.f32 %v822, %v883
        %v902 = vmul.f32 %v826, %v883
        %v903 = vmul.f32 %v830, %v883
        %v904 = vmul.f32 %v834, %v883
        %v905 = vmul.f32 %v838, %v883
        %v906 = vmul.f32 %v842, %v883
        %v907 = vmul.f32 %v846, %v883
        %v908 = vmul.f32 %v850, %v883
        %v909 = vmul.f32 %v854, %v883
        %v910 = vmul.f32 %v858, %v883
        %v911 = vmul.f32 %v862, %v883
        %v912 = vmul.f32 %v866, %v883
        %v913 = vmul.f32 %v870, %v883
        %v914 = vmul.f32 %v874, %v883
        %v915 = vmul.f32 %v878, %v883
        %v916 = vadd.f32 %v719, %v884
        %v917 = vadd.f32 %v720, %v885
        %v918 = vadd.f32 %v721, %v886
        %v919 = vadd.f32 %v722, %v887
        %v920 = vadd.f32 %v723, %v888
        %v921 = vadd.f32 %v724, %v889
        %v922 = vadd.f32 %v725, %v890
        %v923 = vadd.f32 %v726, %v891
        %v924 = vadd.f32 %v727, %v892
        %v925 = vadd.f32 %v728, %v893
        %v926 = vadd.f32 %v729, %v894
        %v927 = vadd.f32 %v730, %v895
        %v928 = vadd.f32 %v731, %v896
        %v929 = vadd.f32 %v732, %v897
        %v930 = vadd.f32 %v733, %v898
        %v931 = vadd.f32 %v734, %v899
        %v932 = vadd.f32 %v735, %v900
        %v933 = vadd.f32 %v736, %v901
        %v934 = vadd.f32 %v737, %v902
        %v935 = vadd.f32 %v738, %v903
        %v936 = vadd.f32 %v739, %v904
        %v937 = vadd.f32 %v740, %v905
        %v938 = vadd.f32 %v741, %v906
        %v939 = vadd.f32 %v742, %v907
        %v940 = vadd.f32 %v743, %v908
        %v941 = vadd.f32 %v744, %v909
        %v942 = vadd.f32 %v745, %v910
        %v943 = vadd.f32 %v746, %v911
        %v944 = vadd.f32 %v747, %v912
        %v945 = vadd.f32 %v748, %v913
        %v946 = vadd.f32 %v749, %v914
        %v947 = vadd.f32 %v750, %v915
        %v948 = vld [vmem:[%s2 + $0x2] sm:$0x1]
        %949 = vset.pattern.permute.xlu0 2
        %950 = vperm.xlu0 %949, %v483
        %v951 = vpop.permute.xlu0 %950
        %953 = vset.pattern.permute.xlu0 2
        %954 = vperm.xlu0 %953, %v484
        %v955 = vpop.permute.xlu0 %954
        %957 = vset.pattern.permute.xlu0 2
        %958 = vperm.xlu0 %957, %v485
        %v959 = vpop.permute.xlu0 %958
        %961 = vset.pattern.permute.xlu0 2
        %962 = vperm.xlu0 %961, %v486
        %v963 = vpop.permute.xlu0 %962
        %965 = vset.pattern.permute.xlu0 2
        %966 = vperm.xlu0 %965, %v487
        %v967 = vpop.permute.xlu0 %966
        %969 = vset.pattern.permute.xlu0 2
        %970 = vperm.xlu0 %969, %v488
        %v971 = vpop.permute.xlu0 %970
        %973 = vset.pattern.permute.xlu0 2
        %974 = vperm.xlu0 %973, %v489
        %v975 = vpop.permute.xlu0 %974
        %977 = vset.pattern.permute.xlu0 2
        %978 = vperm.xlu0 %977, %v490
        %v979 = vpop.permute.xlu0 %978
        %981 = vset.pattern.permute.xlu0 2
        %982 = vperm.xlu0 %981, %v491
        %v983 = vpop.permute.xlu0 %982
        %985 = vset.pattern.permute.xlu0 2
        %986 = vperm.xlu0 %985, %v492
        %v987 = vpop.permute.xlu0 %986
        %989 = vset.pattern.permute.xlu0 2
        %990 = vperm.xlu0 %989, %v493
        %v991 = vpop.permute.xlu0 %990
        %993 = vset.pattern.permute.xlu0 2
        %994 = vperm.xlu0 %993, %v494
        %v995 = vpop.permute.xlu0 %994
        %997 = vset.pattern.permute.xlu0 2
        %998 = vperm.xlu0 %997, %v495
        %v999 = vpop.permute.xlu0 %998
        %1001 = vset.pattern.permute.xlu0 2
        %1002 = vperm.xlu0 %1001, %v496
        %v1003 = vpop.permute.xlu0 %1002
        %1005 = vset.pattern.permute.xlu0 2
        %1006 = vperm.xlu0 %1005, %v497
        %v1007 = vpop.permute.xlu0 %1006
        %1009 = vset.pattern.permute.xlu0 2
        %1010 = vperm.xlu0 %1009, %v498
        %v1011 = vpop.permute.xlu0 %1010
        %1013 = vset.pattern.permute.xlu0 2
        %1014 = vperm.xlu0 %1013, %v499
        %v1015 = vpop.permute.xlu0 %1014
        %1017 = vset.pattern.permute.xlu0 2
        %1018 = vperm.xlu0 %1017, %v500
        %v1019 = vpop.permute.xlu0 %1018
        %1021 = vset.pattern.permute.xlu0 2
        %1022 = vperm.xlu0 %1021, %v501
        %v1023 = vpop.permute.xlu0 %1022
        %1025 = vset.pattern.permute.xlu0 2
        %1026 = vperm.xlu0 %1025, %v502
        %v1027 = vpop.permute.xlu0 %1026
        %1029 = vset.pattern.permute.xlu0 2
        %1030 = vperm.xlu0 %1029, %v503
        %v1031 = vpop.permute.xlu0 %1030
        %1033 = vset.pattern.permute.xlu0 2
        %1034 = vperm.xlu0 %1033, %v504
        %v1035 = vpop.permute.xlu0 %1034
        %1037 = vset.pattern.permute.xlu0 2
        %1038 = vperm.xlu0 %1037, %v505
        %v1039 = vpop.permute.xlu0 %1038
        %1041 = vset.pattern.permute.xlu0 2
        %1042 = vperm.xlu0 %1041, %v506
        %v1043 = vpop.permute.xlu0 %1042
        %1045 = vset.pattern.permute.xlu0 2
        %1046 = vperm.xlu0 %1045, %v507
        %v1047 = vpop.permute.xlu0 %1046
        %1049 = vset.pattern.permute.xlu0 2
        %1050 = vperm.xlu0 %1049, %v508
        %v1051 = vpop.permute.xlu0 %1050
        %1053 = vset.pattern.permute.xlu0 2
        %1054 = vperm.xlu0 %1053, %v509
        %v1055 = vpop.permute.xlu0 %1054
        %1057 = vset.pattern.permute.xlu0 2
        %1058 = vperm.xlu0 %1057, %v510
        %v1059 = vpop.permute.xlu0 %1058
        %1061 = vset.pattern.permute.xlu0 2
        %1062 = vperm.xlu0 %1061, %v511
        %v1063 = vpop.permute.xlu0 %1062
        %1065 = vset.pattern.permute.xlu0 2
        %1066 = vperm.xlu0 %1065, %v512
        %v1067 = vpop.permute.xlu0 %1066
        %1069 = vset.pattern.permute.xlu0 2
        %1070 = vperm.xlu0 %1069, %v513
        %v1071 = vpop.permute.xlu0 %1070
        %1073 = vset.pattern.permute.xlu0 2
        %1074 = vperm.xlu0 %1073, %v514
        %v1075 = vpop.permute.xlu0 %1074
        %v1077 = vlaneseq
        %v1078 = vshrl.u32 %v1077, 7
        %v1079 = vsub.s32 0, %v1078
        %v1080 = vrot.slane %v948, %v1079
        %v1081 = vmul.f32 %v951, %v1080
        %v1082 = vmul.f32 %v955, %v1080
        %v1083 = vmul.f32 %v959, %v1080
        %v1084 = vmul.f32 %v963, %v1080
        %v1085 = vmul.f32 %v967, %v1080
        %v1086 = vmul.f32 %v971, %v1080
        %v1087 = vmul.f32 %v975, %v1080
        %v1088 = vmul.f32 %v979, %v1080
        %v1089 = vmul.f32 %v983, %v1080
        %v1090 = vmul.f32 %v987, %v1080
        %v1091 = vmul.f32 %v991, %v1080
        %v1092 = vmul.f32 %v995, %v1080
        %v1093 = vmul.f32 %v999, %v1080
        %v1094 = vmul.f32 %v1003, %v1080
        %v1095 = vmul.f32 %v1007, %v1080
        %v1096 = vmul.f32 %v1011, %v1080
        %v1097 = vmul.f32 %v1015, %v1080
        %v1098 = vmul.f32 %v1019, %v1080
        %v1099 = vmul.f32 %v1023, %v1080
        %v1100 = vmul.f32 %v1027, %v1080
        %v1101 = vmul.f32 %v1031, %v1080
        %v1102 = vmul.f32 %v1035, %v1080
        %v1103 = vmul.f32 %v1039, %v1080
        %v1104 = vmul.f32 %v1043, %v1080
        %v1105 = vmul.f32 %v1047, %v1080
        %v1106 = vmul.f32 %v1051, %v1080
        %v1107 = vmul.f32 %v1055, %v1080
        %v1108 = vmul.f32 %v1059, %v1080
        %v1109 = vmul.f32 %v1063, %v1080
        %v1110 = vmul.f32 %v1067, %v1080
        %v1111 = vmul.f32 %v1071, %v1080
        %v1112 = vmul.f32 %v1075, %v1080
        %v1113 = vadd.f32 %v916, %v1081
        %v1114 = vadd.f32 %v917, %v1082
        %v1115 = vadd.f32 %v918, %v1083
        %v1116 = vadd.f32 %v919, %v1084
        %v1117 = vadd.f32 %v920, %v1085
        %v1118 = vadd.f32 %v921, %v1086
        %v1119 = vadd.f32 %v922, %v1087
        %v1120 = vadd.f32 %v923, %v1088
        %v1121 = vadd.f32 %v924, %v1089
        %v1122 = vadd.f32 %v925, %v1090
        %v1123 = vadd.f32 %v926, %v1091
        %v1124 = vadd.f32 %v927, %v1092
        %v1125 = vadd.f32 %v928, %v1093
        %v1126 = vadd.f32 %v929, %v1094
        %v1127 = vadd.f32 %v930, %v1095
        %v1128 = vadd.f32 %v931, %v1096
        %v1129 = vadd.f32 %v932, %v1097
        %v1130 = vadd.f32 %v933, %v1098
        %v1131 = vadd.f32 %v934, %v1099
        %v1132 = vadd.f32 %v935, %v1100
        %v1133 = vadd.f32 %v936, %v1101
        %v1134 = vadd.f32 %v937, %v1102
        %v1135 = vadd.f32 %v938, %v1103
        %v1136 = vadd.f32 %v939, %v1104
        %v1137 = vadd.f32 %v940, %v1105
        %v1138 = vadd.f32 %v941, %v1106
        %v1139 = vadd.f32 %v942, %v1107
        %v1140 = vadd.f32 %v943, %v1108
        %v1141 = vadd.f32 %v944, %v1109
        %v1142 = vadd.f32 %v945, %v1110
        %v1143 = vadd.f32 %v946, %v1111
        %v1144 = vadd.f32 %v947, %v1112
        %v1145 = vld [vmem:[%s480] sm:$0xff]
        %v1146 = vld [vmem:[%s480 + $0x8] sm:$0xff]
        %v1147 = vld [vmem:[%s480 + $0x10] sm:$0xff]
        %v1148 = vld [vmem:[%s480 + $0x18] sm:$0xff]
        %v1149 = vld [vmem:[%s480 + $0x20] sm:$0xff]
        %v1150 = vld [vmem:[%s480 + $0x28] sm:$0xff]
        %v1151 = vld [vmem:[%s480 + $0x30] sm:$0xff]
        %v1152 = vld [vmem:[%s480 + $0x38] sm:$0xff]
        %v1153 = vld [vmem:[%s480 + $0x40] sm:$0xff]
        %v1154 = vld [vmem:[%s480 + $0x48] sm:$0xff]
        %v1155 = vld [vmem:[%s480 + $0x50] sm:$0xff]
        %v1156 = vld [vmem:[%s480 + $0x58] sm:$0xff]
        %v1157 = vld [vmem:[%s480 + $0x60] sm:$0xff]
        %v1158 = vld [vmem:[%s480 + $0x68] sm:$0xff]
        %v1159 = vld [vmem:[%s480 + $0x70] sm:$0xff]
        %v1160 = vld [vmem:[%s480 + $0x78] sm:$0xff]
        %v1161 = vld [vmem:[%s480 + $0x80] sm:$0xff]
        %v1162 = vld [vmem:[%s480 + $0x88] sm:$0xff]
        %v1163 = vld [vmem:[%s480 + $0x90] sm:$0xff]
        %v1164 = vld [vmem:[%s480 + $0x98] sm:$0xff]
        %v1165 = vld [vmem:[%s480 + $0xa0] sm:$0xff]
        %v1166 = vld [vmem:[%s480 + $0xa8] sm:$0xff]
        %v1167 = vld [vmem:[%s480 + $0xb0] sm:$0xff]
        %v1168 = vld [vmem:[%s480 + $0xb8] sm:$0xff]
        %v1169 = vld [vmem:[%s480 + $0xc0] sm:$0xff]
        %v1170 = vld [vmem:[%s480 + $0xc8] sm:$0xff]
        %v1171 = vld [vmem:[%s480 + $0xd0] sm:$0xff]
        %v1172 = vld [vmem:[%s480 + $0xd8] sm:$0xff]
        %v1173 = vld [vmem:[%s480 + $0xe0] sm:$0xff]
        %v1174 = vld [vmem:[%s480 + $0xe8] sm:$0xff]
        %v1175 = vld [vmem:[%s480 + $0xf0] sm:$0xff]
        %v1176 = vld [vmem:[%s480 + $0xf8] sm:$0xff]
        %v1177 = vld [vmem:[#allocation3] sm:$0xff]
        %v1178 = vld [vmem:[#allocation3 + $0x8] sm:$0xff]
        %v1179 = vld [vmem:[#allocation3 + $0x10] sm:$0xff]
        %v1180 = vld [vmem:[#allocation3 + $0x18] sm:$0xff]
        %v1181 = vld [vmem:[#allocation3 + $0x20] sm:$0xff]
        %v1182 = vld [vmem:[#allocation3 + $0x28] sm:$0xff]
        %v1183 = vld [vmem:[#allocation3 + $0x30] sm:$0xff]
        %v1184 = vld [vmem:[#allocation3 + $0x38] sm:$0xff]
        %v1185 = vld [vmem:[#allocation3 + $0x40] sm:$0xff]
        %v1186 = vld [vmem:[#allocation3 + $0x48] sm:$0xff]
        %v1187 = vld [vmem:[#allocation3 + $0x50] sm:$0xff]
        %v1188 = vld [vmem:[#allocation3 + $0x58] sm:$0xff]
        %v1189 = vld [vmem:[#allocation3 + $0x60] sm:$0xff]
        %v1190 = vld [vmem:[#allocation3 + $0x68] sm:$0xff]
        %v1191 = vld [vmem:[#allocation3 + $0x70] sm:$0xff]
        %v1192 = vld [vmem:[#allocation3 + $0x78] sm:$0xff]
        %v1193 = vld [vmem:[#allocation3 + $0x80] sm:$0xff]
        %v1194 = vld [vmem:[#allocation3 + $0x88] sm:$0xff]
        %v1195 = vld [vmem:[#allocation3 + $0x90] sm:$0xff]
        %v1196 = vld [vmem:[#allocation3 + $0x98] sm:$0xff]
        %v1197 = vld [vmem:[#allocation3 + $0xa0] sm:$0xff]
        %v1198 = vld [vmem:[#allocation3 + $0xa8] sm:$0xff]
        %v1199 = vld [vmem:[#allocation3 + $0xb0] sm:$0xff]
        %v1200 = vld [vmem:[#allocation3 + $0xb8] sm:$0xff]
        %v1201 = vld [vmem:[#allocation3 + $0xc0] sm:$0xff]
        %v1202 = vld [vmem:[#allocation3 + $0xc8] sm:$0xff]
        %v1203 = vld [vmem:[#allocation3 + $0xd0] sm:$0xff]
        %v1204 = vld [vmem:[#allocation3 + $0xd8] sm:$0xff]
        %v1205 = vld [vmem:[#allocation3 + $0xe0] sm:$0xff]
        %v1206 = vld [vmem:[#allocation3 + $0xe8] sm:$0xff]
        %v1207 = vld [vmem:[#allocation3 + $0xf0] sm:$0xff]
        %v1208 = vld [vmem:[#allocation3 + $0xf8] sm:$0xff]
        %v1209 = vld [vmem:[#allocation3 + $0x100] sm:$0xff]
        %v1210 = vld [vmem:[#allocation3 + $0x108] sm:$0xff]
        %v1211 = vld [vmem:[#allocation3 + $0x110] sm:$0xff]
        %v1212 = vld [vmem:[#allocation3 + $0x118] sm:$0xff]
        %v1213 = vld [vmem:[#allocation3 + $0x120] sm:$0xff]
        %v1214 = vld [vmem:[#allocation3 + $0x128] sm:$0xff]
        %v1215 = vld [vmem:[#allocation3 + $0x130] sm:$0xff]
        %v1216 = vld [vmem:[#allocation3 + $0x138] sm:$0xff]
        %v1217 = vld [vmem:[#allocation3 + $0x140] sm:$0xff]
        %v1218 = vld [vmem:[#allocation3 + $0x148] sm:$0xff]
        %v1219 = vld [vmem:[#allocation3 + $0x150] sm:$0xff]
        %v1220 = vld [vmem:[#allocation3 + $0x158] sm:$0xff]
        %v1221 = vld [vmem:[#allocation3 + $0x160] sm:$0xff]
        %v1222 = vld [vmem:[#allocation3 + $0x168] sm:$0xff]
        %v1223 = vld [vmem:[#allocation3 + $0x170] sm:$0xff]
        %v1224 = vld [vmem:[#allocation3 + $0x178] sm:$0xff]
        %v1225 = vld [vmem:[%s5] sm:$0x7]
        %v1227 = vlaneseq
        %v1228 = vshrl.u32 %v1227, 7
        %v1229 = vsub.s32 0, %v1228
        %v1230 = vrot.slane %v1225, %v1229
        %v1231 = vlaneseq
        %v1232 = vshrl.u32 %v1231, 7
        %v1233 = vsub.s32 1, %v1232
        %v1234 = vrot.slane %v1225, %v1233
        %v1235 = vlaneseq
        %v1236 = vshrl.u32 %v1235, 7
        %v1237 = vsub.s32 2, %v1236
        %v1238 = vrot.slane %v1225, %v1237
        %1242 = vmatprep.subr.mxu0 %v1223
        %1243 = vmatpush1.msra.mxu0 %v1222
        %1244 = vmatprep.subr.mxu0 %v1220
        %1245 = vmatpush1.msra.mxu0 %v1219
        %1246 = vmatprep.subr.mxu0 %v1217
        %1247 = vmatpush1.msra.mxu0 %v1216
        %1248 = vmatprep.subr.mxu0 %v1214
        %1249 = vmatpush1.msra.mxu0 %v1213
        %1250 = vmatprep.subr.mxu0 %v1211
        %1251 = vmatpush1.msra.mxu0 %v1210
        %1252 = vmatprep.subr.mxu0 %v1208
        %1253 = vmatpush1.msra.mxu0 %v1207
        %1254 = vmatprep.subr.mxu0 %v1205
        %1255 = vmatpush1.msra.mxu0 %v1204
        %1256 = vmatprep.subr.mxu0 %v1202
        %1257 = vmatpush1.msra.mxu0 %v1201
        %1258 = vmatprep.subr.mxu0 %v1199
        %1259 = vmatpush1.msra.mxu0 %v1198
        %1260 = vmatprep.subr.mxu0 %v1196
        %1261 = vmatpush1.msra.mxu0 %v1195
        %1262 = vmatprep.subr.mxu0 %v1193
        %1263 = vmatpush1.msra.mxu0 %v1192
        %1264 = vmatprep.subr.mxu0 %v1190
        %1265 = vmatpush1.msra.mxu0 %v1189
        %1266 = vmatprep.subr.mxu0 %v1187
        %1267 = vmatpush1.msra.mxu0 %v1186
        %1268 = vmatprep.subr.mxu0 %v1184
        %1269 = vmatpush1.msra.mxu0 %v1183
        %1270 = vmatprep.subr.mxu0 %v1181
        %1271 = vmatpush1.msra.mxu0 %v1180
        %1272 = vmatprep.subr.mxu0 %v1178
        %1273 = vmatpush1.msra.mxu0 %v1177
        %1274 = vmatprep.subr.mxu0 0.0
        %1275 = vmatpush2.msra.mxu0 0.0
        %1276 = vmatprep.subr.mxu0 0.0
        %1277 = vmatpush2.msra.mxu0 0.0
        %1278 = vmatprep.subr.mxu0 0.0
        %1279 = vmatpush2.msra.mxu0 0.0
        %1280 = vmatprep.subr.mxu0 0.0
        %1281 = vmatpush2.msra.mxu0 0.0
        %1282 = vmatprep.subr.mxu0 0.0
        %1283 = vmatpush2.msra.mxu0 0.0
        %1284 = vmatprep.subr.mxu0 0.0
        %1285 = vmatpush2.msra.mxu0 0.0
        %1286 = vmatprep.subr.mxu0 0.0
        %1287 = vmatpush2.msra.mxu0 0.0
        %1288 = vmatprep.subr.mxu0 0.0
        %1289 = vmatpush2.msra.mxu0 0.0
        %1290 = vmatprep.subr.mxu0 0.0
        %1291 = vmatpush2.msra.mxu0 0.0
        %1292 = vmatprep.subr.mxu0 0.0
        %1293 = vmatpush2.msra.mxu0 0.0
        %1294 = vmatprep.subr.mxu0 0.0
        %1295 = vmatpush2.msra.mxu0 0.0
        %1296 = vmatprep.subr.mxu0 0.0
        %1297 = vmatpush2.msra.mxu0 0.0
        %1298 = vmatprep.subr.mxu0 0.0
        %1299 = vmatpush2.msra.mxu0 0.0
        %1300 = vmatprep.subr.mxu0 0.0
        %1301 = vmatpush2.msra.mxu0 0.0
        %1302 = vmatprep.subr.mxu0 0.0
        %1303 = vmatpush2.msra.mxu0 0.0
        %1304 = vmatprep.subr.mxu0 0.0
        %1305 = vmatpush2.msra.mxu0 0.0
        %1306 = vmatprep.mubr.f32.mxu0 0.0
        %1307 = vmatmul.mubr.f32.gmra.mxu0 %v1145
        %v1308 = vpop.f32.mrf.mxu0
        %v1309 = vadd.f32 %v1230, %v1308
        %v1310 = vpop.f32.mrf.mxu0
        %v1311 = vadd.f32 %v1234, %v1310
        %1312 = vmatprep.mubr.f32.mxu0 0.0
        %1313 = vmatmul.mubr.f32.gmra.mxu0 %v1146
        %v1314 = vpop.f32.mrf.mxu0
        %v1315 = vadd.f32 %v1230, %v1314
        %v1316 = vpop.f32.mrf.mxu0
        %v1317 = vadd.f32 %v1234, %v1316
        %1318 = vmatprep.mubr.f32.mxu0 0.0
        %1319 = vmatmul.mubr.f32.gmra.mxu0 %v1147
        %v1320 = vpop.f32.mrf.mxu0
        %v1321 = vadd.f32 %v1230, %v1320
        %v1322 = vpop.f32.mrf.mxu0
        %v1323 = vadd.f32 %v1234, %v1322
        %1324 = vmatprep.mubr.f32.mxu0 0.0
        %1325 = vmatmul.mubr.f32.gmra.mxu0 %v1148
        %v1326 = vpop.f32.mrf.mxu0
        %v1327 = vadd.f32 %v1230, %v1326
        %v1328 = vpop.f32.mrf.mxu0
        %v1329 = vadd.f32 %v1234, %v1328
        %1330 = vmatprep.mubr.f32.mxu0 0.0
        %1331 = vmatmul.mubr.f32.gmra.mxu0 %v1149
        %v1332 = vpop.f32.mrf.mxu0
        %v1333 = vadd.f32 %v1230, %v1332
        %v1334 = vpop.f32.mrf.mxu0
        %v1335 = vadd.f32 %v1234, %v1334
        %1336 = vmatprep.mubr.f32.mxu0 0.0
        %1337 = vmatmul.mubr.f32.gmra.mxu0 %v1150
        %v1338 = vpop.f32.mrf.mxu0
        %v1339 = vadd.f32 %v1230, %v1338
        %v1340 = vpop.f32.mrf.mxu0
        %v1341 = vadd.f32 %v1234, %v1340
        %1342 = vmatprep.mubr.f32.mxu0 0.0
        %1343 = vmatmul.mubr.f32.gmra.mxu0 %v1151
        %v1344 = vpop.f32.mrf.mxu0
        %v1345 = vadd.f32 %v1230, %v1344
        %v1346 = vpop.f32.mrf.mxu0
        %v1347 = vadd.f32 %v1234, %v1346
        %1348 = vmatprep.mubr.f32.mxu0 0.0
        %1349 = vmatmul.mubr.f32.gmra.mxu0 %v1152
        %v1350 = vpop.f32.mrf.mxu0
        %v1351 = vadd.f32 %v1230, %v1350
        %v1352 = vpop.f32.mrf.mxu0
        %v1353 = vadd.f32 %v1234, %v1352
        %1354 = vmatprep.mubr.f32.mxu0 0.0
        %1355 = vmatmul.mubr.f32.gmra.mxu0 %v1153
        %v1356 = vpop.f32.mrf.mxu0
        %v1357 = vadd.f32 %v1230, %v1356
        %v1358 = vpop.f32.mrf.mxu0
        %v1359 = vadd.f32 %v1234, %v1358
        %1360 = vmatprep.mubr.f32.mxu0 0.0
        %1361 = vmatmul.mubr.f32.gmra.mxu0 %v1154
        %v1362 = vpop.f32.mrf.mxu0
        %v1363 = vadd.f32 %v1230, %v1362
        %v1364 = vpop.f32.mrf.mxu0
        %v1365 = vadd.f32 %v1234, %v1364
        %1366 = vmatprep.mubr.f32.mxu0 0.0
        %1367 = vmatmul.mubr.f32.gmra.mxu0 %v1155
        %v1368 = vpop.f32.mrf.mxu0
        %v1369 = vadd.f32 %v1230, %v1368
        %v1370 = vpop.f32.mrf.mxu0
        %v1371 = vadd.f32 %v1234, %v1370
        %1372 = vmatprep.mubr.f32.mxu0 0.0
        %1373 = vmatmul.mubr.f32.gmra.mxu0 %v1156
        %v1374 = vpop.f32.mrf.mxu0
        %v1375 = vadd.f32 %v1230, %v1374
        %v1376 = vpop.f32.mrf.mxu0
        %v1377 = vadd.f32 %v1234, %v1376
        %1378 = vmatprep.mubr.f32.mxu0 0.0
        %1379 = vmatmul.mubr.f32.gmra.mxu0 %v1157
        %v1380 = vpop.f32.mrf.mxu0
        %v1381 = vadd.f32 %v1230, %v1380
        %v1382 = vpop.f32.mrf.mxu0
        %v1383 = vadd.f32 %v1234, %v1382
        %1384 = vmatprep.mubr.f32.mxu0 0.0
        %1385 = vmatmul.mubr.f32.gmra.mxu0 %v1158
        %v1386 = vpop.f32.mrf.mxu0
        %v1387 = vadd.f32 %v1230, %v1386
        %v1388 = vpop.f32.mrf.mxu0
        %v1389 = vadd.f32 %v1234, %v1388
        %1390 = vmatprep.mubr.f32.mxu0 0.0
        %1391 = vmatmul.mubr.f32.gmra.mxu0 %v1159
        %v1392 = vpop.f32.mrf.mxu0
        %v1393 = vadd.f32 %v1230, %v1392
        %v1394 = vpop.f32.mrf.mxu0
        %v1395 = vadd.f32 %v1234, %v1394
        %1396 = vmatprep.mubr.f32.mxu0 0.0
        %1397 = vmatmul.mubr.f32.gmra.mxu0 %v1160
        %v1398 = vpop.f32.mrf.mxu0
        %v1399 = vadd.f32 %v1230, %v1398
        %v1400 = vpop.f32.mrf.mxu0
        %v1401 = vadd.f32 %v1234, %v1400
        %1402 = vmatprep.mubr.f32.mxu0 0.0
        %1403 = vmatmul.mubr.f32.gmra.mxu0 %v1161
        %v1404 = vpop.f32.mrf.mxu0
        %v1405 = vadd.f32 %v1230, %v1404
        %v1406 = vpop.f32.mrf.mxu0
        %v1407 = vadd.f32 %v1234, %v1406
        %1408 = vmatprep.mubr.f32.mxu0 0.0
        %1409 = vmatmul.mubr.f32.gmra.mxu0 %v1162
        %v1410 = vpop.f32.mrf.mxu0
        %v1411 = vadd.f32 %v1230, %v1410
        %v1412 = vpop.f32.mrf.mxu0
        %v1413 = vadd.f32 %v1234, %v1412
        %1414 = vmatprep.mubr.f32.mxu0 0.0
        %1415 = vmatmul.mubr.f32.gmra.mxu0 %v1163
        %v1416 = vpop.f32.mrf.mxu0
        %v1417 = vadd.f32 %v1230, %v1416
        %v1418 = vpop.f32.mrf.mxu0
        %v1419 = vadd.f32 %v1234, %v1418
        %1420 = vmatprep.mubr.f32.mxu0 0.0
        %1421 = vmatmul.mubr.f32.gmra.mxu0 %v1164
        %v1422 = vpop.f32.mrf.mxu0
        %v1423 = vadd.f32 %v1230, %v1422
        %v1424 = vpop.f32.mrf.mxu0
        %v1425 = vadd.f32 %v1234, %v1424
        %1426 = vmatprep.mubr.f32.mxu0 0.0
        %1427 = vmatmul.mubr.f32.gmra.mxu0 %v1165
        %v1428 = vpop.f32.mrf.mxu0
        %v1429 = vadd.f32 %v1230, %v1428
        %v1430 = vpop.f32.mrf.mxu0
        %v1431 = vadd.f32 %v1234, %v1430
        %1432 = vmatprep.mubr.f32.mxu0 0.0
        %1433 = vmatmul.mubr.f32.gmra.mxu0 %v1166
        %v1434 = vpop.f32.mrf.mxu0
        %v1435 = vadd.f32 %v1230, %v1434
        %v1436 = vpop.f32.mrf.mxu0
        %v1437 = vadd.f32 %v1234, %v1436
        %1438 = vmatprep.mubr.f32.mxu0 0.0
        %1439 = vmatmul.mubr.f32.gmra.mxu0 %v1167
        %v1440 = vpop.f32.mrf.mxu0
        %v1441 = vadd.f32 %v1230, %v1440
        %v1442 = vpop.f32.mrf.mxu0
        %v1443 = vadd.f32 %v1234, %v1442
        %1444 = vmatprep.mubr.f32.mxu0 0.0
        %1445 = vmatmul.mubr.f32.gmra.mxu0 %v1168
        %v1446 = vpop.f32.mrf.mxu0
        %v1447 = vadd.f32 %v1230, %v1446
        %v1448 = vpop.f32.mrf.mxu0
        %v1449 = vadd.f32 %v1234, %v1448
        %1450 = vmatprep.mubr.f32.mxu0 0.0
        %1451 = vmatmul.mubr.f32.gmra.mxu0 %v1169
        %v1452 = vpop.f32.mrf.mxu0
        %v1453 = vadd.f32 %v1230, %v1452
        %v1454 = vpop.f32.mrf.mxu0
        %v1455 = vadd.f32 %v1234, %v1454
        %1456 = vmatprep.mubr.f32.mxu0 0.0
        %1457 = vmatmul.mubr.f32.gmra.mxu0 %v1170
        %v1458 = vpop.f32.mrf.mxu0
        %v1459 = vadd.f32 %v1230, %v1458
        %v1460 = vpop.f32.mrf.mxu0
        %v1461 = vadd.f32 %v1234, %v1460
        %1462 = vmatprep.mubr.f32.mxu0 0.0
        %1463 = vmatmul.mubr.f32.gmra.mxu0 %v1171
        %v1464 = vpop.f32.mrf.mxu0
        %v1465 = vadd.f32 %v1230, %v1464
        %v1466 = vpop.f32.mrf.mxu0
        %v1467 = vadd.f32 %v1234, %v1466
        %1468 = vmatprep.mubr.f32.mxu0 0.0
        %1469 = vmatmul.mubr.f32.gmra.mxu0 %v1172
        %v1470 = vpop.f32.mrf.mxu0
        %v1471 = vadd.f32 %v1230, %v1470
        %v1472 = vpop.f32.mrf.mxu0
        %v1473 = vadd.f32 %v1234, %v1472
        %1474 = vmatprep.mubr.f32.mxu0 0.0
        %1475 = vmatmul.mubr.f32.gmra.mxu0 %v1173
        %v1476 = vpop.f32.mrf.mxu0
        %v1477 = vadd.f32 %v1230, %v1476
        %v1478 = vpop.f32.mrf.mxu0
        %v1479 = vadd.f32 %v1234, %v1478
        %1480 = vmatprep.mubr.f32.mxu0 0.0
        %1481 = vmatmul.mubr.f32.gmra.mxu0 %v1174
        %v1482 = vpop.f32.mrf.mxu0
        %v1483 = vadd.f32 %v1230, %v1482
        %v1484 = vpop.f32.mrf.mxu0
        %v1485 = vadd.f32 %v1234, %v1484
        %1486 = vmatprep.mubr.f32.mxu0 0.0
        %1487 = vmatmul.mubr.f32.gmra.mxu0 %v1175
        %v1488 = vpop.f32.mrf.mxu0
        %v1489 = vadd.f32 %v1230, %v1488
        %v1490 = vpop.f32.mrf.mxu0
        %v1491 = vadd.f32 %v1234, %v1490
        %1492 = vmatprep.mubr.f32.mxu0 0.0
        %1493 = vmatmul.mubr.f32.gmra.mxu0 %v1176
        %v1494 = vpop.f32.mrf.mxu0
        %v1495 = vadd.f32 %v1230, %v1494
        %v1496 = vpop.f32.mrf.mxu0
        %v1497 = vadd.f32 %v1234, %v1496
        %1498 = vdwg.mxu0
        %1499 = vmatprep.subr.mxu0 0.0
        %1500 = vmatpush1.msra.mxu0 %v1224
        %1501 = vmatprep.subr.mxu0 0.0
        %1502 = vmatpush1.msra.mxu0 %v1221
        %1503 = vmatprep.subr.mxu0 0.0
        %1504 = vmatpush1.msra.mxu0 %v1218
        %1505 = vmatprep.subr.mxu0 0.0
        %1506 = vmatpush1.msra.mxu0 %v1215
        %1507 = vmatprep.subr.mxu0 0.0
        %1508 = vmatpush1.msra.mxu0 %v1212
        %1509 = vmatprep.subr.mxu0 0.0
        %1510 = vmatpush1.msra.mxu0 %v1209
        %1511 = vmatprep.subr.mxu0 0.0
        %1512 = vmatpush1.msra.mxu0 %v1206
        %1513 = vmatprep.subr.mxu0 0.0
        %1514 = vmatpush1.msra.mxu0 %v1203
        %1515 = vmatprep.subr.mxu0 0.0
        %1516 = vmatpush1.msra.mxu0 %v1200
        %1517 = vmatprep.subr.mxu0 0.0
        %1518 = vmatpush1.msra.mxu0 %v1197
        %1519 = vmatprep.subr.mxu0 0.0
        %1520 = vmatpush1.msra.mxu0 %v1194
        %1521 = vmatprep.subr.mxu0 0.0
        %1522 = vmatpush1.msra.mxu0 %v1191
        %1523 = vmatprep.subr.mxu0 0.0
        %1524 = vmatpush1.msra.mxu0 %v1188
        %1525 = vmatprep.subr.mxu0 0.0
        %1526 = vmatpush1.msra.mxu0 %v1185
        %1527 = vmatprep.subr.mxu0 0.0
        %1528 = vmatpush1.msra.mxu0 %v1182
        %1529 = vmatprep.subr.mxu0 0.0
        %1530 = vmatpush1.msra.mxu0 %v1179
        %1531 = vmatprep.subr.mxu0 0.0
        %1532 = vmatpush2.msra.mxu0 0.0
        %1533 = vmatprep.subr.mxu0 0.0
        %1534 = vmatpush2.msra.mxu0 0.0
        %1535 = vmatprep.subr.mxu0 0.0
        %1536 = vmatpush2.msra.mxu0 0.0
        %1537 = vmatprep.subr.mxu0 0.0
        %1538 = vmatpush2.msra.mxu0 0.0
        %1539 = vmatprep.subr.mxu0 0.0
        %1540 = vmatpush2.msra.mxu0 0.0
        %1541 = vmatprep.subr.mxu0 0.0
        %1542 = vmatpush2.msra.mxu0 0.0
        %1543 = vmatprep.subr.mxu0 0.0
        %1544 = vmatpush2.msra.mxu0 0.0
        %1545 = vmatprep.subr.mxu0 0.0
        %1546 = vmatpush2.msra.mxu0 0.0
        %1547 = vmatprep.subr.mxu0 0.0
        %1548 = vmatpush2.msra.mxu0 0.0
        %1549 = vmatprep.subr.mxu0 0.0
        %1550 = vmatpush2.msra.mxu0 0.0
        %1551 = vmatprep.subr.mxu0 0.0
        %1552 = vmatpush2.msra.mxu0 0.0
        %1553 = vmatprep.subr.mxu0 0.0
        %1554 = vmatpush2.msra.mxu0 0.0
        %1555 = vmatprep.subr.mxu0 0.0
        %1556 = vmatpush2.msra.mxu0 0.0
        %1557 = vmatprep.subr.mxu0 0.0
        %1558 = vmatpush2.msra.mxu0 0.0
        %1559 = vmatprep.subr.mxu0 0.0
        %1560 = vmatpush2.msra.mxu0 0.0
        %1561 = vmatprep.subr.mxu0 0.0
        %1562 = vmatpush2.msra.mxu0 0.0
        %1563 = vmatprep.mubr.f32.mxu0 0.0
        %1564 = vmatmul.mubr.f32.gmra.mxu0 %v1145
        %v1565 = vpop.f32.mrf.mxu0
        %v1566 = vadd.f32 %v1238, %v1565
        %v1567 = vpop.f32.mrf.mxu0
        %1568 = vmatprep.mubr.f32.mxu0 0.0
        %1569 = vmatmul.mubr.f32.gmra.mxu0 %v1146
        %v1570 = vpop.f32.mrf.mxu0
        %v1571 = vadd.f32 %v1238, %v1570
        %v1572 = vpop.f32.mrf.mxu0
        %1573 = vmatprep.mubr.f32.mxu0 0.0
        %1574 = vmatmul.mubr.f32.gmra.mxu0 %v1147
        %v1575 = vpop.f32.mrf.mxu0
        %v1576 = vadd.f32 %v1238, %v1575
        %v1577 = vpop.f32.mrf.mxu0
        %1578 = vmatprep.mubr.f32.mxu0 0.0
        %1579 = vmatmul.mubr.f32.gmra.mxu0 %v1148
        %v1580 = vpop.f32.mrf.mxu0
        %v1581 = vadd.f32 %v1238, %v1580
        %v1582 = vpop.f32.mrf.mxu0
        %1583 = vmatprep.mubr.f32.mxu0 0.0
        %1584 = vmatmul.mubr.f32.gmra.mxu0 %v1149
        %v1585 = vpop.f32.mrf.mxu0
        %v1586 = vadd.f32 %v1238, %v1585
        %v1587 = vpop.f32.mrf.mxu0
        %1588 = vmatprep.mubr.f32.mxu0 0.0
        %1589 = vmatmul.mubr.f32.gmra.mxu0 %v1150
        %v1590 = vpop.f32.mrf.mxu0
        %v1591 = vadd.f32 %v1238, %v1590
        %v1592 = vpop.f32.mrf.mxu0
        %1593 = vmatprep.mubr.f32.mxu0 0.0
        %1594 = vmatmul.mubr.f32.gmra.mxu0 %v1151
        %v1595 = vpop.f32.mrf.mxu0
        %v1596 = vadd.f32 %v1238, %v1595
        %v1597 = vpop.f32.mrf.mxu0
        %1598 = vmatprep.mubr.f32.mxu0 0.0
        %1599 = vmatmul.mubr.f32.gmra.mxu0 %v1152
        %v1600 = vpop.f32.mrf.mxu0
        %v1601 = vadd.f32 %v1238, %v1600
        %v1602 = vpop.f32.mrf.mxu0
        %1603 = vmatprep.mubr.f32.mxu0 0.0
        %1604 = vmatmul.mubr.f32.gmra.mxu0 %v1153
        %v1605 = vpop.f32.mrf.mxu0
        %v1606 = vadd.f32 %v1238, %v1605
        %v1607 = vpop.f32.mrf.mxu0
        %1608 = vmatprep.mubr.f32.mxu0 0.0
        %1609 = vmatmul.mubr.f32.gmra.mxu0 %v1154
        %v1610 = vpop.f32.mrf.mxu0
        %v1611 = vadd.f32 %v1238, %v1610
        %v1612 = vpop.f32.mrf.mxu0
        %1613 = vmatprep.mubr.f32.mxu0 0.0
        %1614 = vmatmul.mubr.f32.gmra.mxu0 %v1155
        %v1615 = vpop.f32.mrf.mxu0
        %v1616 = vadd.f32 %v1238, %v1615
        %v1617 = vpop.f32.mrf.mxu0
        %1618 = vmatprep.mubr.f32.mxu0 0.0
        %1619 = vmatmul.mubr.f32.gmra.mxu0 %v1156
        %v1620 = vpop.f32.mrf.mxu0
        %v1621 = vadd.f32 %v1238, %v1620
        %v1622 = vpop.f32.mrf.mxu0
        %1623 = vmatprep.mubr.f32.mxu0 0.0
        %1624 = vmatmul.mubr.f32.gmra.mxu0 %v1157
        %v1625 = vpop.f32.mrf.mxu0
        %v1626 = vadd.f32 %v1238, %v1625
        %v1627 = vpop.f32.mrf.mxu0
        %1628 = vmatprep.mubr.f32.mxu0 0.0
        %1629 = vmatmul.mubr.f32.gmra.mxu0 %v1158
        %v1630 = vpop.f32.mrf.mxu0
        %v1631 = vadd.f32 %v1238, %v1630
        %v1632 = vpop.f32.mrf.mxu0
        %1633 = vmatprep.mubr.f32.mxu0 0.0
        %1634 = vmatmul.mubr.f32.gmra.mxu0 %v1159
        %v1635 = vpop.f32.mrf.mxu0
        %v1636 = vadd.f32 %v1238, %v1635
        %v1637 = vpop.f32.mrf.mxu0
        %1638 = vmatprep.mubr.f32.mxu0 0.0
        %1639 = vmatmul.mubr.f32.gmra.mxu0 %v1160
        %v1640 = vpop.f32.mrf.mxu0
        %v1641 = vadd.f32 %v1238, %v1640
        %v1642 = vpop.f32.mrf.mxu0
        %1643 = vmatprep.mubr.f32.mxu0 0.0
        %1644 = vmatmul.mubr.f32.gmra.mxu0 %v1161
        %v1645 = vpop.f32.mrf.mxu0
        %v1646 = vadd.f32 %v1238, %v1645
        %v1647 = vpop.f32.mrf.mxu0
        %1648 = vmatprep.mubr.f32.mxu0 0.0
        %1649 = vmatmul.mubr.f32.gmra.mxu0 %v1162
        %v1650 = vpop.f32.mrf.mxu0
        %v1651 = vadd.f32 %v1238, %v1650
        %v1652 = vpop.f32.mrf.mxu0
        %1653 = vmatprep.mubr.f32.mxu0 0.0
        %1654 = vmatmul.mubr.f32.gmra.mxu0 %v1163
        %v1655 = vpop.f32.mrf.mxu0
        %v1656 = vadd.f32 %v1238, %v1655
        %v1657 = vpop.f32.mrf.mxu0
        %1658 = vmatprep.mubr.f32.mxu0 0.0
        %1659 = vmatmul.mubr.f32.gmra.mxu0 %v1164
        %v1660 = vpop.f32.mrf.mxu0
        %v1661 = vadd.f32 %v1238, %v1660
        %v1662 = vpop.f32.mrf.mxu0
        %1663 = vmatprep.mubr.f32.mxu0 0.0
        %1664 = vmatmul.mubr.f32.gmra.mxu0 %v1165
        %v1665 = vpop.f32.mrf.mxu0
        %v1666 = vadd.f32 %v1238, %v1665
        %v1667 = vpop.f32.mrf.mxu0
        %1668 = vmatprep.mubr.f32.mxu0 0.0
        %1669 = vmatmul.mubr.f32.gmra.mxu0 %v1166
        %v1670 = vpop.f32.mrf.mxu0
        %v1671 = vadd.f32 %v1238, %v1670
        %v1672 = vpop.f32.mrf.mxu0
        %1673 = vmatprep.mubr.f32.mxu0 0.0
        %1674 = vmatmul.mubr.f32.gmra.mxu0 %v1167
        %v1675 = vpop.f32.mrf.mxu0
        %v1676 = vadd.f32 %v1238, %v1675
        %v1677 = vpop.f32.mrf.mxu0
        %1678 = vmatprep.mubr.f32.mxu0 0.0
        %1679 = vmatmul.mubr.f32.gmra.mxu0 %v1168
        %v1680 = vpop.f32.mrf.mxu0
        %v1681 = vadd.f32 %v1238, %v1680
        %v1682 = vpop.f32.mrf.mxu0
        %1683 = vmatprep.mubr.f32.mxu0 0.0
        %1684 = vmatmul.mubr.f32.gmra.mxu0 %v1169
        %v1685 = vpop.f32.mrf.mxu0
        %v1686 = vadd.f32 %v1238, %v1685
        %v1687 = vpop.f32.mrf.mxu0
        %1688 = vmatprep.mubr.f32.mxu0 0.0
        %1689 = vmatmul.mubr.f32.gmra.mxu0 %v1170
        %v1690 = vpop.f32.mrf.mxu0
        %v1691 = vadd.f32 %v1238, %v1690
        %v1692 = vpop.f32.mrf.mxu0
        %1693 = vmatprep.mubr.f32.mxu0 0.0
        %1694 = vmatmul.mubr.f32.gmra.mxu0 %v1171
        %v1695 = vpop.f32.mrf.mxu0
        %v1696 = vadd.f32 %v1238, %v1695
        %v1697 = vpop.f32.mrf.mxu0
        %1698 = vmatprep.mubr.f32.mxu0 0.0
        %1699 = vmatmul.mubr.f32.gmra.mxu0 %v1172
        %v1700 = vpop.f32.mrf.mxu0
        %v1701 = vadd.f32 %v1238, %v1700
        %v1702 = vpop.f32.mrf.mxu0
        %1703 = vmatprep.mubr.f32.mxu0 0.0
        %1704 = vmatmul.mubr.f32.gmra.mxu0 %v1173
        %v1705 = vpop.f32.mrf.mxu0
        %v1706 = vadd.f32 %v1238, %v1705
        %v1707 = vpop.f32.mrf.mxu0
        %1708 = vmatprep.mubr.f32.mxu0 0.0
        %1709 = vmatmul.mubr.f32.gmra.mxu0 %v1174
        %v1710 = vpop.f32.mrf.mxu0
        %v1711 = vadd.f32 %v1238, %v1710
        %v1712 = vpop.f32.mrf.mxu0
        %1713 = vmatprep.mubr.f32.mxu0 0.0
        %1714 = vmatmul.mubr.f32.gmra.mxu0 %v1175
        %v1715 = vpop.f32.mrf.mxu0
        %v1716 = vadd.f32 %v1238, %v1715
        %v1717 = vpop.f32.mrf.mxu0
        %1718 = vmatprep.mubr.f32.mxu0 0.0
        %1719 = vmatmul.mubr.f32.gmra.mxu0 %v1176
        %v1720 = vpop.f32.mrf.mxu0
        %v1721 = vadd.f32 %v1238, %v1720
        %v1722 = vpop.f32.mrf.mxu0
        %1723 = vdwg.mxu0
        %v1724 = vadd.f32 %v1113, %v1309
        %v1725 = vadd.f32 %v1114, %v1315
        %v1726 = vadd.f32 %v1115, %v1321
        %v1727 = vadd.f32 %v1116, %v1327
        %v1728 = vadd.f32 %v1117, %v1333
        %v1729 = vadd.f32 %v1118, %v1339
        %v1730 = vadd.f32 %v1119, %v1345
        %v1731 = vadd.f32 %v1120, %v1351
        %v1732 = vadd.f32 %v1121, %v1357
        %v1733 = vadd.f32 %v1122, %v1363
        %v1734 = vadd.f32 %v1123, %v1369
        %v1735 = vadd.f32 %v1124, %v1375
        %v1736 = vadd.f32 %v1125, %v1381
        %v1737 = vadd.f32 %v1126, %v1387
        %v1738 = vadd.f32 %v1127, %v1393
        %v1739 = vadd.f32 %v1128, %v1399
        %v1740 = vadd.f32 %v1129, %v1405
        %v1741 = vadd.f32 %v1130, %v1411
        %v1742 = vadd.f32 %v1131, %v1417
        %v1743 = vadd.f32 %v1132, %v1423
        %v1744 = vadd.f32 %v1133, %v1429
        %v1745 = vadd.f32 %v1134, %v1435
        %v1746 = vadd.f32 %v1135, %v1441
        %v1747 = vadd.f32 %v1136, %v1447
        %v1748 = vadd.f32 %v1137, %v1453
        %v1749 = vadd.f32 %v1138, %v1459
        %v1750 = vadd.f32 %v1139, %v1465
        %v1751 = vadd.f32 %v1140, %v1471
        %v1752 = vadd.f32 %v1141, %v1477
        %v1753 = vadd.f32 %v1142, %v1483
        %v1754 = vadd.f32 %v1143, %v1489
        %v1755 = vadd.f32 %v1144, %v1495
        %v1756 = vmax.f32 %v1724, 0.0
        %v1757 = vmax.f32 %v1725, 0.0
        %v1758 = vmax.f32 %v1726, 0.0
        %v1759 = vmax.f32 %v1727, 0.0
        %v1760 = vmax.f32 %v1728, 0.0
        %v1761 = vmax.f32 %v1729, 0.0
        %v1762 = vmax.f32 %v1730, 0.0
        %v1763 = vmax.f32 %v1731, 0.0
        %v1764 = vmax.f32 %v1732, 0.0
        %v1765 = vmax.f32 %v1733, 0.0
        %v1766 = vmax.f32 %v1734, 0.0
        %v1767 = vmax.f32 %v1735, 0.0
        %v1768 = vmax.f32 %v1736, 0.0
        %v1769 = vmax.f32 %v1737, 0.0
        %v1770 = vmax.f32 %v1738, 0.0
        %v1771 = vmax.f32 %v1739, 0.0
        %v1772 = vmax.f32 %v1740, 0.0
        %v1773 = vmax.f32 %v1741, 0.0
        %v1774 = vmax.f32 %v1742, 0.0
        %v1775 = vmax.f32 %v1743, 0.0
        %v1776 = vmax.f32 %v1744, 0.0
        %v1777 = vmax.f32 %v1745, 0.0
        %v1778 = vmax.f32 %v1746, 0.0
        %v1779 = vmax.f32 %v1747, 0.0
        %v1780 = vmax.f32 %v1748, 0.0
        %v1781 = vmax.f32 %v1749, 0.0
        %v1782 = vmax.f32 %v1750, 0.0
        %v1783 = vmax.f32 %v1751, 0.0
        %v1784 = vmax.f32 %v1752, 0.0
        %v1785 = vmax.f32 %v1753, 0.0
        %v1786 = vmax.f32 %v1754, 0.0
        %v1787 = vmax.f32 %v1755, 0.0
        %v1788 = vld [vmem:[#allocation6] sm:$0xff]
        %v1789 = vld [vmem:[#allocation6 + $0x8] sm:$0xff]
        %v1790 = vld [vmem:[#allocation6 + $0x10] sm:$0xff]
        %v1791 = vld [vmem:[#allocation6 + $0x18] sm:$0xff]
        %v1792 = vld [vmem:[#allocation6 + $0x20] sm:$0xff]
        %v1793 = vld [vmem:[#allocation6 + $0x28] sm:$0xff]
        %v1794 = vld [vmem:[#allocation6 + $0x30] sm:$0xff]
        %v1795 = vld [vmem:[#allocation6 + $0x38] sm:$0xff]
        %v1796 = vld [vmem:[#allocation6 + $0x40] sm:$0xff]
        %v1797 = vld [vmem:[#allocation6 + $0x48] sm:$0xff]
        %v1798 = vld [vmem:[#allocation6 + $0x50] sm:$0xff]
        %v1799 = vld [vmem:[#allocation6 + $0x58] sm:$0xff]
        %v1800 = vld [vmem:[#allocation6 + $0x60] sm:$0xff]
        %v1801 = vld [vmem:[#allocation6 + $0x68] sm:$0xff]
        %v1802 = vld [vmem:[#allocation6 + $0x70] sm:$0xff]
        %v1803 = vld [vmem:[#allocation6 + $0x78] sm:$0xff]
        %v1804 = vld [vmem:[%s7] sm:$0x1]
        %v1806 = vlaneseq
        %v1807 = vshrl.u32 %v1806, 7
        %v1808 = vsub.s32 0, %v1807
        %v1809 = vrot.slane %v1804, %v1808
        %1811 = vmatprep.subr.mxu0 0.0
        %1812 = vmatpush1.msra.mxu0 %v1803
        %1813 = vmatprep.subr.mxu0 0.0
        %1814 = vmatpush1.msra.mxu0 %v1802
        %1815 = vmatprep.subr.mxu0 0.0
        %1816 = vmatpush1.msra.mxu0 %v1801
        %1817 = vmatprep.subr.mxu0 0.0
        %1818 = vmatpush1.msra.mxu0 %v1800
        %1819 = vmatprep.subr.mxu0 0.0
        %1820 = vmatpush1.msra.mxu0 %v1799
        %1821 = vmatprep.subr.mxu0 0.0
        %1822 = vmatpush1.msra.mxu0 %v1798
        %1823 = vmatprep.subr.mxu0 0.0
        %1824 = vmatpush1.msra.mxu0 %v1797
        %1825 = vmatprep.subr.mxu0 0.0
        %1826 = vmatpush1.msra.mxu0 %v1796
        %1827 = vmatprep.subr.mxu0 0.0
        %1828 = vmatpush1.msra.mxu0 %v1795
        %1829 = vmatprep.subr.mxu0 0.0
        %1830 = vmatpush1.msra.mxu0 %v1794
        %1831 = vmatprep.subr.mxu0 0.0
        %1832 = vmatpush1.msra.mxu0 %v1793
        %1833 = vmatprep.subr.mxu0 0.0
        %1834 = vmatpush1.msra.mxu0 %v1792
        %1835 = vmatprep.subr.mxu0 0.0
        %1836 = vmatpush1.msra.mxu0 %v1791
        %1837 = vmatprep.subr.mxu0 0.0
        %1838 = vmatpush1.msra.mxu0 %v1790
        %1839 = vmatprep.subr.mxu0 0.0
        %1840 = vmatpush1.msra.mxu0 %v1789
        %1841 = vmatprep.subr.mxu0 0.0
        %1842 = vmatpush1.msra.mxu0 %v1788
        %1843 = vmatprep.subr.mxu0 0.0
        %1844 = vmatpush2.msra.mxu0 0.0
        %1845 = vmatprep.subr.mxu0 0.0
        %1846 = vmatpush2.msra.mxu0 0.0
        %1847 = vmatprep.subr.mxu0 0.0
        %1848 = vmatpush2.msra.mxu0 0.0
        %1849 = vmatprep.subr.mxu0 0.0
        %1850 = vmatpush2.msra.mxu0 0.0
        %1851 = vmatprep.subr.mxu0 0.0
        %1852 = vmatpush2.msra.mxu0 0.0
        %1853 = vmatprep.subr.mxu0 0.0
        %1854 = vmatpush2.msra.mxu0 0.0
        %1855 = vmatprep.subr.mxu0 0.0
        %1856 = vmatpush2.msra.mxu0 0.0
        %1857 = vmatprep.subr.mxu0 0.0
        %1858 = vmatpush2.msra.mxu0 0.0
        %1859 = vmatprep.subr.mxu0 0.0
        %1860 = vmatpush2.msra.mxu0 0.0
        %1861 = vmatprep.subr.mxu0 0.0
        %1862 = vmatpush2.msra.mxu0 0.0
        %1863 = vmatprep.subr.mxu0 0.0
        %1864 = vmatpush2.msra.mxu0 0.0
        %1865 = vmatprep.subr.mxu0 0.0
        %1866 = vmatpush2.msra.mxu0 0.0
        %1867 = vmatprep.subr.mxu0 0.0
        %1868 = vmatpush2.msra.mxu0 0.0
        %1869 = vmatprep.subr.mxu0 0.0
        %1870 = vmatpush2.msra.mxu0 0.0
        %1871 = vmatprep.subr.mxu0 0.0
        %1872 = vmatpush2.msra.mxu0 0.0
        %1873 = vmatprep.subr.mxu0 0.0
        %1874 = vmatpush2.msra.mxu0 0.0
        %1875 = vmatprep.mubr.f32.mxu0 0.0
        %1876 = vmatmul.mubr.f32.gmra.mxu0 %v1756
        %v1877 = vpop.f32.mrf.mxu0
        %v1878 = vadd.f32 %v1809, %v1877
        %v1879 = vpop.f32.mrf.mxu0
        %1880 = vmatprep.mubr.f32.mxu0 0.0
        %1881 = vmatmul.mubr.f32.gmra.mxu0 %v1757
        %v1882 = vpop.f32.mrf.mxu0
        %v1883 = vadd.f32 %v1809, %v1882
        %v1884 = vpop.f32.mrf.mxu0
        %1885 = vmatprep.mubr.f32.mxu0 0.0
        %1886 = vmatmul.mubr.f32.gmra.mxu0 %v1758
        %v1887 = vpop.f32.mrf.mxu0
        %v1888 = vadd.f32 %v1809, %v1887
        %v1889 = vpop.f32.mrf.mxu0
        %1890 = vmatprep.mubr.f32.mxu0 0.0
        %1891 = vmatmul.mubr.f32.gmra.mxu0 %v1759
        %v1892 = vpop.f32.mrf.mxu0
        %v1893 = vadd.f32 %v1809, %v1892
        %v1894 = vpop.f32.mrf.mxu0
        %1895 = vmatprep.mubr.f32.mxu0 0.0
        %1896 = vmatmul.mubr.f32.gmra.mxu0 %v1760
        %v1897 = vpop.f32.mrf.mxu0
        %v1898 = vadd.f32 %v1809, %v1897
        %v1899 = vpop.f32.mrf.mxu0
        %1900 = vmatprep.mubr.f32.mxu0 0.0
        %1901 = vmatmul.mubr.f32.gmra.mxu0 %v1761
        %v1902 = vpop.f32.mrf.mxu0
        %v1903 = vadd.f32 %v1809, %v1902
        %v1904 = vpop.f32.mrf.mxu0
        %1905 = vmatprep.mubr.f32.mxu0 0.0
        %1906 = vmatmul.mubr.f32.gmra.mxu0 %v1762
        %v1907 = vpop.f32.mrf.mxu0
        %v1908 = vadd.f32 %v1809, %v1907
        %v1909 = vpop.f32.mrf.mxu0
        %1910 = vmatprep.mubr.f32.mxu0 0.0
        %1911 = vmatmul.mubr.f32.gmra.mxu0 %v1763
        %v1912 = vpop.f32.mrf.mxu0
        %v1913 = vadd.f32 %v1809, %v1912
        %v1914 = vpop.f32.mrf.mxu0
        %1915 = vmatprep.mubr.f32.mxu0 0.0
        %1916 = vmatmul.mubr.f32.gmra.mxu0 %v1764
        %v1917 = vpop.f32.mrf.mxu0
        %v1918 = vadd.f32 %v1809, %v1917
        %v1919 = vpop.f32.mrf.mxu0
        %1920 = vmatprep.mubr.f32.mxu0 0.0
        %1921 = vmatmul.mubr.f32.gmra.mxu0 %v1765
        %v1922 = vpop.f32.mrf.mxu0
        %v1923 = vadd.f32 %v1809, %v1922
        %v1924 = vpop.f32.mrf.mxu0
        %1925 = vmatprep.mubr.f32.mxu0 0.0
        %1926 = vmatmul.mubr.f32.gmra.mxu0 %v1766
        %v1927 = vpop.f32.mrf.mxu0
        %v1928 = vadd.f32 %v1809, %v1927
        %v1929 = vpop.f32.mrf.mxu0
        %1930 = vmatprep.mubr.f32.mxu0 0.0
        %1931 = vmatmul.mubr.f32.gmra.mxu0 %v1767
        %v1932 = vpop.f32.mrf.mxu0
        %v1933 = vadd.f32 %v1809, %v1932
        %v1934 = vpop.f32.mrf.mxu0
        %1935 = vmatprep.mubr.f32.mxu0 0.0
        %1936 = vmatmul.mubr.f32.gmra.mxu0 %v1768
        %v1937 = vpop.f32.mrf.mxu0
        %v1938 = vadd.f32 %v1809, %v1937
        %v1939 = vpop.f32.mrf.mxu0
        %1940 = vmatprep.mubr.f32.mxu0 0.0
        %1941 = vmatmul.mubr.f32.gmra.mxu0 %v1769
        %v1942 = vpop.f32.mrf.mxu0
        %v1943 = vadd.f32 %v1809, %v1942
        %v1944 = vpop.f32.mrf.mxu0
        %1945 = vmatprep.mubr.f32.mxu0 0.0
        %1946 = vmatmul.mubr.f32.gmra.mxu0 %v1770
        %v1947 = vpop.f32.mrf.mxu0
        %v1948 = vadd.f32 %v1809, %v1947
        %v1949 = vpop.f32.mrf.mxu0
        %1950 = vmatprep.mubr.f32.mxu0 0.0
        %1951 = vmatmul.mubr.f32.gmra.mxu0 %v1771
        %v1952 = vpop.f32.mrf.mxu0
        %v1953 = vadd.f32 %v1809, %v1952
        %v1954 = vpop.f32.mrf.mxu0
        %1955 = vmatprep.mubr.f32.mxu0 0.0
        %1956 = vmatmul.mubr.f32.gmra.mxu0 %v1772
        %v1957 = vpop.f32.mrf.mxu0
        %v1958 = vadd.f32 %v1809, %v1957
        %v1959 = vpop.f32.mrf.mxu0
        %1960 = vmatprep.mubr.f32.mxu0 0.0
        %1961 = vmatmul.mubr.f32.gmra.mxu0 %v1773
        %v1962 = vpop.f32.mrf.mxu0
        %v1963 = vadd.f32 %v1809, %v1962
        %v1964 = vpop.f32.mrf.mxu0
        %1965 = vmatprep.mubr.f32.mxu0 0.0
        %1966 = vmatmul.mubr.f32.gmra.mxu0 %v1774
        %v1967 = vpop.f32.mrf.mxu0
        %v1968 = vadd.f32 %v1809, %v1967
        %v1969 = vpop.f32.mrf.mxu0
        %1970 = vmatprep.mubr.f32.mxu0 0.0
        %1971 = vmatmul.mubr.f32.gmra.mxu0 %v1775
        %v1972 = vpop.f32.mrf.mxu0
        %v1973 = vadd.f32 %v1809, %v1972
        %v1974 = vpop.f32.mrf.mxu0
        %1975 = vmatprep.mubr.f32.mxu0 0.0
        %1976 = vmatmul.mubr.f32.gmra.mxu0 %v1776
        %v1977 = vpop.f32.mrf.mxu0
        %v1978 = vadd.f32 %v1809, %v1977
        %v1979 = vpop.f32.mrf.mxu0
        %1980 = vmatprep.mubr.f32.mxu0 0.0
        %1981 = vmatmul.mubr.f32.gmra.mxu0 %v1777
        %v1982 = vpop.f32.mrf.mxu0
        %v1983 = vadd.f32 %v1809, %v1982
        %v1984 = vpop.f32.mrf.mxu0
        %1985 = vmatprep.mubr.f32.mxu0 0.0
        %1986 = vmatmul.mubr.f32.gmra.mxu0 %v1778
        %v1987 = vpop.f32.mrf.mxu0
        %v1988 = vadd.f32 %v1809, %v1987
        %v1989 = vpop.f32.mrf.mxu0
        %1990 = vmatprep.mubr.f32.mxu0 0.0
        %1991 = vmatmul.mubr.f32.gmra.mxu0 %v1779
        %v1992 = vpop.f32.mrf.mxu0
        %v1993 = vadd.f32 %v1809, %v1992
        %v1994 = vpop.f32.mrf.mxu0
        %1995 = vmatprep.mubr.f32.mxu0 0.0
        %1996 = vmatmul.mubr.f32.gmra.mxu0 %v1780
        %v1997 = vpop.f32.mrf.mxu0
        %v1998 = vadd.f32 %v1809, %v1997
        %v1999 = vpop.f32.mrf.mxu0
        %2000 = vmatprep.mubr.f32.mxu0 0.0
        %2001 = vmatmul.mubr.f32.gmra.mxu0 %v1781
        %v2002 = vpop.f32.mrf.mxu0
        %v2003 = vadd.f32 %v1809, %v2002
        %v2004 = vpop.f32.mrf.mxu0
        %2005 = vmatprep.mubr.f32.mxu0 0.0
        %2006 = vmatmul.mubr.f32.gmra.mxu0 %v1782
        %v2007 = vpop.f32.mrf.mxu0
        %v2008 = vadd.f32 %v1809, %v2007
        %v2009 = vpop.f32.mrf.mxu0
        %2010 = vmatprep.mubr.f32.mxu0 0.0
        %2011 = vmatmul.mubr.f32.gmra.mxu0 %v1783
        %v2012 = vpop.f32.mrf.mxu0
        %v2013 = vadd.f32 %v1809, %v2012
        %v2014 = vpop.f32.mrf.mxu0
        %2015 = vmatprep.mubr.f32.mxu0 0.0
        %2016 = vmatmul.mubr.f32.gmra.mxu0 %v1784
        %v2017 = vpop.f32.mrf.mxu0
        %v2018 = vadd.f32 %v1809, %v2017
        %v2019 = vpop.f32.mrf.mxu0
        %2020 = vmatprep.mubr.f32.mxu0 0.0
        %2021 = vmatmul.mubr.f32.gmra.mxu0 %v1785
        %v2022 = vpop.f32.mrf.mxu0
        %v2023 = vadd.f32 %v1809, %v2022
        %v2024 = vpop.f32.mrf.mxu0
        %2025 = vmatprep.mubr.f32.mxu0 0.0
        %2026 = vmatmul.mubr.f32.gmra.mxu0 %v1786
        %v2027 = vpop.f32.mrf.mxu0
        %v2028 = vadd.f32 %v1809, %v2027
        %v2029 = vpop.f32.mrf.mxu0
        %2030 = vmatprep.mubr.f32.mxu0 0.0
        %2031 = vmatmul.mubr.f32.gmra.mxu0 %v1787
        %v2032 = vpop.f32.mrf.mxu0
        %v2033 = vadd.f32 %v1809, %v2032
        %v2034 = vpop.f32.mrf.mxu0
        %2035 = vdwg.mxu0
        %v2036 = vmax.f32 %v1878, 0.0
        %v2037 = vmax.f32 %v1883, 0.0
        %v2038 = vmax.f32 %v1888, 0.0
        %v2039 = vmax.f32 %v1893, 0.0
        %v2040 = vmax.f32 %v1898, 0.0
        %v2041 = vmax.f32 %v1903, 0.0
        %v2042 = vmax.f32 %v1908, 0.0
        %v2043 = vmax.f32 %v1913, 0.0
        %v2044 = vmax.f32 %v1918, 0.0
        %v2045 = vmax.f32 %v1923, 0.0
        %v2046 = vmax.f32 %v1928, 0.0
        %v2047 = vmax.f32 %v1933, 0.0
        %v2048 = vmax.f32 %v1938, 0.0
        %v2049 = vmax.f32 %v1943, 0.0
        %v2050 = vmax.f32 %v1948, 0.0
        %v2051 = vmax.f32 %v1953, 0.0
        %v2052 = vmax.f32 %v1958, 0.0
        %v2053 = vmax.f32 %v1963, 0.0
        %v2054 = vmax.f32 %v1968, 0.0
        %v2055 = vmax.f32 %v1973, 0.0
        %v2056 = vmax.f32 %v1978, 0.0
        %v2057 = vmax.f32 %v1983, 0.0
        %v2058 = vmax.f32 %v1988, 0.0
        %v2059 = vmax.f32 %v1993, 0.0
        %v2060 = vmax.f32 %v1998, 0.0
        %v2061 = vmax.f32 %v2003, 0.0
        %v2062 = vmax.f32 %v2008, 0.0
        %v2063 = vmax.f32 %v2013, 0.0
        %v2064 = vmax.f32 %v2018, 0.0
        %v2065 = vmax.f32 %v2023, 0.0
        %v2066 = vmax.f32 %v2028, 0.0
        %v2067 = vmax.f32 %v2033, 0.0
        %v2068 = vld [vmem:[#allocation8] sm:$0xff]
        %v2069 = vld [vmem:[#allocation8 + $0x8] sm:$0xff]
        %v2070 = vld [vmem:[#allocation8 + $0x10] sm:$0xff]
        %v2071 = vld [vmem:[#allocation8 + $0x18] sm:$0xff]
        %v2072 = vld [vmem:[#allocation8 + $0x20] sm:$0xff]
        %v2073 = vld [vmem:[#allocation8 + $0x28] sm:$0xff]
        %v2074 = vld [vmem:[#allocation8 + $0x30] sm:$0xff]
        %v2075 = vld [vmem:[#allocation8 + $0x38] sm:$0xff]
        %v2076 = vld [vmem:[#allocation8 + $0x40] sm:$0xff]
        %v2077 = vld [vmem:[#allocation8 + $0x48] sm:$0xff]
        %v2078 = vld [vmem:[#allocation8 + $0x50] sm:$0xff]
        %v2079 = vld [vmem:[#allocation8 + $0x58] sm:$0xff]
        %v2080 = vld [vmem:[#allocation8 + $0x60] sm:$0xff]
        %v2081 = vld [vmem:[#allocation8 + $0x68] sm:$0xff]
        %v2082 = vld [vmem:[#allocation8 + $0x70] sm:$0xff]
        %v2083 = vld [vmem:[#allocation8 + $0x78] sm:$0xff]
        %v2084 = vld [vmem:[%s9] sm:$0x1]
        %v2086 = vlaneseq
        %v2087 = vshrl.u32 %v2086, 7
        %v2088 = vsub.s32 0, %v2087
        %v2089 = vrot.slane %v2084, %v2088
        %2091 = vmatprep.subr.mxu0 0.0
        %2092 = vmatpush1.msra.mxu0 %v2083
        %2093 = vmatprep.subr.mxu0 0.0
        %2094 = vmatpush1.msra.mxu0 %v2082
        %2095 = vmatprep.subr.mxu0 0.0
        %2096 = vmatpush1.msra.mxu0 %v2081
        %2097 = vmatprep.subr.mxu0 0.0
        %2098 = vmatpush1.msra.mxu0 %v2080
        %2099 = vmatprep.subr.mxu0 0.0
        %2100 = vmatpush1.msra.mxu0 %v2079
        %2101 = vmatprep.subr.mxu0 0.0
        %2102 = vmatpush1.msra.mxu0 %v2078
        %2103 = vmatprep.subr.mxu0 0.0
        %2104 = vmatpush1.msra.mxu0 %v2077
        %2105 = vmatprep.subr.mxu0 0.0
        %2106 = vmatpush1.msra.mxu0 %v2076
        %2107 = vmatprep.subr.mxu0 0.0
        %2108 = vmatpush1.msra.mxu0 %v2075
        %2109 = vmatprep.subr.mxu0 0.0
        %2110 = vmatpush1.msra.mxu0 %v2074
        %2111 = vmatprep.subr.mxu0 0.0
        %2112 = vmatpush1.msra.mxu0 %v2073
        %2113 = vmatprep.subr.mxu0 0.0
        %2114 = vmatpush1.msra.mxu0 %v2072
        %2115 = vmatprep.subr.mxu0 0.0
        %2116 = vmatpush1.msra.mxu0 %v2071
        %2117 = vmatprep.subr.mxu0 0.0
        %2118 = vmatpush1.msra.mxu0 %v2070
        %2119 = vmatprep.subr.mxu0 0.0
        %2120 = vmatpush1.msra.mxu0 %v2069
        %2121 = vmatprep.subr.mxu0 0.0
        %2122 = vmatpush1.msra.mxu0 %v2068
        %2123 = vmatprep.subr.mxu0 0.0
        %2124 = vmatpush2.msra.mxu0 0.0
        %2125 = vmatprep.subr.mxu0 0.0
        %2126 = vmatpush2.msra.mxu0 0.0
        %2127 = vmatprep.subr.mxu0 0.0
        %2128 = vmatpush2.msra.mxu0 0.0
        %2129 = vmatprep.subr.mxu0 0.0
        %2130 = vmatpush2.msra.mxu0 0.0
        %2131 = vmatprep.subr.mxu0 0.0
        %2132 = vmatpush2.msra.mxu0 0.0
        %2133 = vmatprep.subr.mxu0 0.0
        %2134 = vmatpush2.msra.mxu0 0.0
        %2135 = vmatprep.subr.mxu0 0.0
        %2136 = vmatpush2.msra.mxu0 0.0
        %2137 = vmatprep.subr.mxu0 0.0
        %2138 = vmatpush2.msra.mxu0 0.0
        %2139 = vmatprep.subr.mxu0 0.0
        %2140 = vmatpush2.msra.mxu0 0.0
        %2141 = vmatprep.subr.mxu0 0.0
        %2142 = vmatpush2.msra.mxu0 0.0
        %2143 = vmatprep.subr.mxu0 0.0
        %2144 = vmatpush2.msra.mxu0 0.0
        %2145 = vmatprep.subr.mxu0 0.0
        %2146 = vmatpush2.msra.mxu0 0.0
        %2147 = vmatprep.subr.mxu0 0.0
        %2148 = vmatpush2.msra.mxu0 0.0
        %2149 = vmatprep.subr.mxu0 0.0
        %2150 = vmatpush2.msra.mxu0 0.0
        %2151 = vmatprep.subr.mxu0 0.0
        %2152 = vmatpush2.msra.mxu0 0.0
        %2153 = vmatprep.subr.mxu0 0.0
        %2154 = vmatpush2.msra.mxu0 0.0
        %2155 = vmatprep.mubr.f32.mxu0 0.0
        %2156 = vmatmul.mubr.f32.gmra.mxu0 %v2036
        %v2157 = vpop.f32.mrf.mxu0
        %v2158 = vadd.f32 %v2089, %v2157
        %v2159 = vpop.f32.mrf.mxu0
        %2160 = vmatprep.mubr.f32.mxu0 0.0
        %2161 = vmatmul.mubr.f32.gmra.mxu0 %v2037
        %v2162 = vpop.f32.mrf.mxu0
        %v2163 = vadd.f32 %v2089, %v2162
        %v2164 = vpop.f32.mrf.mxu0
        %2165 = vmatprep.mubr.f32.mxu0 0.0
        %2166 = vmatmul.mubr.f32.gmra.mxu0 %v2038
        %v2167 = vpop.f32.mrf.mxu0
        %v2168 = vadd.f32 %v2089, %v2167
        %v2169 = vpop.f32.mrf.mxu0
        %2170 = vmatprep.mubr.f32.mxu0 0.0
        %2171 = vmatmul.mubr.f32.gmra.mxu0 %v2039
        %v2172 = vpop.f32.mrf.mxu0
        %v2173 = vadd.f32 %v2089, %v2172
        %v2174 = vpop.f32.mrf.mxu0
        %2175 = vmatprep.mubr.f32.mxu0 0.0
        %2176 = vmatmul.mubr.f32.gmra.mxu0 %v2040
        %v2177 = vpop.f32.mrf.mxu0
        %v2178 = vadd.f32 %v2089, %v2177
        %v2179 = vpop.f32.mrf.mxu0
        %2180 = vmatprep.mubr.f32.mxu0 0.0
        %2181 = vmatmul.mubr.f32.gmra.mxu0 %v2041
        %v2182 = vpop.f32.mrf.mxu0
        %v2183 = vadd.f32 %v2089, %v2182
        %v2184 = vpop.f32.mrf.mxu0
        %2185 = vmatprep.mubr.f32.mxu0 0.0
        %2186 = vmatmul.mubr.f32.gmra.mxu0 %v2042
        %v2187 = vpop.f32.mrf.mxu0
        %v2188 = vadd.f32 %v2089, %v2187
        %v2189 = vpop.f32.mrf.mxu0
        %2190 = vmatprep.mubr.f32.mxu0 0.0
        %2191 = vmatmul.mubr.f32.gmra.mxu0 %v2043
        %v2192 = vpop.f32.mrf.mxu0
        %v2193 = vadd.f32 %v2089, %v2192
        %v2194 = vpop.f32.mrf.mxu0
        %2195 = vmatprep.mubr.f32.mxu0 0.0
        %2196 = vmatmul.mubr.f32.gmra.mxu0 %v2044
        %v2197 = vpop.f32.mrf.mxu0
        %v2198 = vadd.f32 %v2089, %v2197
        %v2199 = vpop.f32.mrf.mxu0
        %2200 = vmatprep.mubr.f32.mxu0 0.0
        %2201 = vmatmul.mubr.f32.gmra.mxu0 %v2045
        %v2202 = vpop.f32.mrf.mxu0
        %v2203 = vadd.f32 %v2089, %v2202
        %v2204 = vpop.f32.mrf.mxu0
        %2205 = vmatprep.mubr.f32.mxu0 0.0
        %2206 = vmatmul.mubr.f32.gmra.mxu0 %v2046
        %v2207 = vpop.f32.mrf.mxu0
        %v2208 = vadd.f32 %v2089, %v2207
        %v2209 = vpop.f32.mrf.mxu0
        %2210 = vmatprep.mubr.f32.mxu0 0.0
        %2211 = vmatmul.mubr.f32.gmra.mxu0 %v2047
        %v2212 = vpop.f32.mrf.mxu0
        %v2213 = vadd.f32 %v2089, %v2212
        %v2214 = vpop.f32.mrf.mxu0
        %2215 = vmatprep.mubr.f32.mxu0 0.0
        %2216 = vmatmul.mubr.f32.gmra.mxu0 %v2048
        %v2217 = vpop.f32.mrf.mxu0
        %v2218 = vadd.f32 %v2089, %v2217
        %v2219 = vpop.f32.mrf.mxu0
        %2220 = vmatprep.mubr.f32.mxu0 0.0
        %2221 = vmatmul.mubr.f32.gmra.mxu0 %v2049
        %v2222 = vpop.f32.mrf.mxu0
        %v2223 = vadd.f32 %v2089, %v2222
        %v2224 = vpop.f32.mrf.mxu0
        %2225 = vmatprep.mubr.f32.mxu0 0.0
        %2226 = vmatmul.mubr.f32.gmra.mxu0 %v2050
        %v2227 = vpop.f32.mrf.mxu0
        %v2228 = vadd.f32 %v2089, %v2227
        %v2229 = vpop.f32.mrf.mxu0
        %2230 = vmatprep.mubr.f32.mxu0 0.0
        %2231 = vmatmul.mubr.f32.gmra.mxu0 %v2051
        %v2232 = vpop.f32.mrf.mxu0
        %v2233 = vadd.f32 %v2089, %v2232
        %v2234 = vpop.f32.mrf.mxu0
        %2235 = vmatprep.mubr.f32.mxu0 0.0
        %2236 = vmatmul.mubr.f32.gmra.mxu0 %v2052
        %v2237 = vpop.f32.mrf.mxu0
        %v2238 = vadd.f32 %v2089, %v2237
        %v2239 = vpop.f32.mrf.mxu0
        %2240 = vmatprep.mubr.f32.mxu0 0.0
        %2241 = vmatmul.mubr.f32.gmra.mxu0 %v2053
        %v2242 = vpop.f32.mrf.mxu0
        %v2243 = vadd.f32 %v2089, %v2242
        %v2244 = vpop.f32.mrf.mxu0
        %2245 = vmatprep.mubr.f32.mxu0 0.0
        %2246 = vmatmul.mubr.f32.gmra.mxu0 %v2054
        %v2247 = vpop.f32.mrf.mxu0
        %v2248 = vadd.f32 %v2089, %v2247
        %v2249 = vpop.f32.mrf.mxu0
        %2250 = vmatprep.mubr.f32.mxu0 0.0
        %2251 = vmatmul.mubr.f32.gmra.mxu0 %v2055
        %v2252 = vpop.f32.mrf.mxu0
        %v2253 = vadd.f32 %v2089, %v2252
        %v2254 = vpop.f32.mrf.mxu0
        %2255 = vmatprep.mubr.f32.mxu0 0.0
        %2256 = vmatmul.mubr.f32.gmra.mxu0 %v2056
        %v2257 = vpop.f32.mrf.mxu0
        %v2258 = vadd.f32 %v2089, %v2257
        %v2259 = vpop.f32.mrf.mxu0
        %2260 = vmatprep.mubr.f32.mxu0 0.0
        %2261 = vmatmul.mubr.f32.gmra.mxu0 %v2057
        %v2262 = vpop.f32.mrf.mxu0
        %v2263 = vadd.f32 %v2089, %v2262
        %v2264 = vpop.f32.mrf.mxu0
        %2265 = vmatprep.mubr.f32.mxu0 0.0
        %2266 = vmatmul.mubr.f32.gmra.mxu0 %v2058
        %v2267 = vpop.f32.mrf.mxu0
        %v2268 = vadd.f32 %v2089, %v2267
        %v2269 = vpop.f32.mrf.mxu0
        %2270 = vmatprep.mubr.f32.mxu0 0.0
        %2271 = vmatmul.mubr.f32.gmra.mxu0 %v2059
        %v2272 = vpop.f32.mrf.mxu0
        %v2273 = vadd.f32 %v2089, %v2272
        %v2274 = vpop.f32.mrf.mxu0
        %2275 = vmatprep.mubr.f32.mxu0 0.0
        %2276 = vmatmul.mubr.f32.gmra.mxu0 %v2060
        %v2277 = vpop.f32.mrf.mxu0
        %v2278 = vadd.f32 %v2089, %v2277
        %v2279 = vpop.f32.mrf.mxu0
        %2280 = vmatprep.mubr.f32.mxu0 0.0
        %2281 = vmatmul.mubr.f32.gmra.mxu0 %v2061
        %v2282 = vpop.f32.mrf.mxu0
        %v2283 = vadd.f32 %v2089, %v2282
        %v2284 = vpop.f32.mrf.mxu0
        %2285 = vmatprep.mubr.f32.mxu0 0.0
        %2286 = vmatmul.mubr.f32.gmra.mxu0 %v2062
        %v2287 = vpop.f32.mrf.mxu0
        %v2288 = vadd.f32 %v2089, %v2287
        %v2289 = vpop.f32.mrf.mxu0
        %2290 = vmatprep.mubr.f32.mxu0 0.0
        %2291 = vmatmul.mubr.f32.gmra.mxu0 %v2063
        %v2292 = vpop.f32.mrf.mxu0
        %v2293 = vadd.f32 %v2089, %v2292
        %v2294 = vpop.f32.mrf.mxu0
        %2295 = vmatprep.mubr.f32.mxu0 0.0
        %2296 = vmatmul.mubr.f32.gmra.mxu0 %v2064
        %v2297 = vpop.f32.mrf.mxu0
        %v2298 = vadd.f32 %v2089, %v2297
        %v2299 = vpop.f32.mrf.mxu0
        %2300 = vmatprep.mubr.f32.mxu0 0.0
        %2301 = vmatmul.mubr.f32.gmra.mxu0 %v2065
        %v2302 = vpop.f32.mrf.mxu0
        %v2303 = vadd.f32 %v2089, %v2302
        %v2304 = vpop.f32.mrf.mxu0
        %2305 = vmatprep.mubr.f32.mxu0 0.0
        %2306 = vmatmul.mubr.f32.gmra.mxu0 %v2066
        %v2307 = vpop.f32.mrf.mxu0
        %v2308 = vadd.f32 %v2089, %v2307
        %v2309 = vpop.f32.mrf.mxu0
        %2310 = vmatprep.mubr.f32.mxu0 0.0
        %2311 = vmatmul.mubr.f32.gmra.mxu0 %v2067
        %v2312 = vpop.f32.mrf.mxu0
        %v2313 = vadd.f32 %v2089, %v2312
        %v2314 = vpop.f32.mrf.mxu0
        %2315 = vdwg.mxu0
        %v2316 = vadd.f32 %v1724, %v2158
        %v2317 = vadd.f32 %v1725, %v2163
        %v2318 = vadd.f32 %v1726, %v2168
        %v2319 = vadd.f32 %v1727, %v2173
        %v2320 = vadd.f32 %v1728, %v2178
        %v2321 = vadd.f32 %v1729, %v2183
        %v2322 = vadd.f32 %v1730, %v2188
        %v2323 = vadd.f32 %v1731, %v2193
        %v2324 = vadd.f32 %v1732, %v2198
        %v2325 = vadd.f32 %v1733, %v2203
        %v2326 = vadd.f32 %v1734, %v2208
        %v2327 = vadd.f32 %v1735, %v2213
        %v2328 = vadd.f32 %v1736, %v2218
        %v2329 = vadd.f32 %v1737, %v2223
        %v2330 = vadd.f32 %v1738, %v2228
        %v2331 = vadd.f32 %v1739, %v2233
        %v2332 = vadd.f32 %v1740, %v2238
        %v2333 = vadd.f32 %v1741, %v2243
        %v2334 = vadd.f32 %v1742, %v2248
        %v2335 = vadd.f32 %v1743, %v2253
        %v2336 = vadd.f32 %v1744, %v2258
        %v2337 = vadd.f32 %v1745, %v2263
        %v2338 = vadd.f32 %v1746, %v2268
        %v2339 = vadd.f32 %v1747, %v2273
        %v2340 = vadd.f32 %v1748, %v2278
        %v2341 = vadd.f32 %v1749, %v2283
        %v2342 = vadd.f32 %v1750, %v2288
        %v2343 = vadd.f32 %v1751, %v2293
        %v2344 = vadd.f32 %v1752, %v2298
        %v2345 = vadd.f32 %v1753, %v2303
        %v2346 = vadd.f32 %v1754, %v2308
        %v2347 = vadd.f32 %v1755, %v2313
        %v2348 = vadd.f32 %v2316, %v1311
        %v2349 = vadd.f32 %v2317, %v1317
        %v2350 = vadd.f32 %v2318, %v1323
        %v2351 = vadd.f32 %v2319, %v1329
        %v2352 = vadd.f32 %v2320, %v1335
        %v2353 = vadd.f32 %v2321, %v1341
        %v2354 = vadd.f32 %v2322, %v1347
        %v2355 = vadd.f32 %v2323, %v1353
        %v2356 = vadd.f32 %v2324, %v1359
        %v2357 = vadd.f32 %v2325, %v1365
        %v2358 = vadd.f32 %v2326, %v1371
        %v2359 = vadd.f32 %v2327, %v1377
        %v2360 = vadd.f32 %v2328, %v1383
        %v2361 = vadd.f32 %v2329, %v1389
        %v2362 = vadd.f32 %v2330, %v1395
        %v2363 = vadd.f32 %v2331, %v1401
        %v2364 = vadd.f32 %v2332, %v1407
        %v2365 = vadd.f32 %v2333, %v1413
        %v2366 = vadd.f32 %v2334, %v1419
        %v2367 = vadd.f32 %v2335, %v1425
        %v2368 = vadd.f32 %v2336, %v1431
        %v2369 = vadd.f32 %v2337, %v1437
        %v2370 = vadd.f32 %v2338, %v1443
        %v2371 = vadd.f32 %v2339, %v1449
        %v2372 = vadd.f32 %v2340, %v1455
        %v2373 = vadd.f32 %v2341, %v1461
        %v2374 = vadd.f32 %v2342, %v1467
        %v2375 = vadd.f32 %v2343, %v1473
        %v2376 = vadd.f32 %v2344, %v1479
        %v2377 = vadd.f32 %v2345, %v1485
        %v2378 = vadd.f32 %v2346, %v1491
        %v2379 = vadd.f32 %v2347, %v1497
        %v2380 = vmax.f32 %v2348, 0.0
        %v2381 = vmax.f32 %v2349, 0.0
        %v2382 = vmax.f32 %v2350, 0.0
        %v2383 = vmax.f32 %v2351, 0.0
        %v2384 = vmax.f32 %v2352, 0.0
        %v2385 = vmax.f32 %v2353, 0.0
        %v2386 = vmax.f32 %v2354, 0.0
        %v2387 = vmax.f32 %v2355, 0.0
        %v2388 = vmax.f32 %v2356, 0.0
        %v2389 = vmax.f32 %v2357, 0.0
        %v2390 = vmax.f32 %v2358, 0.0
        %v2391 = vmax.f32 %v2359, 0.0
        %v2392 = vmax.f32 %v2360, 0.0
        %v2393 = vmax.f32 %v2361, 0.0
        %v2394 = vmax.f32 %v2362, 0.0
        %v2395 = vmax.f32 %v2363, 0.0
        %v2396 = vmax.f32 %v2364, 0.0
        %v2397 = vmax.f32 %v2365, 0.0
        %v2398 = vmax.f32 %v2366, 0.0
        %v2399 = vmax.f32 %v2367, 0.0
        %v2400 = vmax.f32 %v2368, 0.0
        %v2401 = vmax.f32 %v2369, 0.0
        %v2402 = vmax.f32 %v2370, 0.0
        %v2403 = vmax.f32 %v2371, 0.0
        %v2404 = vmax.f32 %v2372, 0.0
        %v2405 = vmax.f32 %v2373, 0.0
        %v2406 = vmax.f32 %v2374, 0.0
        %v2407 = vmax.f32 %v2375, 0.0
        %v2408 = vmax.f32 %v2376, 0.0
        %v2409 = vmax.f32 %v2377, 0.0
        %v2410 = vmax.f32 %v2378, 0.0
        %v2411 = vmax.f32 %v2379, 0.0
        %s2412 = scalar_lea.vmem [#allocation6], 128
        %v2413 = vld [vmem:[%s2412] sm:$0xff]
        %v2414 = vld [vmem:[%s2412 + $0x8] sm:$0xff]
        %v2415 = vld [vmem:[%s2412 + $0x10] sm:$0xff]
        %v2416 = vld [vmem:[%s2412 + $0x18] sm:$0xff]
        %v2417 = vld [vmem:[%s2412 + $0x20] sm:$0xff]
        %v2418 = vld [vmem:[%s2412 + $0x28] sm:$0xff]
        %v2419 = vld [vmem:[%s2412 + $0x30] sm:$0xff]
        %v2420 = vld [vmem:[%s2412 + $0x38] sm:$0xff]
        %v2421 = vld [vmem:[%s2412 + $0x40] sm:$0xff]
        %v2422 = vld [vmem:[%s2412 + $0x48] sm:$0xff]
        %v2423 = vld [vmem:[%s2412 + $0x50] sm:$0xff]
        %v2424 = vld [vmem:[%s2412 + $0x58] sm:$0xff]
        %v2425 = vld [vmem:[%s2412 + $0x60] sm:$0xff]
        %v2426 = vld [vmem:[%s2412 + $0x68] sm:$0xff]
        %v2427 = vld [vmem:[%s2412 + $0x70] sm:$0xff]
        %v2428 = vld [vmem:[%s2412 + $0x78] sm:$0xff]
        %s2429 = scalar_lea.vmem %s7, 1
        %v2430 = vld [vmem:[%s2429] sm:$0x1]
        %v2432 = vlaneseq
        %v2433 = vshrl.u32 %v2432, 7
        %v2434 = vsub.s32 0, %v2433
        %v2435 = vrot.slane %v2430, %v2434
        %2437 = vmatprep.subr.mxu0 0.0
        %2438 = vmatpush1.msra.mxu0 %v2428
        %2439 = vmatprep.subr.mxu0 0.0
        %2440 = vmatpush1.msra.mxu0 %v2427
        %2441 = vmatprep.subr.mxu0 0.0
        %2442 = vmatpush1.msra.mxu0 %v2426
        %2443 = vmatprep.subr.mxu0 0.0
        %2444 = vmatpush1.msra.mxu0 %v2425
        %2445 = vmatprep.subr.mxu0 0.0
        %2446 = vmatpush1.msra.mxu0 %v2424
        %2447 = vmatprep.subr.mxu0 0.0
        %2448 = vmatpush1.msra.mxu0 %v2423
        %2449 = vmatprep.subr.mxu0 0.0
        %2450 = vmatpush1.msra.mxu0 %v2422
        %2451 = vmatprep.subr.mxu0 0.0
        %2452 = vmatpush1.msra.mxu0 %v2421
        %2453 = vmatprep.subr.mxu0 0.0
        %2454 = vmatpush1.msra.mxu0 %v2420
        %2455 = vmatprep.subr.mxu0 0.0
        %2456 = vmatpush1.msra.mxu0 %v2419
        %2457 = vmatprep.subr.mxu0 0.0
        %2458 = vmatpush1.msra.mxu0 %v2418
        %2459 = vmatprep.subr.mxu0 0.0
        %2460 = vmatpush1.msra.mxu0 %v2417
        %2461 = vmatprep.subr.mxu0 0.0
        %2462 = vmatpush1.msra.mxu0 %v2416
        %2463 = vmatprep.subr.mxu0 0.0
        %2464 = vmatpush1.msra.mxu0 %v2415
        %2465 = vmatprep.subr.mxu0 0.0
        %2466 = vmatpush1.msra.mxu0 %v2414
        %2467 = vmatprep.subr.mxu0 0.0
        %2468 = vmatpush1.msra.mxu0 %v2413
        %2469 = vmatprep.subr.mxu0 0.0
        %2470 = vmatpush2.msra.mxu0 0.0
        %2471 = vmatprep.subr.mxu0 0.0
        %2472 = vmatpush2.msra.mxu0 0.0
        %2473 = vmatprep.subr.mxu0 0.0
        %2474 = vmatpush2.msra.mxu0 0.0
        %2475 = vmatprep.subr.mxu0 0.0
        %2476 = vmatpush2.msra.mxu0 0.0
        %2477 = vmatprep.subr.mxu0 0.0
        %2478 = vmatpush2.msra.mxu0 0.0
        %2479 = vmatprep.subr.mxu0 0.0
        %2480 = vmatpush2.msra.mxu0 0.0
        %2481 = vmatprep.subr.mxu0 0.0
        %2482 = vmatpush2.msra.mxu0 0.0
        %2483 = vmatprep.subr.mxu0 0.0
        %2484 = vmatpush2.msra.mxu0 0.0
        %2485 = vmatprep.subr.mxu0 0.0
        %2486 = vmatpush2.msra.mxu0 0.0
        %2487 = vmatprep.subr.mxu0 0.0
        %2488 = vmatpush2.msra.mxu0 0.0
        %2489 = vmatprep.subr.mxu0 0.0
        %2490 = vmatpush2.msra.mxu0 0.0
        %2491 = vmatprep.subr.mxu0 0.0
        %2492 = vmatpush2.msra.mxu0 0.0
        %2493 = vmatprep.subr.mxu0 0.0
        %2494 = vmatpush2.msra.mxu0 0.0
        %2495 = vmatprep.subr.mxu0 0.0
        %2496 = vmatpush2.msra.mxu0 0.0
        %2497 = vmatprep.subr.mxu0 0.0
        %2498 = vmatpush2.msra.mxu0 0.0
        %2499 = vmatprep.subr.mxu0 0.0
        %2500 = vmatpush2.msra.mxu0 0.0
        %2501 = vmatprep.mubr.f32.mxu0 0.0
        %2502 = vmatmul.mubr.f32.gmra.mxu0 %v2380
        %v2503 = vpop.f32.mrf.mxu0
        %v2504 = vadd.f32 %v2435, %v2503
        %v2505 = vpop.f32.mrf.mxu0
        %2506 = vmatprep.mubr.f32.mxu0 0.0
        %2507 = vmatmul.mubr.f32.gmra.mxu0 %v2381
        %v2508 = vpop.f32.mrf.mxu0
        %v2509 = vadd.f32 %v2435, %v2508
        %v2510 = vpop.f32.mrf.mxu0
        %2511 = vmatprep.mubr.f32.mxu0 0.0
        %2512 = vmatmul.mubr.f32.gmra.mxu0 %v2382
        %v2513 = vpop.f32.mrf.mxu0
        %v2514 = vadd.f32 %v2435, %v2513
        %v2515 = vpop.f32.mrf.mxu0
        %2516 = vmatprep.mubr.f32.mxu0 0.0
        %2517 = vmatmul.mubr.f32.gmra.mxu0 %v2383
        %v2518 = vpop.f32.mrf.mxu0
        %v2519 = vadd.f32 %v2435, %v2518
        %v2520 = vpop.f32.mrf.mxu0
        %2521 = vmatprep.mubr.f32.mxu0 0.0
        %2522 = vmatmul.mubr.f32.gmra.mxu0 %v2384
        %v2523 = vpop.f32.mrf.mxu0
        %v2524 = vadd.f32 %v2435, %v2523
        %v2525 = vpop.f32.mrf.mxu0
        %2526 = vmatprep.mubr.f32.mxu0 0.0
        %2527 = vmatmul.mubr.f32.gmra.mxu0 %v2385
        %v2528 = vpop.f32.mrf.mxu0
        %v2529 = vadd.f32 %v2435, %v2528
        %v2530 = vpop.f32.mrf.mxu0
        %2531 = vmatprep.mubr.f32.mxu0 0.0
        %2532 = vmatmul.mubr.f32.gmra.mxu0 %v2386
        %v2533 = vpop.f32.mrf.mxu0
        %v2534 = vadd.f32 %v2435, %v2533
        %v2535 = vpop.f32.mrf.mxu0
        %2536 = vmatprep.mubr.f32.mxu0 0.0
        %2537 = vmatmul.mubr.f32.gmra.mxu0 %v2387
        %v2538 = vpop.f32.mrf.mxu0
        %v2539 = vadd.f32 %v2435, %v2538
        %v2540 = vpop.f32.mrf.mxu0
        %2541 = vmatprep.mubr.f32.mxu0 0.0
        %2542 = vmatmul.mubr.f32.gmra.mxu0 %v2388
        %v2543 = vpop.f32.mrf.mxu0
        %v2544 = vadd.f32 %v2435, %v2543
        %v2545 = vpop.f32.mrf.mxu0
        %2546 = vmatprep.mubr.f32.mxu0 0.0
        %2547 = vmatmul.mubr.f32.gmra.mxu0 %v2389
        %v2548 = vpop.f32.mrf.mxu0
        %v2549 = vadd.f32 %v2435, %v2548
        %v2550 = vpop.f32.mrf.mxu0
        %2551 = vmatprep.mubr.f32.mxu0 0.0
        %2552 = vmatmul.mubr.f32.gmra.mxu0 %v2390
        %v2553 = vpop.f32.mrf.mxu0
        %v2554 = vadd.f32 %v2435, %v2553
        %v2555 = vpop.f32.mrf.mxu0
        %2556 = vmatprep.mubr.f32.mxu0 0.0
        %2557 = vmatmul.mubr.f32.gmra.mxu0 %v2391
        %v2558 = vpop.f32.mrf.mxu0
        %v2559 = vadd.f32 %v2435, %v2558
        %v2560 = vpop.f32.mrf.mxu0
        %2561 = vmatprep.mubr.f32.mxu0 0.0
        %2562 = vmatmul.mubr.f32.gmra.mxu0 %v2392
        %v2563 = vpop.f32.mrf.mxu0
        %v2564 = vadd.f32 %v2435, %v2563
        %v2565 = vpop.f32.mrf.mxu0
        %2566 = vmatprep.mubr.f32.mxu0 0.0
        %2567 = vmatmul.mubr.f32.gmra.mxu0 %v2393
        %v2568 = vpop.f32.mrf.mxu0
        %v2569 = vadd.f32 %v2435, %v2568
        %v2570 = vpop.f32.mrf.mxu0
        %2571 = vmatprep.mubr.f32.mxu0 0.0
        %2572 = vmatmul.mubr.f32.gmra.mxu0 %v2394
        %v2573 = vpop.f32.mrf.mxu0
        %v2574 = vadd.f32 %v2435, %v2573
        %v2575 = vpop.f32.mrf.mxu0
        %2576 = vmatprep.mubr.f32.mxu0 0.0
        %2577 = vmatmul.mubr.f32.gmra.mxu0 %v2395
        %v2578 = vpop.f32.mrf.mxu0
        %v2579 = vadd.f32 %v2435, %v2578
        %v2580 = vpop.f32.mrf.mxu0
        %2581 = vmatprep.mubr.f32.mxu0 0.0
        %2582 = vmatmul.mubr.f32.gmra.mxu0 %v2396
        %v2583 = vpop.f32.mrf.mxu0
        %v2584 = vadd.f32 %v2435, %v2583
        %v2585 = vpop.f32.mrf.mxu0
        %2586 = vmatprep.mubr.f32.mxu0 0.0
        %2587 = vmatmul.mubr.f32.gmra.mxu0 %v2397
        %v2588 = vpop.f32.mrf.mxu0
        %v2589 = vadd.f32 %v2435, %v2588
        %v2590 = vpop.f32.mrf.mxu0
        %2591 = vmatprep.mubr.f32.mxu0 0.0
        %2592 = vmatmul.mubr.f32.gmra.mxu0 %v2398
        %v2593 = vpop.f32.mrf.mxu0
        %v2594 = vadd.f32 %v2435, %v2593
        %v2595 = vpop.f32.mrf.mxu0
        %2596 = vmatprep.mubr.f32.mxu0 0.0
        %2597 = vmatmul.mubr.f32.gmra.mxu0 %v2399
        %v2598 = vpop.f32.mrf.mxu0
        %v2599 = vadd.f32 %v2435, %v2598
        %v2600 = vpop.f32.mrf.mxu0
        %2601 = vmatprep.mubr.f32.mxu0 0.0
        %2602 = vmatmul.mubr.f32.gmra.mxu0 %v2400
        %v2603 = vpop.f32.mrf.mxu0
        %v2604 = vadd.f32 %v2435, %v2603
        %v2605 = vpop.f32.mrf.mxu0
        %2606 = vmatprep.mubr.f32.mxu0 0.0
        %2607 = vmatmul.mubr.f32.gmra.mxu0 %v2401
        %v2608 = vpop.f32.mrf.mxu0
        %v2609 = vadd.f32 %v2435, %v2608
        %v2610 = vpop.f32.mrf.mxu0
        %2611 = vmatprep.mubr.f32.mxu0 0.0
        %2612 = vmatmul.mubr.f32.gmra.mxu0 %v2402
        %v2613 = vpop.f32.mrf.mxu0
        %v2614 = vadd.f32 %v2435, %v2613
        %v2615 = vpop.f32.mrf.mxu0
        %2616 = vmatprep.mubr.f32.mxu0 0.0
        %2617 = vmatmul.mubr.f32.gmra.mxu0 %v2403
        %v2618 = vpop.f32.mrf.mxu0
        %v2619 = vadd.f32 %v2435, %v2618
        %v2620 = vpop.f32.mrf.mxu0
        %2621 = vmatprep.mubr.f32.mxu0 0.0
        %2622 = vmatmul.mubr.f32.gmra.mxu0 %v2404
        %v2623 = vpop.f32.mrf.mxu0
        %v2624 = vadd.f32 %v2435, %v2623
        %v2625 = vpop.f32.mrf.mxu0
        %2626 = vmatprep.mubr.f32.mxu0 0.0
        %2627 = vmatmul.mubr.f32.gmra.mxu0 %v2405
        %v2628 = vpop.f32.mrf.mxu0
        %v2629 = vadd.f32 %v2435, %v2628
        %v2630 = vpop.f32.mrf.mxu0
        %2631 = vmatprep.mubr.f32.mxu0 0.0
        %2632 = vmatmul.mubr.f32.gmra.mxu0 %v2406
        %v2633 = vpop.f32.mrf.mxu0
        %v2634 = vadd.f32 %v2435, %v2633
        %v2635 = vpop.f32.mrf.mxu0
        %2636 = vmatprep.mubr.f32.mxu0 0.0
        %2637 = vmatmul.mubr.f32.gmra.mxu0 %v2407
        %v2638 = vpop.f32.mrf.mxu0
        %v2639 = vadd.f32 %v2435, %v2638
        %v2640 = vpop.f32.mrf.mxu0
        %2641 = vmatprep.mubr.f32.mxu0 0.0
        %2642 = vmatmul.mubr.f32.gmra.mxu0 %v2408
        %v2643 = vpop.f32.mrf.mxu0
        %v2644 = vadd.f32 %v2435, %v2643
        %v2645 = vpop.f32.mrf.mxu0
        %2646 = vmatprep.mubr.f32.mxu0 0.0
        %2647 = vmatmul.mubr.f32.gmra.mxu0 %v2409
        %v2648 = vpop.f32.mrf.mxu0
        %v2649 = vadd.f32 %v2435, %v2648
        %v2650 = vpop.f32.mrf.mxu0
        %2651 = vmatprep.mubr.f32.mxu0 0.0
        %2652 = vmatmul.mubr.f32.gmra.mxu0 %v2410
        %v2653 = vpop.f32.mrf.mxu0
        %v2654 = vadd.f32 %v2435, %v2653
        %v2655 = vpop.f32.mrf.mxu0
        %2656 = vmatprep.mubr.f32.mxu0 0.0
        %2657 = vmatmul.mubr.f32.gmra.mxu0 %v2411
        %v2658 = vpop.f32.mrf.mxu0
        %v2659 = vadd.f32 %v2435, %v2658
        %v2660 = vpop.f32.mrf.mxu0
        %2661 = vdwg.mxu0
        %v2662 = vmax.f32 %v2504, 0.0
        %v2663 = vmax.f32 %v2509, 0.0
        %v2664 = vmax.f32 %v2514, 0.0
        %v2665 = vmax.f32 %v2519, 0.0
        %v2666 = vmax.f32 %v2524, 0.0
        %v2667 = vmax.f32 %v2529, 0.0
        %v2668 = vmax.f32 %v2534, 0.0
        %v2669 = vmax.f32 %v2539, 0.0
        %v2670 = vmax.f32 %v2544, 0.0
        %v2671 = vmax.f32 %v2549, 0.0
        %v2672 = vmax.f32 %v2554, 0.0
        %v2673 = vmax.f32 %v2559, 0.0
        %v2674 = vmax.f32 %v2564, 0.0
        %v2675 = vmax.f32 %v2569, 0.0
        %v2676 = vmax.f32 %v2574, 0.0
        %v2677 = vmax.f32 %v2579, 0.0
        %v2678 = vmax.f32 %v2584, 0.0
        %v2679 = vmax.f32 %v2589, 0.0
        %v2680 = vmax.f32 %v2594, 0.0
        %v2681 = vmax.f32 %v2599, 0.0
        %v2682 = vmax.f32 %v2604, 0.0
        %v2683 = vmax.f32 %v2609, 0.0
        %v2684 = vmax.f32 %v2614, 0.0
        %v2685 = vmax.f32 %v2619, 0.0
        %v2686 = vmax.f32 %v2624, 0.0
        %v2687 = vmax.f32 %v2629, 0.0
        %v2688 = vmax.f32 %v2634, 0.0
        %v2689 = vmax.f32 %v2639, 0.0
        %v2690 = vmax.f32 %v2644, 0.0
        %v2691 = vmax.f32 %v2649, 0.0
        %v2692 = vmax.f32 %v2654, 0.0
        %v2693 = vmax.f32 %v2659, 0.0
        %s2694 = scalar_lea.vmem [#allocation8], 128
        %v2695 = vld [vmem:[%s2694] sm:$0xff]
        %v2696 = vld [vmem:[%s2694 + $0x8] sm:$0xff]
        %v2697 = vld [vmem:[%s2694 + $0x10] sm:$0xff]
        %v2698 = vld [vmem:[%s2694 + $0x18] sm:$0xff]
        %v2699 = vld [vmem:[%s2694 + $0x20] sm:$0xff]
        %v2700 = vld [vmem:[%s2694 + $0x28] sm:$0xff]
        %v2701 = vld [vmem:[%s2694 + $0x30] sm:$0xff]
        %v2702 = vld [vmem:[%s2694 + $0x38] sm:$0xff]
        %v2703 = vld [vmem:[%s2694 + $0x40] sm:$0xff]
        %v2704 = vld [vmem:[%s2694 + $0x48] sm:$0xff]
        %v2705 = vld [vmem:[%s2694 + $0x50] sm:$0xff]
        %v2706 = vld [vmem:[%s2694 + $0x58] sm:$0xff]
        %v2707 = vld [vmem:[%s2694 + $0x60] sm:$0xff]
        %v2708 = vld [vmem:[%s2694 + $0x68] sm:$0xff]
        %v2709 = vld [vmem:[%s2694 + $0x70] sm:$0xff]
        %v2710 = vld [vmem:[%s2694 + $0x78] sm:$0xff]
        %s2711 = scalar_lea.vmem %s9, 1
        %v2712 = vld [vmem:[%s2711] sm:$0x1]
        %v2714 = vlaneseq
        %v2715 = vshrl.u32 %v2714, 7
        %v2716 = vsub.s32 0, %v2715
        %v2717 = vrot.slane %v2712, %v2716
        %2719 = vmatprep.subr.mxu0 0.0
        %2720 = vmatpush1.msra.mxu0 %v2710
        %2721 = vmatprep.subr.mxu0 0.0
        %2722 = vmatpush1.msra.mxu0 %v2709
        %2723 = vmatprep.subr.mxu0 0.0
        %2724 = vmatpush1.msra.mxu0 %v2708
        %2725 = vmatprep.subr.mxu0 0.0
        %2726 = vmatpush1.msra.mxu0 %v2707
        %2727 = vmatprep.subr.mxu0 0.0
        %2728 = vmatpush1.msra.mxu0 %v2706
        %2729 = vmatprep.subr.mxu0 0.0
        %2730 = vmatpush1.msra.mxu0 %v2705
        %2731 = vmatprep.subr.mxu0 0.0
        %2732 = vmatpush1.msra.mxu0 %v2704
        %2733 = vmatprep.subr.mxu0 0.0
        %2734 = vmatpush1.msra.mxu0 %v2703
        %2735 = vmatprep.subr.mxu0 0.0
        %2736 = vmatpush1.msra.mxu0 %v2702
        %2737 = vmatprep.subr.mxu0 0.0
        %2738 = vmatpush1.msra.mxu0 %v2701
        %2739 = vmatprep.subr.mxu0 0.0
        %2740 = vmatpush1.msra.mxu0 %v2700
        %2741 = vmatprep.subr.mxu0 0.0
        %2742 = vmatpush1.msra.mxu0 %v2699
        %2743 = vmatprep.subr.mxu0 0.0
        %2744 = vmatpush1.msra.mxu0 %v2698
        %2745 = vmatprep.subr.mxu0 0.0
        %2746 = vmatpush1.msra.mxu0 %v2697
        %2747 = vmatprep.subr.mxu0 0.0
        %2748 = vmatpush1.msra.mxu0 %v2696
        %2749 = vmatprep.subr.mxu0 0.0
        %2750 = vmatpush1.msra.mxu0 %v2695
        %2751 = vmatprep.subr.mxu0 0.0
        %2752 = vmatpush2.msra.mxu0 0.0
        %2753 = vmatprep.subr.mxu0 0.0
        %2754 = vmatpush2.msra.mxu0 0.0
        %2755 = vmatprep.subr.mxu0 0.0
        %2756 = vmatpush2.msra.mxu0 0.0
        %2757 = vmatprep.subr.mxu0 0.0
        %2758 = vmatpush2.msra.mxu0 0.0
        %2759 = vmatprep.subr.mxu0 0.0
        %2760 = vmatpush2.msra.mxu0 0.0
        %2761 = vmatprep.subr.mxu0 0.0
        %2762 = vmatpush2.msra.mxu0 0.0
        %2763 = vmatprep.subr.mxu0 0.0
        %2764 = vmatpush2.msra.mxu0 0.0
        %2765 = vmatprep.subr.mxu0 0.0
        %2766 = vmatpush2.msra.mxu0 0.0
        %2767 = vmatprep.subr.mxu0 0.0
        %2768 = vmatpush2.msra.mxu0 0.0
        %2769 = vmatprep.subr.mxu0 0.0
        %2770 = vmatpush2.msra.mxu0 0.0
        %2771 = vmatprep.subr.mxu0 0.0
        %2772 = vmatpush2.msra.mxu0 0.0
        %2773 = vmatprep.subr.mxu0 0.0
        %2774 = vmatpush2.msra.mxu0 0.0
        %2775 = vmatprep.subr.mxu0 0.0
        %2776 = vmatpush2.msra.mxu0 0.0
        %2777 = vmatprep.subr.mxu0 0.0
        %2778 = vmatpush2.msra.mxu0 0.0
        %2779 = vmatprep.subr.mxu0 0.0
        %2780 = vmatpush2.msra.mxu0 0.0
        %2781 = vmatprep.subr.mxu0 0.0
        %2782 = vmatpush2.msra.mxu0 0.0
        %2783 = vmatprep.mubr.f32.mxu0 0.0
        %2784 = vmatmul.mubr.f32.gmra.mxu0 %v2662
        %v2785 = vpop.f32.mrf.mxu0
        %v2786 = vadd.f32 %v2717, %v2785
        %v2787 = vpop.f32.mrf.mxu0
        %2788 = vmatprep.mubr.f32.mxu0 0.0
        %2789 = vmatmul.mubr.f32.gmra.mxu0 %v2663
        %v2790 = vpop.f32.mrf.mxu0
        %v2791 = vadd.f32 %v2717, %v2790
        %v2792 = vpop.f32.mrf.mxu0
        %2793 = vmatprep.mubr.f32.mxu0 0.0
        %2794 = vmatmul.mubr.f32.gmra.mxu0 %v2664
        %v2795 = vpop.f32.mrf.mxu0
        %v2796 = vadd.f32 %v2717, %v2795
        %v2797 = vpop.f32.mrf.mxu0
        %2798 = vmatprep.mubr.f32.mxu0 0.0
        %2799 = vmatmul.mubr.f32.gmra.mxu0 %v2665
        %v2800 = vpop.f32.mrf.mxu0
        %v2801 = vadd.f32 %v2717, %v2800
        %v2802 = vpop.f32.mrf.mxu0
        %2803 = vmatprep.mubr.f32.mxu0 0.0
        %2804 = vmatmul.mubr.f32.gmra.mxu0 %v2666
        %v2805 = vpop.f32.mrf.mxu0
        %v2806 = vadd.f32 %v2717, %v2805
        %v2807 = vpop.f32.mrf.mxu0
        %2808 = vmatprep.mubr.f32.mxu0 0.0
        %2809 = vmatmul.mubr.f32.gmra.mxu0 %v2667
        %v2810 = vpop.f32.mrf.mxu0
        %v2811 = vadd.f32 %v2717, %v2810
        %v2812 = vpop.f32.mrf.mxu0
        %2813 = vmatprep.mubr.f32.mxu0 0.0
        %2814 = vmatmul.mubr.f32.gmra.mxu0 %v2668
        %v2815 = vpop.f32.mrf.mxu0
        %v2816 = vadd.f32 %v2717, %v2815
        %v2817 = vpop.f32.mrf.mxu0
        %2818 = vmatprep.mubr.f32.mxu0 0.0
        %2819 = vmatmul.mubr.f32.gmra.mxu0 %v2669
        %v2820 = vpop.f32.mrf.mxu0
        %v2821 = vadd.f32 %v2717, %v2820
        %v2822 = vpop.f32.mrf.mxu0
        %2823 = vmatprep.mubr.f32.mxu0 0.0
        %2824 = vmatmul.mubr.f32.gmra.mxu0 %v2670
        %v2825 = vpop.f32.mrf.mxu0
        %v2826 = vadd.f32 %v2717, %v2825
        %v2827 = vpop.f32.mrf.mxu0
        %2828 = vmatprep.mubr.f32.mxu0 0.0
        %2829 = vmatmul.mubr.f32.gmra.mxu0 %v2671
        %v2830 = vpop.f32.mrf.mxu0
        %v2831 = vadd.f32 %v2717, %v2830
        %v2832 = vpop.f32.mrf.mxu0
        %2833 = vmatprep.mubr.f32.mxu0 0.0
        %2834 = vmatmul.mubr.f32.gmra.mxu0 %v2672
        %v2835 = vpop.f32.mrf.mxu0
        %v2836 = vadd.f32 %v2717, %v2835
        %v2837 = vpop.f32.mrf.mxu0
        %2838 = vmatprep.mubr.f32.mxu0 0.0
        %2839 = vmatmul.mubr.f32.gmra.mxu0 %v2673
        %v2840 = vpop.f32.mrf.mxu0
        %v2841 = vadd.f32 %v2717, %v2840
        %v2842 = vpop.f32.mrf.mxu0
        %2843 = vmatprep.mubr.f32.mxu0 0.0
        %2844 = vmatmul.mubr.f32.gmra.mxu0 %v2674
        %v2845 = vpop.f32.mrf.mxu0
        %v2846 = vadd.f32 %v2717, %v2845
        %v2847 = vpop.f32.mrf.mxu0
        %2848 = vmatprep.mubr.f32.mxu0 0.0
        %2849 = vmatmul.mubr.f32.gmra.mxu0 %v2675
        %v2850 = vpop.f32.mrf.mxu0
        %v2851 = vadd.f32 %v2717, %v2850
        %v2852 = vpop.f32.mrf.mxu0
        %2853 = vmatprep.mubr.f32.mxu0 0.0
        %2854 = vmatmul.mubr.f32.gmra.mxu0 %v2676
        %v2855 = vpop.f32.mrf.mxu0
        %v2856 = vadd.f32 %v2717, %v2855
        %v2857 = vpop.f32.mrf.mxu0
        %2858 = vmatprep.mubr.f32.mxu0 0.0
        %2859 = vmatmul.mubr.f32.gmra.mxu0 %v2677
        %v2860 = vpop.f32.mrf.mxu0
        %v2861 = vadd.f32 %v2717, %v2860
        %v2862 = vpop.f32.mrf.mxu0
        %2863 = vmatprep.mubr.f32.mxu0 0.0
        %2864 = vmatmul.mubr.f32.gmra.mxu0 %v2678
        %v2865 = vpop.f32.mrf.mxu0
        %v2866 = vadd.f32 %v2717, %v2865
        %v2867 = vpop.f32.mrf.mxu0
        %2868 = vmatprep.mubr.f32.mxu0 0.0
        %2869 = vmatmul.mubr.f32.gmra.mxu0 %v2679
        %v2870 = vpop.f32.mrf.mxu0
        %v2871 = vadd.f32 %v2717, %v2870
        %v2872 = vpop.f32.mrf.mxu0
        %2873 = vmatprep.mubr.f32.mxu0 0.0
        %2874 = vmatmul.mubr.f32.gmra.mxu0 %v2680
        %v2875 = vpop.f32.mrf.mxu0
        %v2876 = vadd.f32 %v2717, %v2875
        %v2877 = vpop.f32.mrf.mxu0
        %2878 = vmatprep.mubr.f32.mxu0 0.0
        %2879 = vmatmul.mubr.f32.gmra.mxu0 %v2681
        %v2880 = vpop.f32.mrf.mxu0
        %v2881 = vadd.f32 %v2717, %v2880
        %v2882 = vpop.f32.mrf.mxu0
        %2883 = vmatprep.mubr.f32.mxu0 0.0
        %2884 = vmatmul.mubr.f32.gmra.mxu0 %v2682
        %v2885 = vpop.f32.mrf.mxu0
        %v2886 = vadd.f32 %v2717, %v2885
        %v2887 = vpop.f32.mrf.mxu0
        %2888 = vmatprep.mubr.f32.mxu0 0.0
        %2889 = vmatmul.mubr.f32.gmra.mxu0 %v2683
        %v2890 = vpop.f32.mrf.mxu0
        %v2891 = vadd.f32 %v2717, %v2890
        %v2892 = vpop.f32.mrf.mxu0
        %2893 = vmatprep.mubr.f32.mxu0 0.0
        %2894 = vmatmul.mubr.f32.gmra.mxu0 %v2684
        %v2895 = vpop.f32.mrf.mxu0
        %v2896 = vadd.f32 %v2717, %v2895
        %v2897 = vpop.f32.mrf.mxu0
        %2898 = vmatprep.mubr.f32.mxu0 0.0
        %2899 = vmatmul.mubr.f32.gmra.mxu0 %v2685
        %v2900 = vpop.f32.mrf.mxu0
        %v2901 = vadd.f32 %v2717, %v2900
        %v2902 = vpop.f32.mrf.mxu0
        %2903 = vmatprep.mubr.f32.mxu0 0.0
        %2904 = vmatmul.mubr.f32.gmra.mxu0 %v2686
        %v2905 = vpop.f32.mrf.mxu0
        %v2906 = vadd.f32 %v2717, %v2905
        %v2907 = vpop.f32.mrf.mxu0
        %2908 = vmatprep.mubr.f32.mxu0 0.0
        %2909 = vmatmul.mubr.f32.gmra.mxu0 %v2687
        %v2910 = vpop.f32.mrf.mxu0
        %v2911 = vadd.f32 %v2717, %v2910
        %v2912 = vpop.f32.mrf.mxu0
        %2913 = vmatprep.mubr.f32.mxu0 0.0
        %2914 = vmatmul.mubr.f32.gmra.mxu0 %v2688
        %v2915 = vpop.f32.mrf.mxu0
        %v2916 = vadd.f32 %v2717, %v2915
        %v2917 = vpop.f32.mrf.mxu0
        %2918 = vmatprep.mubr.f32.mxu0 0.0
        %2919 = vmatmul.mubr.f32.gmra.mxu0 %v2689
        %v2920 = vpop.f32.mrf.mxu0
        %v2921 = vadd.f32 %v2717, %v2920
        %v2922 = vpop.f32.mrf.mxu0
        %2923 = vmatprep.mubr.f32.mxu0 0.0
        %2924 = vmatmul.mubr.f32.gmra.mxu0 %v2690
        %v2925 = vpop.f32.mrf.mxu0
        %v2926 = vadd.f32 %v2717, %v2925
        %v2927 = vpop.f32.mrf.mxu0
        %2928 = vmatprep.mubr.f32.mxu0 0.0
        %2929 = vmatmul.mubr.f32.gmra.mxu0 %v2691
        %v2930 = vpop.f32.mrf.mxu0
        %v2931 = vadd.f32 %v2717, %v2930
        %v2932 = vpop.f32.mrf.mxu0
        %2933 = vmatprep.mubr.f32.mxu0 0.0
        %2934 = vmatmul.mubr.f32.gmra.mxu0 %v2692
        %v2935 = vpop.f32.mrf.mxu0
        %v2936 = vadd.f32 %v2717, %v2935
        %v2937 = vpop.f32.mrf.mxu0
        %2938 = vmatprep.mubr.f32.mxu0 0.0
        %2939 = vmatmul.mubr.f32.gmra.mxu0 %v2693
        %v2940 = vpop.f32.mrf.mxu0
        %v2941 = vadd.f32 %v2717, %v2940
        %v2942 = vpop.f32.mrf.mxu0
        %2943 = vdwg.mxu0
        %v2944 = vadd.f32 %v2348, %v2786
        %v2945 = vadd.f32 %v2349, %v2791
        %v2946 = vadd.f32 %v2350, %v2796
        %v2947 = vadd.f32 %v2351, %v2801
        %v2948 = vadd.f32 %v2352, %v2806
        %v2949 = vadd.f32 %v2353, %v2811
        %v2950 = vadd.f32 %v2354, %v2816
        %v2951 = vadd.f32 %v2355, %v2821
        %v2952 = vadd.f32 %v2356, %v2826
        %v2953 = vadd.f32 %v2357, %v2831
        %v2954 = vadd.f32 %v2358, %v2836
        %v2955 = vadd.f32 %v2359, %v2841
        %v2956 = vadd.f32 %v2360, %v2846
        %v2957 = vadd.f32 %v2361, %v2851
        %v2958 = vadd.f32 %v2362, %v2856
        %v2959 = vadd.f32 %v2363, %v2861
        %v2960 = vadd.f32 %v2364, %v2866
        %v2961 = vadd.f32 %v2365, %v2871
        %v2962 = vadd.f32 %v2366, %v2876
        %v2963 = vadd.f32 %v2367, %v2881
        %v2964 = vadd.f32 %v2368, %v2886
        %v2965 = vadd.f32 %v2369, %v2891
        %v2966 = vadd.f32 %v2370, %v2896
        %v2967 = vadd.f32 %v2371, %v2901
        %v2968 = vadd.f32 %v2372, %v2906
        %v2969 = vadd.f32 %v2373, %v2911
        %v2970 = vadd.f32 %v2374, %v2916
        %v2971 = vadd.f32 %v2375, %v2921
        %v2972 = vadd.f32 %v2376, %v2926
        %v2973 = vadd.f32 %v2377, %v2931
        %v2974 = vadd.f32 %v2378, %v2936
        %v2975 = vadd.f32 %v2379, %v2941
        %v2976 = vadd.f32 %v2944, %v1566
        %v2977 = vadd.f32 %v2945, %v1571
        %v2978 = vadd.f32 %v2946, %v1576
        %v2979 = vadd.f32 %v2947, %v1581
        %v2980 = vadd.f32 %v2948, %v1586
        %v2981 = vadd.f32 %v2949, %v1591
        %v2982 = vadd.f32 %v2950, %v1596
        %v2983 = vadd.f32 %v2951, %v1601
        %v2984 = vadd.f32 %v2952, %v1606
        %v2985 = vadd.f32 %v2953, %v1611
        %v2986 = vadd.f32 %v2954, %v1616
        %v2987 = vadd.f32 %v2955, %v1621
        %v2988 = vadd.f32 %v2956, %v1626
        %v2989 = vadd.f32 %v2957, %v1631
        %v2990 = vadd.f32 %v2958, %v1636
        %v2991 = vadd.f32 %v2959, %v1641
        %v2992 = vadd.f32 %v2960, %v1646
        %v2993 = vadd.f32 %v2961, %v1651
        %v2994 = vadd.f32 %v2962, %v1656
        %v2995 = vadd.f32 %v2963, %v1661
        %v2996 = vadd.f32 %v2964, %v1666
        %v2997 = vadd.f32 %v2965, %v1671
        %v2998 = vadd.f32 %v2966, %v1676
        %v2999 = vadd.f32 %v2967, %v1681
        %v3000 = vadd.f32 %v2968, %v1686
        %v3001 = vadd.f32 %v2969, %v1691
        %v3002 = vadd.f32 %v2970, %v1696
        %v3003 = vadd.f32 %v2971, %v1701
        %v3004 = vadd.f32 %v2972, %v1706
        %v3005 = vadd.f32 %v2973, %v1711
        %v3006 = vadd.f32 %v2974, %v1716
        %v3007 = vadd.f32 %v2975, %v1721
        %v3008 = vmax.f32 %v2976, 0.0
        %v3009 = vmax.f32 %v2977, 0.0
        %v3010 = vmax.f32 %v2978, 0.0
        %v3011 = vmax.f32 %v2979, 0.0
        %v3012 = vmax.f32 %v2980, 0.0
        %v3013 = vmax.f32 %v2981, 0.0
        %v3014 = vmax.f32 %v2982, 0.0
        %v3015 = vmax.f32 %v2983, 0.0
        %v3016 = vmax.f32 %v2984, 0.0
        %v3017 = vmax.f32 %v2985, 0.0
        %v3018 = vmax.f32 %v2986, 0.0
        %v3019 = vmax.f32 %v2987, 0.0
        %v3020 = vmax.f32 %v2988, 0.0
        %v3021 = vmax.f32 %v2989, 0.0
        %v3022 = vmax.f32 %v2990, 0.0
        %v3023 = vmax.f32 %v2991, 0.0
        %v3024 = vmax.f32 %v2992, 0.0
        %v3025 = vmax.f32 %v2993, 0.0
        %v3026 = vmax.f32 %v2994, 0.0
        %v3027 = vmax.f32 %v2995, 0.0
        %v3028 = vmax.f32 %v2996, 0.0
        %v3029 = vmax.f32 %v2997, 0.0
        %v3030 = vmax.f32 %v2998, 0.0
        %v3031 = vmax.f32 %v2999, 0.0
        %v3032 = vmax.f32 %v3000, 0.0
        %v3033 = vmax.f32 %v3001, 0.0
        %v3034 = vmax.f32 %v3002, 0.0
        %v3035 = vmax.f32 %v3003, 0.0
        %v3036 = vmax.f32 %v3004, 0.0
        %v3037 = vmax.f32 %v3005, 0.0
        %v3038 = vmax.f32 %v3006, 0.0
        %v3039 = vmax.f32 %v3007, 0.0
        %s3040 = scalar_lea.vmem [#allocation6], 256
        %v3041 = vld [vmem:[%s3040] sm:$0xff]
        %v3042 = vld [vmem:[%s3040 + $0x8] sm:$0xff]
        %v3043 = vld [vmem:[%s3040 + $0x10] sm:$0xff]
        %v3044 = vld [vmem:[%s3040 + $0x18] sm:$0xff]
        %v3045 = vld [vmem:[%s3040 + $0x20] sm:$0xff]
        %v3046 = vld [vmem:[%s3040 + $0x28] sm:$0xff]
        %v3047 = vld [vmem:[%s3040 + $0x30] sm:$0xff]
        %v3048 = vld [vmem:[%s3040 + $0x38] sm:$0xff]
        %v3049 = vld [vmem:[%s3040 + $0x40] sm:$0xff]
        %v3050 = vld [vmem:[%s3040 + $0x48] sm:$0xff]
        %v3051 = vld [vmem:[%s3040 + $0x50] sm:$0xff]
        %v3052 = vld [vmem:[%s3040 + $0x58] sm:$0xff]
        %v3053 = vld [vmem:[%s3040 + $0x60] sm:$0xff]
        %v3054 = vld [vmem:[%s3040 + $0x68] sm:$0xff]
        %v3055 = vld [vmem:[%s3040 + $0x70] sm:$0xff]
        %v3056 = vld [vmem:[%s3040 + $0x78] sm:$0xff]
        %s3057 = scalar_lea.vmem %s7, 2
        %v3058 = vld [vmem:[%s3057] sm:$0x1]
        %v3060 = vlaneseq
        %v3061 = vshrl.u32 %v3060, 7
        %v3062 = vsub.s32 0, %v3061
        %v3063 = vrot.slane %v3058, %v3062
        %3065 = vmatprep.subr.mxu0 0.0
        %3066 = vmatpush1.msra.mxu0 %v3056
        %3067 = vmatprep.subr.mxu0 0.0
        %3068 = vmatpush1.msra.mxu0 %v3055
        %3069 = vmatprep.subr.mxu0 0.0
        %3070 = vmatpush1.msra.mxu0 %v3054
        %3071 = vmatprep.subr.mxu0 0.0
        %3072 = vmatpush1.msra.mxu0 %v3053
        %3073 = vmatprep.subr.mxu0 0.0
        %3074 = vmatpush1.msra.mxu0 %v3052
        %3075 = vmatprep.subr.mxu0 0.0
        %3076 = vmatpush1.msra.mxu0 %v3051
        %3077 = vmatprep.subr.mxu0 0.0
        %3078 = vmatpush1.msra.mxu0 %v3050
        %3079 = vmatprep.subr.mxu0 0.0
        %3080 = vmatpush1.msra.mxu0 %v3049
        %3081 = vmatprep.subr.mxu0 0.0
        %3082 = vmatpush1.msra.mxu0 %v3048
        %3083 = vmatprep.subr.mxu0 0.0
        %3084 = vmatpush1.msra.mxu0 %v3047
        %3085 = vmatprep.subr.mxu0 0.0
        %3086 = vmatpush1.msra.mxu0 %v3046
        %3087 = vmatprep.subr.mxu0 0.0
        %3088 = vmatpush1.msra.mxu0 %v3045
        %3089 = vmatprep.subr.mxu0 0.0
        %3090 = vmatpush1.msra.mxu0 %v3044
        %3091 = vmatprep.subr.mxu0 0.0
        %3092 = vmatpush1.msra.mxu0 %v3043
        %3093 = vmatprep.subr.mxu0 0.0
        %3094 = vmatpush1.msra.mxu0 %v3042
        %3095 = vmatprep.subr.mxu0 0.0
        %3096 = vmatpush1.msra.mxu0 %v3041
        %3097 = vmatprep.subr.mxu0 0.0
        %3098 = vmatpush2.msra.mxu0 0.0
        %3099 = vmatprep.subr.mxu0 0.0
        %3100 = vmatpush2.msra.mxu0 0.0
        %3101 = vmatprep.subr.mxu0 0.0
        %3102 = vmatpush2.msra.mxu0 0.0
        %3103 = vmatprep.subr.mxu0 0.0
        %3104 = vmatpush2.msra.mxu0 0.0
        %3105 = vmatprep.subr.mxu0 0.0
        %3106 = vmatpush2.msra.mxu0 0.0
        %3107 = vmatprep.subr.mxu0 0.0
        %3108 = vmatpush2.msra.mxu0 0.0
        %3109 = vmatprep.subr.mxu0 0.0
        %3110 = vmatpush2.msra.mxu0 0.0
        %3111 = vmatprep.subr.mxu0 0.0
        %3112 = vmatpush2.msra.mxu0 0.0
        %3113 = vmatprep.subr.mxu0 0.0
        %3114 = vmatpush2.msra.mxu0 0.0
        %3115 = vmatprep.subr.mxu0 0.0
        %3116 = vmatpush2.msra.mxu0 0.0
        %3117 = vmatprep.subr.mxu0 0.0
        %3118 = vmatpush2.msra.mxu0 0.0
        %3119 = vmatprep.subr.mxu0 0.0
        %3120 = vmatpush2.msra.mxu0 0.0
        %3121 = vmatprep.subr.mxu0 0.0
        %3122 = vmatpush2.msra.mxu0 0.0
        %3123 = vmatprep.subr.mxu0 0.0
        %3124 = vmatpush2.msra.mxu0 0.0
        %3125 = vmatprep.subr.mxu0 0.0
        %3126 = vmatpush2.msra.mxu0 0.0
        %3127 = vmatprep.subr.mxu0 0.0
        %3128 = vmatpush2.msra.mxu0 0.0
        %3129 = vmatprep.mubr.f32.mxu0 0.0
        %3130 = vmatmul.mubr.f32.gmra.mxu0 %v3008
        %v3131 = vpop.f32.mrf.mxu0
        %v3132 = vadd.f32 %v3063, %v3131
        %v3133 = vpop.f32.mrf.mxu0
        %3134 = vmatprep.mubr.f32.mxu0 0.0
        %3135 = vmatmul.mubr.f32.gmra.mxu0 %v3009
        %v3136 = vpop.f32.mrf.mxu0
        %v3137 = vadd.f32 %v3063, %v3136
        %v3138 = vpop.f32.mrf.mxu0
        %3139 = vmatprep.mubr.f32.mxu0 0.0
        %3140 = vmatmul.mubr.f32.gmra.mxu0 %v3010
        %v3141 = vpop.f32.mrf.mxu0
        %v3142 = vadd.f32 %v3063, %v3141
        %v3143 = vpop.f32.mrf.mxu0
        %3144 = vmatprep.mubr.f32.mxu0 0.0
        %3145 = vmatmul.mubr.f32.gmra.mxu0 %v3011
        %v3146 = vpop.f32.mrf.mxu0
        %v3147 = vadd.f32 %v3063, %v3146
        %v3148 = vpop.f32.mrf.mxu0
        %3149 = vmatprep.mubr.f32.mxu0 0.0
        %3150 = vmatmul.mubr.f32.gmra.mxu0 %v3012
        %v3151 = vpop.f32.mrf.mxu0
        %v3152 = vadd.f32 %v3063, %v3151
        %v3153 = vpop.f32.mrf.mxu0
        %3154 = vmatprep.mubr.f32.mxu0 0.0
        %3155 = vmatmul.mubr.f32.gmra.mxu0 %v3013
        %v3156 = vpop.f32.mrf.mxu0
        %v3157 = vadd.f32 %v3063, %v3156
        %v3158 = vpop.f32.mrf.mxu0
        %3159 = vmatprep.mubr.f32.mxu0 0.0
        %3160 = vmatmul.mubr.f32.gmra.mxu0 %v3014
        %v3161 = vpop.f32.mrf.mxu0
        %v3162 = vadd.f32 %v3063, %v3161
        %v3163 = vpop.f32.mrf.mxu0
        %3164 = vmatprep.mubr.f32.mxu0 0.0
        %3165 = vmatmul.mubr.f32.gmra.mxu0 %v3015
        %v3166 = vpop.f32.mrf.mxu0
        %v3167 = vadd.f32 %v3063, %v3166
        %v3168 = vpop.f32.mrf.mxu0
        %3169 = vmatprep.mubr.f32.mxu0 0.0
        %3170 = vmatmul.mubr.f32.gmra.mxu0 %v3016
        %v3171 = vpop.f32.mrf.mxu0
        %v3172 = vadd.f32 %v3063, %v3171
        %v3173 = vpop.f32.mrf.mxu0
        %3174 = vmatprep.mubr.f32.mxu0 0.0
        %3175 = vmatmul.mubr.f32.gmra.mxu0 %v3017
        %v3176 = vpop.f32.mrf.mxu0
        %v3177 = vadd.f32 %v3063, %v3176
        %v3178 = vpop.f32.mrf.mxu0
        %3179 = vmatprep.mubr.f32.mxu0 0.0
        %3180 = vmatmul.mubr.f32.gmra.mxu0 %v3018
        %v3181 = vpop.f32.mrf.mxu0
        %v3182 = vadd.f32 %v3063, %v3181
        %v3183 = vpop.f32.mrf.mxu0
        %3184 = vmatprep.mubr.f32.mxu0 0.0
        %3185 = vmatmul.mubr.f32.gmra.mxu0 %v3019
        %v3186 = vpop.f32.mrf.mxu0
        %v3187 = vadd.f32 %v3063, %v3186
        %v3188 = vpop.f32.mrf.mxu0
        %3189 = vmatprep.mubr.f32.mxu0 0.0
        %3190 = vmatmul.mubr.f32.gmra.mxu0 %v3020
        %v3191 = vpop.f32.mrf.mxu0
        %v3192 = vadd.f32 %v3063, %v3191
        %v3193 = vpop.f32.mrf.mxu0
        %3194 = vmatprep.mubr.f32.mxu0 0.0
        %3195 = vmatmul.mubr.f32.gmra.mxu0 %v3021
        %v3196 = vpop.f32.mrf.mxu0
        %v3197 = vadd.f32 %v3063, %v3196
        %v3198 = vpop.f32.mrf.mxu0
        %3199 = vmatprep.mubr.f32.mxu0 0.0
        %3200 = vmatmul.mubr.f32.gmra.mxu0 %v3022
        %v3201 = vpop.f32.mrf.mxu0
        %v3202 = vadd.f32 %v3063, %v3201
        %v3203 = vpop.f32.mrf.mxu0
        %3204 = vmatprep.mubr.f32.mxu0 0.0
        %3205 = vmatmul.mubr.f32.gmra.mxu0 %v3023
        %v3206 = vpop.f32.mrf.mxu0
        %v3207 = vadd.f32 %v3063, %v3206
        %v3208 = vpop.f32.mrf.mxu0
        %3209 = vmatprep.mubr.f32.mxu0 0.0
        %3210 = vmatmul.mubr.f32.gmra.mxu0 %v3024
        %v3211 = vpop.f32.mrf.mxu0
        %v3212 = vadd.f32 %v3063, %v3211
        %v3213 = vpop.f32.mrf.mxu0
        %3214 = vmatprep.mubr.f32.mxu0 0.0
        %3215 = vmatmul.mubr.f32.gmra.mxu0 %v3025
        %v3216 = vpop.f32.mrf.mxu0
        %v3217 = vadd.f32 %v3063, %v3216
        %v3218 = vpop.f32.mrf.mxu0
        %3219 = vmatprep.mubr.f32.mxu0 0.0
        %3220 = vmatmul.mubr.f32.gmra.mxu0 %v3026
        %v3221 = vpop.f32.mrf.mxu0
        %v3222 = vadd.f32 %v3063, %v3221
        %v3223 = vpop.f32.mrf.mxu0
        %3224 = vmatprep.mubr.f32.mxu0 0.0
        %3225 = vmatmul.mubr.f32.gmra.mxu0 %v3027
        %v3226 = vpop.f32.mrf.mxu0
        %v3227 = vadd.f32 %v3063, %v3226
        %v3228 = vpop.f32.mrf.mxu0
        %3229 = vmatprep.mubr.f32.mxu0 0.0
        %3230 = vmatmul.mubr.f32.gmra.mxu0 %v3028
        %v3231 = vpop.f32.mrf.mxu0
        %v3232 = vadd.f32 %v3063, %v3231
        %v3233 = vpop.f32.mrf.mxu0
        %3234 = vmatprep.mubr.f32.mxu0 0.0
        %3235 = vmatmul.mubr.f32.gmra.mxu0 %v3029
        %v3236 = vpop.f32.mrf.mxu0
        %v3237 = vadd.f32 %v3063, %v3236
        %v3238 = vpop.f32.mrf.mxu0
        %3239 = vmatprep.mubr.f32.mxu0 0.0
        %3240 = vmatmul.mubr.f32.gmra.mxu0 %v3030
        %v3241 = vpop.f32.mrf.mxu0
        %v3242 = vadd.f32 %v3063, %v3241
        %v3243 = vpop.f32.mrf.mxu0
        %3244 = vmatprep.mubr.f32.mxu0 0.0
        %3245 = vmatmul.mubr.f32.gmra.mxu0 %v3031
        %v3246 = vpop.f32.mrf.mxu0
        %v3247 = vadd.f32 %v3063, %v3246
        %v3248 = vpop.f32.mrf.mxu0
        %3249 = vmatprep.mubr.f32.mxu0 0.0
        %3250 = vmatmul.mubr.f32.gmra.mxu0 %v3032
        %v3251 = vpop.f32.mrf.mxu0
        %v3252 = vadd.f32 %v3063, %v3251
        %v3253 = vpop.f32.mrf.mxu0
        %3254 = vmatprep.mubr.f32.mxu0 0.0
        %3255 = vmatmul.mubr.f32.gmra.mxu0 %v3033
        %v3256 = vpop.f32.mrf.mxu0
        %v3257 = vadd.f32 %v3063, %v3256
        %v3258 = vpop.f32.mrf.mxu0
        %3259 = vmatprep.mubr.f32.mxu0 0.0
        %3260 = vmatmul.mubr.f32.gmra.mxu0 %v3034
        %v3261 = vpop.f32.mrf.mxu0
        %v3262 = vadd.f32 %v3063, %v3261
        %v3263 = vpop.f32.mrf.mxu0
        %3264 = vmatprep.mubr.f32.mxu0 0.0
        %3265 = vmatmul.mubr.f32.gmra.mxu0 %v3035
        %v3266 = vpop.f32.mrf.mxu0
        %v3267 = vadd.f32 %v3063, %v3266
        %v3268 = vpop.f32.mrf.mxu0
        %3269 = vmatprep.mubr.f32.mxu0 0.0
        %3270 = vmatmul.mubr.f32.gmra.mxu0 %v3036
        %v3271 = vpop.f32.mrf.mxu0
        %v3272 = vadd.f32 %v3063, %v3271
        %v3273 = vpop.f32.mrf.mxu0
        %3274 = vmatprep.mubr.f32.mxu0 0.0
        %3275 = vmatmul.mubr.f32.gmra.mxu0 %v3037
        %v3276 = vpop.f32.mrf.mxu0
        %v3277 = vadd.f32 %v3063, %v3276
        %v3278 = vpop.f32.mrf.mxu0
        %3279 = vmatprep.mubr.f32.mxu0 0.0
        %3280 = vmatmul.mubr.f32.gmra.mxu0 %v3038
        %v3281 = vpop.f32.mrf.mxu0
        %v3282 = vadd.f32 %v3063, %v3281
        %v3283 = vpop.f32.mrf.mxu0
        %3284 = vmatprep.mubr.f32.mxu0 0.0
        %3285 = vmatmul.mubr.f32.gmra.mxu0 %v3039
        %v3286 = vpop.f32.mrf.mxu0
        %v3287 = vadd.f32 %v3063, %v3286
        %v3288 = vpop.f32.mrf.mxu0
        %3289 = vdwg.mxu0
        %v3290 = vmax.f32 %v3132, 0.0
        %v3291 = vmax.f32 %v3137, 0.0
        %v3292 = vmax.f32 %v3142, 0.0
        %v3293 = vmax.f32 %v3147, 0.0
        %v3294 = vmax.f32 %v3152, 0.0
        %v3295 = vmax.f32 %v3157, 0.0
        %v3296 = vmax.f32 %v3162, 0.0
        %v3297 = vmax.f32 %v3167, 0.0
        %v3298 = vmax.f32 %v3172, 0.0
        %v3299 = vmax.f32 %v3177, 0.0
        %v3300 = vmax.f32 %v3182, 0.0
        %v3301 = vmax.f32 %v3187, 0.0
        %v3302 = vmax.f32 %v3192, 0.0
        %v3303 = vmax.f32 %v3197, 0.0
        %v3304 = vmax.f32 %v3202, 0.0
        %v3305 = vmax.f32 %v3207, 0.0
        %v3306 = vmax.f32 %v3212, 0.0
        %v3307 = vmax.f32 %v3217, 0.0
        %v3308 = vmax.f32 %v3222, 0.0
        %v3309 = vmax.f32 %v3227, 0.0
        %v3310 = vmax.f32 %v3232, 0.0
        %v3311 = vmax.f32 %v3237, 0.0
        %v3312 = vmax.f32 %v3242, 0.0
        %v3313 = vmax.f32 %v3247, 0.0
        %v3314 = vmax.f32 %v3252, 0.0
        %v3315 = vmax.f32 %v3257, 0.0
        %v3316 = vmax.f32 %v3262, 0.0
        %v3317 = vmax.f32 %v3267, 0.0
        %v3318 = vmax.f32 %v3272, 0.0
        %v3319 = vmax.f32 %v3277, 0.0
        %v3320 = vmax.f32 %v3282, 0.0
        %v3321 = vmax.f32 %v3287, 0.0
        %s3322 = scalar_lea.vmem [#allocation8], 256
        %v3323 = vld [vmem:[%s3322] sm:$0xff]
        %v3324 = vld [vmem:[%s3322 + $0x8] sm:$0xff]
        %v3325 = vld [vmem:[%s3322 + $0x10] sm:$0xff]
        %v3326 = vld [vmem:[%s3322 + $0x18] sm:$0xff]
        %v3327 = vld [vmem:[%s3322 + $0x20] sm:$0xff]
        %v3328 = vld [vmem:[%s3322 + $0x28] sm:$0xff]
        %v3329 = vld [vmem:[%s3322 + $0x30] sm:$0xff]
        %v3330 = vld [vmem:[%s3322 + $0x38] sm:$0xff]
        %v3331 = vld [vmem:[%s3322 + $0x40] sm:$0xff]
        %v3332 = vld [vmem:[%s3322 + $0x48] sm:$0xff]
        %v3333 = vld [vmem:[%s3322 + $0x50] sm:$0xff]
        %v3334 = vld [vmem:[%s3322 + $0x58] sm:$0xff]
        %v3335 = vld [vmem:[%s3322 + $0x60] sm:$0xff]
        %v3336 = vld [vmem:[%s3322 + $0x68] sm:$0xff]
        %v3337 = vld [vmem:[%s3322 + $0x70] sm:$0xff]
        %v3338 = vld [vmem:[%s3322 + $0x78] sm:$0xff]
        %s3339 = scalar_lea.vmem %s9, 2
        %v3340 = vld [vmem:[%s3339] sm:$0x1]
        %v3342 = vlaneseq
        %v3343 = vshrl.u32 %v3342, 7
        %v3344 = vsub.s32 0, %v3343
        %v3345 = vrot.slane %v3340, %v3344
        %3347 = vmatprep.subr.mxu0 0.0
        %3348 = vmatpush1.msra.mxu0 %v3338
        %3349 = vmatprep.subr.mxu0 0.0
        %3350 = vmatpush1.msra.mxu0 %v3337
        %3351 = vmatprep.subr.mxu0 0.0
        %3352 = vmatpush1.msra.mxu0 %v3336
        %3353 = vmatprep.subr.mxu0 0.0
        %3354 = vmatpush1.msra.mxu0 %v3335
        %3355 = vmatprep.subr.mxu0 0.0
        %3356 = vmatpush1.msra.mxu0 %v3334
        %3357 = vmatprep.subr.mxu0 0.0
        %3358 = vmatpush1.msra.mxu0 %v3333
        %3359 = vmatprep.subr.mxu0 0.0
        %3360 = vmatpush1.msra.mxu0 %v3332
        %3361 = vmatprep.subr.mxu0 0.0
        %3362 = vmatpush1.msra.mxu0 %v3331
        %3363 = vmatprep.subr.mxu0 0.0
        %3364 = vmatpush1.msra.mxu0 %v3330
        %3365 = vmatprep.subr.mxu0 0.0
        %3366 = vmatpush1.msra.mxu0 %v3329
        %3367 = vmatprep.subr.mxu0 0.0
        %3368 = vmatpush1.msra.mxu0 %v3328
        %3369 = vmatprep.subr.mxu0 0.0
        %3370 = vmatpush1.msra.mxu0 %v3327
        %3371 = vmatprep.subr.mxu0 0.0
        %3372 = vmatpush1.msra.mxu0 %v3326
        %3373 = vmatprep.subr.mxu0 0.0
        %3374 = vmatpush1.msra.mxu0 %v3325
        %3375 = vmatprep.subr.mxu0 0.0
        %3376 = vmatpush1.msra.mxu0 %v3324
        %3377 = vmatprep.subr.mxu0 0.0
        %3378 = vmatpush1.msra.mxu0 %v3323
        %3379 = vmatprep.subr.mxu0 0.0
        %3380 = vmatpush2.msra.mxu0 0.0
        %3381 = vmatprep.subr.mxu0 0.0
        %3382 = vmatpush2.msra.mxu0 0.0
        %3383 = vmatprep.subr.mxu0 0.0
        %3384 = vmatpush2.msra.mxu0 0.0
        %3385 = vmatprep.subr.mxu0 0.0
        %3386 = vmatpush2.msra.mxu0 0.0
        %3387 = vmatprep.subr.mxu0 0.0
        %3388 = vmatpush2.msra.mxu0 0.0
        %3389 = vmatprep.subr.mxu0 0.0
        %3390 = vmatpush2.msra.mxu0 0.0
        %3391 = vmatprep.subr.mxu0 0.0
        %3392 = vmatpush2.msra.mxu0 0.0
        %3393 = vmatprep.subr.mxu0 0.0
        %3394 = vmatpush2.msra.mxu0 0.0
        %3395 = vmatprep.subr.mxu0 0.0
        %3396 = vmatpush2.msra.mxu0 0.0
        %3397 = vmatprep.subr.mxu0 0.0
        %3398 = vmatpush2.msra.mxu0 0.0
        %3399 = vmatprep.subr.mxu0 0.0
        %3400 = vmatpush2.msra.mxu0 0.0
        %3401 = vmatprep.subr.mxu0 0.0
        %3402 = vmatpush2.msra.mxu0 0.0
        %3403 = vmatprep.subr.mxu0 0.0
        %3404 = vmatpush2.msra.mxu0 0.0
        %3405 = vmatprep.subr.mxu0 0.0
        %3406 = vmatpush2.msra.mxu0 0.0
        %3407 = vmatprep.subr.mxu0 0.0
        %3408 = vmatpush2.msra.mxu0 0.0
        %3409 = vmatprep.subr.mxu0 0.0
        %3410 = vmatpush2.msra.mxu0 0.0
        %3411 = vmatprep.mubr.f32.mxu0 0.0
        %3412 = vmatmul.mubr.f32.gmra.mxu0 %v3290
        %v3413 = vpop.f32.mrf.mxu0
        %v3414 = vadd.f32 %v3345, %v3413
        %v3415 = vpop.f32.mrf.mxu0
        %3416 = vmatprep.mubr.f32.mxu0 0.0
        %3417 = vmatmul.mubr.f32.gmra.mxu0 %v3291
        %v3418 = vpop.f32.mrf.mxu0
        %v3419 = vadd.f32 %v3345, %v3418
        %v3420 = vpop.f32.mrf.mxu0
        %3421 = vmatprep.mubr.f32.mxu0 0.0
        %3422 = vmatmul.mubr.f32.gmra.mxu0 %v3292
        %v3423 = vpop.f32.mrf.mxu0
        %v3424 = vadd.f32 %v3345, %v3423
        %v3425 = vpop.f32.mrf.mxu0
        %3426 = vmatprep.mubr.f32.mxu0 0.0
        %3427 = vmatmul.mubr.f32.gmra.mxu0 %v3293
        %v3428 = vpop.f32.mrf.mxu0
        %v3429 = vadd.f32 %v3345, %v3428
        %v3430 = vpop.f32.mrf.mxu0
        %3431 = vmatprep.mubr.f32.mxu0 0.0
        %3432 = vmatmul.mubr.f32.gmra.mxu0 %v3294
        %v3433 = vpop.f32.mrf.mxu0
        %v3434 = vadd.f32 %v3345, %v3433
        %v3435 = vpop.f32.mrf.mxu0
        %3436 = vmatprep.mubr.f32.mxu0 0.0
        %3437 = vmatmul.mubr.f32.gmra.mxu0 %v3295
        %v3438 = vpop.f32.mrf.mxu0
        %v3439 = vadd.f32 %v3345, %v3438
        %v3440 = vpop.f32.mrf.mxu0
        %3441 = vmatprep.mubr.f32.mxu0 0.0
        %3442 = vmatmul.mubr.f32.gmra.mxu0 %v3296
        %v3443 = vpop.f32.mrf.mxu0
        %v3444 = vadd.f32 %v3345, %v3443
        %v3445 = vpop.f32.mrf.mxu0
        %3446 = vmatprep.mubr.f32.mxu0 0.0
        %3447 = vmatmul.mubr.f32.gmra.mxu0 %v3297
        %v3448 = vpop.f32.mrf.mxu0
        %v3449 = vadd.f32 %v3345, %v3448
        %v3450 = vpop.f32.mrf.mxu0
        %3451 = vmatprep.mubr.f32.mxu0 0.0
        %3452 = vmatmul.mubr.f32.gmra.mxu0 %v3298
        %v3453 = vpop.f32.mrf.mxu0
        %v3454 = vadd.f32 %v3345, %v3453
        %v3455 = vpop.f32.mrf.mxu0
        %3456 = vmatprep.mubr.f32.mxu0 0.0
        %3457 = vmatmul.mubr.f32.gmra.mxu0 %v3299
        %v3458 = vpop.f32.mrf.mxu0
        %v3459 = vadd.f32 %v3345, %v3458
        %v3460 = vpop.f32.mrf.mxu0
        %3461 = vmatprep.mubr.f32.mxu0 0.0
        %3462 = vmatmul.mubr.f32.gmra.mxu0 %v3300
        %v3463 = vpop.f32.mrf.mxu0
        %v3464 = vadd.f32 %v3345, %v3463
        %v3465 = vpop.f32.mrf.mxu0
        %3466 = vmatprep.mubr.f32.mxu0 0.0
        %3467 = vmatmul.mubr.f32.gmra.mxu0 %v3301
        %v3468 = vpop.f32.mrf.mxu0
        %v3469 = vadd.f32 %v3345, %v3468
        %v3470 = vpop.f32.mrf.mxu0
        %3471 = vmatprep.mubr.f32.mxu0 0.0
        %3472 = vmatmul.mubr.f32.gmra.mxu0 %v3302
        %v3473 = vpop.f32.mrf.mxu0
        %v3474 = vadd.f32 %v3345, %v3473
        %v3475 = vpop.f32.mrf.mxu0
        %3476 = vmatprep.mubr.f32.mxu0 0.0
        %3477 = vmatmul.mubr.f32.gmra.mxu0 %v3303
        %v3478 = vpop.f32.mrf.mxu0
        %v3479 = vadd.f32 %v3345, %v3478
        %v3480 = vpop.f32.mrf.mxu0
        %3481 = vmatprep.mubr.f32.mxu0 0.0
        %3482 = vmatmul.mubr.f32.gmra.mxu0 %v3304
        %v3483 = vpop.f32.mrf.mxu0
        %v3484 = vadd.f32 %v3345, %v3483
        %v3485 = vpop.f32.mrf.mxu0
        %3486 = vmatprep.mubr.f32.mxu0 0.0
        %3487 = vmatmul.mubr.f32.gmra.mxu0 %v3305
        %v3488 = vpop.f32.mrf.mxu0
        %v3489 = vadd.f32 %v3345, %v3488
        %v3490 = vpop.f32.mrf.mxu0
        %3491 = vmatprep.mubr.f32.mxu0 0.0
        %3492 = vmatmul.mubr.f32.gmra.mxu0 %v3306
        %v3493 = vpop.f32.mrf.mxu0
        %v3494 = vadd.f32 %v3345, %v3493
        %v3495 = vpop.f32.mrf.mxu0
        %3496 = vmatprep.mubr.f32.mxu0 0.0
        %3497 = vmatmul.mubr.f32.gmra.mxu0 %v3307
        %v3498 = vpop.f32.mrf.mxu0
        %v3499 = vadd.f32 %v3345, %v3498
        %v3500 = vpop.f32.mrf.mxu0
        %3501 = vmatprep.mubr.f32.mxu0 0.0
        %3502 = vmatmul.mubr.f32.gmra.mxu0 %v3308
        %v3503 = vpop.f32.mrf.mxu0
        %v3504 = vadd.f32 %v3345, %v3503
        %v3505 = vpop.f32.mrf.mxu0
        %3506 = vmatprep.mubr.f32.mxu0 0.0
        %3507 = vmatmul.mubr.f32.gmra.mxu0 %v3309
        %v3508 = vpop.f32.mrf.mxu0
        %v3509 = vadd.f32 %v3345, %v3508
        %v3510 = vpop.f32.mrf.mxu0
        %3511 = vmatprep.mubr.f32.mxu0 0.0
        %3512 = vmatmul.mubr.f32.gmra.mxu0 %v3310
        %v3513 = vpop.f32.mrf.mxu0
        %v3514 = vadd.f32 %v3345, %v3513
        %v3515 = vpop.f32.mrf.mxu0
        %3516 = vmatprep.mubr.f32.mxu0 0.0
        %3517 = vmatmul.mubr.f32.gmra.mxu0 %v3311
        %v3518 = vpop.f32.mrf.mxu0
        %v3519 = vadd.f32 %v3345, %v3518
        %v3520 = vpop.f32.mrf.mxu0
        %3521 = vmatprep.mubr.f32.mxu0 0.0
        %3522 = vmatmul.mubr.f32.gmra.mxu0 %v3312
        %v3523 = vpop.f32.mrf.mxu0
        %v3524 = vadd.f32 %v3345, %v3523
        %v3525 = vpop.f32.mrf.mxu0
        %3526 = vmatprep.mubr.f32.mxu0 0.0
        %3527 = vmatmul.mubr.f32.gmra.mxu0 %v3313
        %v3528 = vpop.f32.mrf.mxu0
        %v3529 = vadd.f32 %v3345, %v3528
        %v3530 = vpop.f32.mrf.mxu0
        %3531 = vmatprep.mubr.f32.mxu0 0.0
        %3532 = vmatmul.mubr.f32.gmra.mxu0 %v3314
        %v3533 = vpop.f32.mrf.mxu0
        %v3534 = vadd.f32 %v3345, %v3533
        %v3535 = vpop.f32.mrf.mxu0
        %3536 = vmatprep.mubr.f32.mxu0 0.0
        %3537 = vmatmul.mubr.f32.gmra.mxu0 %v3315
        %v3538 = vpop.f32.mrf.mxu0
        %v3539 = vadd.f32 %v3345, %v3538
        %v3540 = vpop.f32.mrf.mxu0
        %3541 = vmatprep.mubr.f32.mxu0 0.0
        %3542 = vmatmul.mubr.f32.gmra.mxu0 %v3316
        %v3543 = vpop.f32.mrf.mxu0
        %v3544 = vadd.f32 %v3345, %v3543
        %v3545 = vpop.f32.mrf.mxu0
        %3546 = vmatprep.mubr.f32.mxu0 0.0
        %3547 = vmatmul.mubr.f32.gmra.mxu0 %v3317
        %v3548 = vpop.f32.mrf.mxu0
        %v3549 = vadd.f32 %v3345, %v3548
        %v3550 = vpop.f32.mrf.mxu0
        %3551 = vmatprep.mubr.f32.mxu0 0.0
        %3552 = vmatmul.mubr.f32.gmra.mxu0 %v3318
        %v3553 = vpop.f32.mrf.mxu0
        %v3554 = vadd.f32 %v3345, %v3553
        %v3555 = vpop.f32.mrf.mxu0
        %3556 = vmatprep.mubr.f32.mxu0 0.0
        %3557 = vmatmul.mubr.f32.gmra.mxu0 %v3319
        %v3558 = vpop.f32.mrf.mxu0
        %v3559 = vadd.f32 %v3345, %v3558
        %v3560 = vpop.f32.mrf.mxu0
        %3561 = vmatprep.mubr.f32.mxu0 0.0
        %3562 = vmatmul.mubr.f32.gmra.mxu0 %v3320
        %v3563 = vpop.f32.mrf.mxu0
        %v3564 = vadd.f32 %v3345, %v3563
        %v3565 = vpop.f32.mrf.mxu0
        %3566 = vmatprep.mubr.f32.mxu0 0.0
        %3567 = vmatmul.mubr.f32.gmra.mxu0 %v3321
        %v3568 = vpop.f32.mrf.mxu0
        %v3569 = vadd.f32 %v3345, %v3568
        %v3570 = vpop.f32.mrf.mxu0
        %3571 = vdwg.mxu0
        %v3572 = vadd.f32 %v2976, %v3414
        %v3573 = vadd.f32 %v2977, %v3419
        %v3574 = vadd.f32 %v2978, %v3424
        %v3575 = vadd.f32 %v2979, %v3429
        %v3576 = vadd.f32 %v2980, %v3434
        %v3577 = vadd.f32 %v2981, %v3439
        %v3578 = vadd.f32 %v2982, %v3444
        %v3579 = vadd.f32 %v2983, %v3449
        %v3580 = vadd.f32 %v2984, %v3454
        %v3581 = vadd.f32 %v2985, %v3459
        %v3582 = vadd.f32 %v2986, %v3464
        %v3583 = vadd.f32 %v2987, %v3469
        %v3584 = vadd.f32 %v2988, %v3474
        %v3585 = vadd.f32 %v2989, %v3479
        %v3586 = vadd.f32 %v2990, %v3484
        %v3587 = vadd.f32 %v2991, %v3489
        %v3588 = vadd.f32 %v2992, %v3494
        %v3589 = vadd.f32 %v2993, %v3499
        %v3590 = vadd.f32 %v2994, %v3504
        %v3591 = vadd.f32 %v2995, %v3509
        %v3592 = vadd.f32 %v2996, %v3514
        %v3593 = vadd.f32 %v2997, %v3519
        %v3594 = vadd.f32 %v2998, %v3524
        %v3595 = vadd.f32 %v2999, %v3529
        %v3596 = vadd.f32 %v3000, %v3534
        %v3597 = vadd.f32 %v3001, %v3539
        %v3598 = vadd.f32 %v3002, %v3544
        %v3599 = vadd.f32 %v3003, %v3549
        %v3600 = vadd.f32 %v3004, %v3554
        %v3601 = vadd.f32 %v3005, %v3559
        %v3602 = vadd.f32 %v3006, %v3564
        %v3603 = vadd.f32 %v3007, %v3569
        %v3604 = vld [vmem:[%s10] sm:$0x1]
        %v3605 = vld [vmem:[#allocation2] sm:$0x1]
        %3607 = vset.pattern.permute.xlu0 0
        %3608 = vperm.xlu0 %3607, %v3605
        %v3609 = vpop.permute.xlu0 %3608
        %v3611 = vlaneseq
        %v3612 = vshrl.u32 %v3611, 7
        %v3613 = vsub.s32 0, %v3612
        %v3614 = vrot.slane %v3609, %v3613
        %3615 = vmatprep.subr.mxu0 0.0
        %3616 = vmatpush1.xpose.msra.mxu0 %v3587
        %3617 = vmatprep.subr.mxu0 0.0
        %3618 = vmatpush1.xpose.msra.mxu0 %v3586
        %3619 = vmatprep.subr.mxu0 0.0
        %3620 = vmatpush1.xpose.msra.mxu0 %v3585
        %3621 = vmatprep.subr.mxu0 0.0
        %3622 = vmatpush1.xpose.msra.mxu0 %v3584
        %3623 = vmatprep.subr.mxu0 0.0
        %3624 = vmatpush1.xpose.msra.mxu0 %v3583
        %3625 = vmatprep.subr.mxu0 0.0
        %3626 = vmatpush1.xpose.msra.mxu0 %v3582
        %3627 = vmatprep.subr.mxu0 0.0
        %3628 = vmatpush1.xpose.msra.mxu0 %v3581
        %3629 = vmatprep.subr.mxu0 0.0
        %3630 = vmatpush1.xpose.msra.mxu0 %v3580
        %3631 = vmatprep.subr.mxu0 0.0
        %3632 = vmatpush1.xpose.msra.mxu0 %v3579
        %3633 = vmatprep.subr.mxu0 0.0
        %3634 = vmatpush1.xpose.msra.mxu0 %v3578
        %3635 = vmatprep.subr.mxu0 0.0
        %3636 = vmatpush1.xpose.msra.mxu0 %v3577
        %3637 = vmatprep.subr.mxu0 0.0
        %3638 = vmatpush1.xpose.msra.mxu0 %v3576
        %3639 = vmatprep.subr.mxu0 0.0
        %3640 = vmatpush1.xpose.msra.mxu0 %v3575
        %3641 = vmatprep.subr.mxu0 0.0
        %3642 = vmatpush1.xpose.msra.mxu0 %v3574
        %3643 = vmatprep.subr.mxu0 0.0
        %3644 = vmatpush1.xpose.msra.mxu0 %v3573
        %3645 = vmatprep.subr.mxu0 0.0
        %3646 = vmatpush1.xpose.msra.mxu0 %v3572
        %3647 = vmatprep.subr.mxu0 0.0
        %3648 = vmatpush2.xpose.msra.mxu0 %v3603
        %3649 = vmatprep.subr.mxu0 0.0
        %3650 = vmatpush2.xpose.msra.mxu0 %v3602
        %3651 = vmatprep.subr.mxu0 0.0
        %3652 = vmatpush2.xpose.msra.mxu0 %v3601
        %3653 = vmatprep.subr.mxu0 0.0
        %3654 = vmatpush2.xpose.msra.mxu0 %v3600
        %3655 = vmatprep.subr.mxu0 0.0
        %3656 = vmatpush2.xpose.msra.mxu0 %v3599
        %3657 = vmatprep.subr.mxu0 0.0
        %3658 = vmatpush2.xpose.msra.mxu0 %v3598
        %3659 = vmatprep.subr.mxu0 0.0
        %3660 = vmatpush2.xpose.msra.mxu0 %v3597
        %3661 = vmatprep.subr.mxu0 0.0
        %3662 = vmatpush2.xpose.msra.mxu0 %v3596
        %3663 = vmatprep.subr.mxu0 0.0
        %3664 = vmatpush2.xpose.msra.mxu0 %v3595
        %3665 = vmatprep.subr.mxu0 0.0
        %3666 = vmatpush2.xpose.msra.mxu0 %v3594
        %3667 = vmatprep.subr.mxu0 0.0
        %3668 = vmatpush2.xpose.msra.mxu0 %v3593
        %3669 = vmatprep.subr.mxu0 0.0
        %3670 = vmatpush2.xpose.msra.mxu0 %v3592
        %3671 = vmatprep.subr.mxu0 0.0
        %3672 = vmatpush2.xpose.msra.mxu0 %v3591
        %3673 = vmatprep.subr.mxu0 0.0
        %3674 = vmatpush2.xpose.msra.mxu0 %v3590
        %3675 = vmatprep.subr.mxu0 0.0
        %3676 = vmatpush2.xpose.msra.mxu0 %v3589
        %3677 = vmatprep.subr.mxu0 0.0
        %3678 = vmatpush2.xpose.msra.mxu0 %v3588
        %3679 = vmatprep.mubr.f32.mxu0 0.0
        %3680 = vmatmul.mubr.f32.gmra.mxu0 %v3604
        %v3681 = vpop.f32.mrf.mxu0
        %v3682 = vadd.f32 %v3614, %v3681
        %v3683 = vpop.f32.mrf.mxu0
        %v3684 = vadd.f32 %v3614, %v3683
        %3685 = vdwg.mxu0
        %v3688 = vcombine.low %v3682, %v3684
        %v3690 = vunpack.c.l.s4 1966171168
        %v3691 = vunpack.c.0.s8 %v3690
        %v3692 = vlaneseq
        %v3693 = vshrl.u32 %v3692, 7
        %v3694 = vsub.s32 %v3691, %v3693
        %v3695 = vrot.slane %v3688, %v3694
        %v3697 = vunpack.c.l.s4 1966171168
        %v3698 = vunpack.c.0.s8 %v3697
        %v3699 = vlaneseq
        %v3700 = vshrl.u32 %v3699, 7
        %v3701 = vsub.s32 %v3698, %v3700
        %v3702 = vrot.slane %v3695, %v3701
        %v3704 = vlaneseq
        %vm3705 = vcmp.ge.s32.totalorder %v3704, 0
        %vm3706 = vcmp.lt.s32.totalorder %v3704, 256
        %vm3707 = vmand %vm3705, %vm3706
        %3708 = vst.msk [vmem:[%s469] sm:$0x3] %vm3707, %v3702
        %s3709 = sand.u32 %s300, 1
        %s3710 = scalar_lea.sflag [#allocation5], %s3709
        %s3711 = sand.u32 %s300, 1
        %s3712 = smul.addr %s3711, 2
        %s3713 = scalar_lea.vmem [#allocation9], %s3712
        // Predicated region
        $region81: #{tpu_custom_call.1} parent=67 // pred_check
          %p3714 = pneg %p310
        $region82: #{tpu_custom_call.1} parent=67 // pred_check_branch
          %3716 = sbr.rel (%p3714) target = $region84
        $region83: #{tpu_custom_call.1} parent=67 // pred_region
          %s3717 = smul.u32 2, %s30
          %s3719 = ssub.s32 32, 32
          %3720 = vsyncadd %s3710, %s3719
          %s3721 = smul.addr %s3717, 16
          %s3722 = scalar_lea.hbm %s12, %s3721
          %s3724 = sshll.u32 %s3713, 4
          %s3725 = int_to_ptr.vmem [resolvable:$true] %s3724
          %3727 = dma.vmem_to_hbm [thread:$0]  %s3725, 32, %s3722, %s3710
        $region84: #{tpu_custom_call.1} parent=67 // pred_fallthru
          _
      $region68: #{tpu_custom_call.1} parent=5 // pred_fallthru
        _
      %p3728 = scmp.le.s32.totalorder 2, %s25
      // Predicated region
      $region85: #{tpu_custom_call.1} parent=5 // pred_check
        %p3729 = pneg %p3728
      $region86: #{tpu_custom_call.1} parent=5 // pred_check_branch
        %3731 = sbr.rel (%p3729) target = $region88
      $region87: #{tpu_custom_call.1} parent=5 // pred_region
        %s3732 = ssub.s32 %s25, 2
        // Predicated region
        $region89: #{tpu_custom_call.1} parent=87 // pred_check
          %p3733 = pneg %p316
        $region90: #{tpu_custom_call.1} parent=87 // pred_check_branch
          %3735 = sbr.rel (%p3733) target = $region92
        $region91: #{tpu_custom_call.1} parent=87 // pred_region
          %s3736 = sand.u32 %s301, 1
          %s3737 = scalar_lea.sflag [#allocation5], %s3736
          %s3738 = sand.u32 %s301, 1
          %s3739 = smul.addr %s3738, 2
          %s3740 = scalar_lea.vmem [#allocation9], %s3739
          %3741 = dma.done %s3737, 32
        $region92: #{tpu_custom_call.1} parent=87 // pred_fallthru
          _
      $region88: #{tpu_custom_call.1} parent=5 // pred_fallthru
        _
    $region6: #{tpu_custom_call.1} parent=1 // loop_footer
      %s29 = sadd.s32 1, %s25
    $region7: #{tpu_custom_call.1} parent=1 // loop_footer_branch
      %24 = sbr.rel target = $region3
    $region8: #{tpu_custom_call.1} parent=1 // loop_exit
      _
    %3742 = vsyncpa [#allocation4], 1
    %s3743 = scalar_lea.sflag [#allocation4], 1
    %3744 = vsyncpa %s3743, 1
    %3745 = vsyncpa [#allocation7], 1
    %3746 = vsyncpa [#allocation5], 1
    %s3747 = scalar_lea.sflag [#allocation5], 1
    %3748 = vsyncpa %s3747, 1

</llo_original>
